<compile_context>
chip_gen: v6e
topology: v6e:2x2x1
jax: 0.10.0
libtpu: 0.0.40
codegen_flags: <defaults>
</compile_context>

<pallas_src>
import functools

import jax
import jax.numpy as jnp
from jax.experimental import pallas as pl
from jax.experimental.pallas import tpu as pltpu

EPS = 1e-5
LANE = 128
VMEM_LIMIT = 32 * 1024 * 1024  # within every chip's default scoped VMEM


def _round_up(x, m):
    return (x + m - 1) // m * m


def _pad_hw(x3):
    """(H, W, C) -> (H+2, W+2, C) with a zero border (pure value ops, in VMEM)."""
    H, W, C = x3.shape
    zr = jnp.zeros((1, W, C), x3.dtype)
    x3 = jnp.concatenate([zr, x3, zr], axis=0)
    zc = jnp.zeros((H + 2, 1, C), x3.dtype)
    return jnp.concatenate([zc, x3, zc], axis=1)


def _im2col(xp, H, W):
    """(H+2, W+2, C) padded image -> (H*W, 9*C) patch matrix (tap-major)."""
    C = xp.shape[-1]
    cols = []
    for dy in range(3):
        for dx in range(3):
            cols.append(xp[dy:dy + H, dx:dx + W, :].reshape(H * W, C))
    return jnp.concatenate(cols, axis=-1)


def _stats_rows(acc):
    """(rows, Cp) -> (2, Cp) with row0 = sum, row1 = sum of squares."""
    s = jnp.sum(acc, axis=0, keepdims=True)
    ss = jnp.sum(acc * acc, axis=0, keepdims=True)
    return jnp.concatenate([s, ss], axis=0)


# --------------------------------------------------------------------------
# Kernel 1: conv1 (single K=9*Cin matmul) + per-channel sum / sumsq stats.
# --------------------------------------------------------------------------
def conv_stats_kernel(x_ref, w_ref, y_ref, st_ref):
    # x_ref: (1, H, W, Cin)   w_ref: (9*Cin, Cp)
    # y_ref: (1, H*W, Cp)     st_ref: (2, Cp) grid-resident accumulator
    _, H, W, _ = x_ref.shape

    xp = _pad_hw(x_ref[0].astype(jnp.float32))             # zero padding, in-reg
    patch = _im2col(xp, H, W)                               # (H*W, 9*Cin)
    acc = jnp.dot(patch, w_ref[...], preferred_element_type=jnp.float32)
    y_ref[0] = acc

    @pl.when(pl.program_id(0) == 0)
    def _():
        st_ref[...] = jnp.zeros_like(st_ref)

    st_ref[...] += _stats_rows(acc)


# --------------------------------------------------------------------------
# Kernel 2: BN1 + ReLU (single FMA, scale/shift precomputed) fused with
#           conv2 (single K=9*Cp matmul) + stage-2 stats.
# --------------------------------------------------------------------------
def bn_relu_conv_stats_kernel(y1_ref, ss1_ref, w2_ref, y2_ref, st2_ref, *, H, W):
    Cp = y1_ref.shape[-1]

    a = jnp.maximum(y1_ref[0] * ss1_ref[0:1, :] + ss1_ref[1:2, :], 0.0)
    ap = _pad_hw(a.reshape(H, W, Cp))                       # re-pad in VMEM
    patch = _im2col(ap, H, W)                               # (H*W, 9*Cp)
    acc = jnp.dot(patch, w2_ref[...], preferred_element_type=jnp.float32)
    y2_ref[0] = acc

    @pl.when(pl.program_id(0) == 0)
    def _():
        st2_ref[...] = jnp.zeros_like(st2_ref)

    st2_ref[...] += _stats_rows(acc)


# --------------------------------------------------------------------------
# Kernel 3: BN2 + ReLU (elementwise, scale/shift precomputed).
# --------------------------------------------------------------------------
def bn_relu_kernel(y2_ref, ss2_ref, out_ref):
    y = jnp.maximum(y2_ref[0] * ss2_ref[0:1, :] + ss2_ref[1:2, :], 0.0)
    out_ref[0] = y.astype(out_ref.dtype)


# --------------------------------------------------------------------------
# Wrapper helpers.
# --------------------------------------------------------------------------
def _prep_weight(w_oihw, cin_pad, cout_pad):
    """(Cout, Cin, 3, 3) torch layout -> (9*cin_pad, cout_pad), rows (dy,dx,cin)."""
    cout, cin = w_oihw.shape[0], w_oihw.shape[1]
    w = jnp.transpose(w_oihw, (2, 3, 1, 0))                 # (3, 3, Cin, Cout)
    w = jnp.pad(w, ((0, 0), (0, 0), (0, cin_pad - cin), (0, cout_pad - cout)))
    return w.reshape(9 * cin_pad, cout_pad).astype(jnp.float32)


def _scale_shift(st, gamma_p, beta_p, count):
    """Fold training-mode BatchNorm into per-channel scale/shift: (2, Cp)."""
    mean = st[0] / count
    var = jnp.maximum(st[1] / count - mean * mean, 0.0)      # biased batch var
    scale = gamma_p * jax.lax.rsqrt(var + EPS)
    shift = beta_p - mean * scale
    return jnp.stack([scale, shift], axis=0)


@jax.jit
def unet_block_forward(x_nchw, w1_oihw, g1, b1, w2_oihw, g2, b2):
    """Forward pass of UNetBlock.  Input/output layout: NCHW (PyTorch)."""
    N, Cin, H, W = x_nchw.shape
    Cout = w1_oihw.shape[0]
    Cp = _round_up(Cout, LANE)
    count = float(N * H * W)

    x = jnp.transpose(x_nchw, (0, 2, 3, 1)).astype(jnp.float32)  # NCHW -> NHWC

    w1t = _prep_weight(w1_oihw, Cin, Cp)                     # (9*Cin, Cp)
    w2t = _prep_weight(w2_oihw, Cp, Cp)                      # (9*Cp,  Cp)
    g1p = jnp.pad(g1.astype(jnp.float32), (0, Cp - Cout))
    b1p = jnp.pad(b1.astype(jnp.float32), (0, Cp - Cout))
    g2p = jnp.pad(g2.astype(jnp.float32), (0, Cp - Cout))
    b2p = jnp.pad(b2.astype(jnp.float32), (0, Cp - Cout))

    # ---- stage 1 conv + stats --------------------------------------------
    y1, st1 = pl.pallas_call(
        conv_stats_kernel,
        grid=(N,),
        out_shape=(jax.ShapeDtypeStruct((N, H * W, Cp), jnp.float32),
                   jax.ShapeDtypeStruct((2, Cp), jnp.float32)),
        in_specs=[
            pl.BlockSpec((1, H, W, Cin), lambda n: (n, 0, 0, 0)),
            pl.BlockSpec((9 * Cin, Cp), lambda n: (0, 0)),
        ],
        out_specs=(
            pl.BlockSpec((1, H * W, Cp), lambda n: (n, 0, 0)),
            pl.BlockSpec((2, Cp), lambda n: (0, 0)),
        ),
        compiler_params=pltpu.CompilerParams(
            dimension_semantics=("arbitrary",),
            vmem_limit_bytes=VMEM_LIMIT),
        cost_estimate=pl.CostEstimate(
            flops=2 * N * H * W * 9 * Cin * Cp,
            transcendentals=0,
            bytes_accessed=4 * (N * H * W * (Cin + Cp) + 9 * Cin * Cp)),
    )(x, w1t)

    ss1 = _scale_shift(st1, g1p, b1p, count)                 # tiny (2, Cp) XLA op

    # ---- BN1 + ReLU fused with stage 2 conv + stats ------------------------
    y2, st2 = pl.pallas_call(
        functools.partial(bn_relu_conv_stats_kernel, H=H, W=W),
        grid=(N,),
        out_shape=(jax.ShapeDtypeStruct((N, H * W, Cp), jnp.float32),
                   jax.ShapeDtypeStruct((2, Cp), jnp.float32)),
        in_specs=[
            pl.BlockSpec((1, H * W, Cp), lambda n: (n, 0, 0)),   # y1
            pl.BlockSpec((2, Cp), lambda n: (0, 0)),             # scale/shift 1
            pl.BlockSpec((9 * Cp, Cp), lambda n: (0, 0)),        # w2
        ],
        out_specs=(
            pl.BlockSpec((1, H * W, Cp), lambda n: (n, 0, 0)),
            pl.BlockSpec((2, Cp), lambda n: (0, 0)),
        ),
        compiler_params=pltpu.CompilerParams(
            dimension_semantics=("arbitrary",),
            vmem_limit_bytes=VMEM_LIMIT),
        cost_estimate=pl.CostEstimate(
            flops=2 * N * H * W * 9 * Cp * Cp,
            transcendentals=0,
            bytes_accessed=4 * (2 * N * H * W * Cp + 9 * Cp * Cp)),
    )(y1, ss1, w2t)

    ss2 = _scale_shift(st2, g2p, b2p, count)

    # ---- BN2 + ReLU ---------------------------------------------------------
    out2d = pl.pallas_call(
        bn_relu_kernel,
        grid=(N,),
        out_shape=jax.ShapeDtypeStruct((N, H * W, Cp), jnp.float32),
        in_specs=[
            pl.BlockSpec((1, H * W, Cp), lambda n: (n, 0, 0)),
            pl.BlockSpec((2, Cp), lambda n: (0, 0)),
        ],
        out_specs=pl.BlockSpec((1, H * W, Cp), lambda n: (n, 0, 0)),
        compiler_params=pltpu.CompilerParams(
            dimension_semantics=("parallel",),
            vmem_limit_bytes=VMEM_LIMIT),
        cost_estimate=pl.CostEstimate(
            flops=3 * N * H * W * Cp,
            transcendentals=0,
            bytes_accessed=4 * 2 * N * H * W * Cp),
    )(y2, ss2)

    y = out2d.reshape(N, H, W, Cp)[..., :Cout]               # drop lane padding
    return jnp.transpose(y, (0, 3, 1, 2))                    # NHWC -> NCHW


# --------------------------------------------------------------------------
# Pure-JAX reference (matches PyTorch training-mode forward).
# --------------------------------------------------------------------------
def _reference_forward(x_nchw, w1, g1, b1, w2, g2, b2):
    def conv(x, w):
        return jax.lax.conv_general_dilated(
            x, w, window_strides=(1, 1), padding=((1, 1), (1, 1)),
            dimension_numbers=("NCHW", "OIHW", "NCHW"),
            precision=jax.lax.Precision.HIGHEST)

    def bn_relu(y, g, b):
        mean = jnp.mean(y, axis=(0, 2, 3), keepdims=True)
        var = jnp.mean((y - mean) ** 2, axis=(0, 2, 3), keepdims=True)
        yn = (y - mean) * jax.lax.rsqrt(var + EPS)
        yn = yn * g.reshape(1, -1, 1, 1) + b.reshape(1, -1, 1, 1)
        return jnp.maximum(yn, 0.0)

    y = bn_relu(conv(x_nchw, w1), g1, b1)
    y = bn_relu(conv(y, w2), g2, b2)
    return y


if __name__ == "__main__":
    # Small shapes consistent with the module: batch=2, Cin=4, Cout=8, 16x16.
    N, C_IN, C_OUT, H, W = 2, 4, 8, 16, 16

    key = jax.random.PRNGKey(0)
    kx, kw1, kw2 = jax.random.split(key, 3)

    x = jax.random.normal(kx, (N, C_IN, H, W), dtype=jnp.float32)
    w1 = 0.2 * jax.random.normal(kw1, (C_OUT, C_IN, 3, 3), dtype=jnp.float32)
    w2 = 0.2 * jax.random.normal(kw2, (C_OUT, C_OUT, 3, 3), dtype=jnp.float32)
    # BatchNorm2d default init: weight=1, bias=0.
    g1 = jnp.ones((C_OUT,), jnp.float32)
    b1 = jnp.zeros((C_OUT,), jnp.float32)
    g2 = jnp.ones((C_OUT,), jnp.float32)
    b2 = jnp.zeros((C_OUT,), jnp.float32)

    out = unet_block_forward(x, w1, g1, b1, w2, g2, b2)
    out = jax.block_until_ready(out)

    ref = _reference_forward(x, w1, g1, b1, w2, g2, b2)
    if out.shape != (N, C_OUT, H, W):
        raise SystemExit(f"bad output shape {out.shape}")
    if not bool(jnp.allclose(out, ref, atol=2e-2, rtol=2e-2)):
        max_err = float(jnp.max(jnp.abs(out - ref)))
        raise SystemExit(f"mismatch vs reference, max abs err = {max_err}")

    print("KERNEL_OK")
</pallas_src>

<mosaic_0001>
module attributes {stable_mosaic.version = 11 : i64} {
  func.func @conv_stats_kernel(%arg0: i32, %arg1: memref<1x16x16x4xf32, #tpu.memory_space<vmem>>, %arg2: memref<36x128xf32, #tpu.memory_space<vmem>>, %arg3: memref<1x256x128xf32, #tpu.memory_space<vmem>>, %arg4: memref<2x128xf32, #tpu.memory_space<vmem>>) attributes {dimension_semantics = [#tpu.dimension_semantics<arbitrary>], iteration_bounds = array<i64: 2>, scalar_prefetch = 0 : i64, scratch_operands = 0 : i64, tpu.core_type = #tpu.core_type<tc>, window_params = [{transform_indices = @transform_0, window_bounds = array<i64: 1, 16, 16, 4>}, {pipeline_mode = #tpu.pipeline_mode<synchronous>, transform_indices = @transform_1, window_bounds = array<i64: 36, 128>}, {transform_indices = @transform_2, window_bounds = array<i64: 1, 256, 128>}, {pipeline_mode = #tpu.pipeline_mode<synchronous>, transform_indices = @transform_3, window_bounds = array<i64: 2, 128>}]} {
    %c0 = arith.constant 0 : index
    %c0_0 = arith.constant 0 : index
    %c0_1 = arith.constant 0 : index
    %c0_2 = arith.constant 0 : index
    %0 = vector.load %arg1[%c0, %c0_0, %c0_1, %c0_2] : memref<1x16x16x4xf32, #tpu.memory_space<vmem>>, vector<1x16x16x4xf32>
    %1 = vector.shape_cast %0 : vector<1x16x16x4xf32> to vector<16x16x4xf32>
    %cst = arith.constant 0.000000e+00 : f32
    %2 = vector.broadcast %cst : f32 to vector<1x16x4xf32>
    %3 = tpu.concatenate %2, %1, %2 in 0 : vector<1x16x4xf32>, vector<16x16x4xf32>, vector<1x16x4xf32> -> vector<18x16x4xf32>
    %cst_3 = arith.constant 0.000000e+00 : f32
    %4 = vector.broadcast %cst_3 : f32 to vector<18x1x4xf32>
    %5 = tpu.concatenate %4, %3, %4 in 1 : vector<18x1x4xf32>, vector<18x16x4xf32>, vector<18x1x4xf32> -> vector<18x18x4xf32>
    %6 = vector.extract_strided_slice %5 {offsets = [0, 0, 0], sizes = [16, 16, 4], strides = [1, 1, 1]} : vector<18x18x4xf32> to vector<16x16x4xf32>
    %7 = vector.shape_cast %6 : vector<16x16x4xf32> to vector<256x4xf32>
    %8 = vector.extract_strided_slice %5 {offsets = [0, 1, 0], sizes = [16, 16, 4], strides = [1, 1, 1]} : vector<18x18x4xf32> to vector<16x16x4xf32>
    %9 = vector.shape_cast %8 : vector<16x16x4xf32> to vector<256x4xf32>
    %10 = vector.extract_strided_slice %5 {offsets = [0, 2, 0], sizes = [16, 16, 4], strides = [1, 1, 1]} : vector<18x18x4xf32> to vector<16x16x4xf32>
    %11 = vector.shape_cast %10 : vector<16x16x4xf32> to vector<256x4xf32>
    %12 = vector.extract_strided_slice %5 {offsets = [1, 0, 0], sizes = [16, 16, 4], strides = [1, 1, 1]} : vector<18x18x4xf32> to vector<16x16x4xf32>
    %13 = vector.shape_cast %12 : vector<16x16x4xf32> to vector<256x4xf32>
    %14 = vector.extract_strided_slice %5 {offsets = [1, 1, 0], sizes = [16, 16, 4], strides = [1, 1, 1]} : vector<18x18x4xf32> to vector<16x16x4xf32>
    %15 = vector.shape_cast %14 : vector<16x16x4xf32> to vector<256x4xf32>
    %16 = vector.extract_strided_slice %5 {offsets = [1, 2, 0], sizes = [16, 16, 4], strides = [1, 1, 1]} : vector<18x18x4xf32> to vector<16x16x4xf32>
    %17 = vector.shape_cast %16 : vector<16x16x4xf32> to vector<256x4xf32>
    %18 = vector.extract_strided_slice %5 {offsets = [2, 0, 0], sizes = [16, 16, 4], strides = [1, 1, 1]} : vector<18x18x4xf32> to vector<16x16x4xf32>
    %19 = vector.shape_cast %18 : vector<16x16x4xf32> to vector<256x4xf32>
    %20 = vector.extract_strided_slice %5 {offsets = [2, 1, 0], sizes = [16, 16, 4], strides = [1, 1, 1]} : vector<18x18x4xf32> to vector<16x16x4xf32>
    %21 = vector.shape_cast %20 : vector<16x16x4xf32> to vector<256x4xf32>
    %22 = vector.extract_strided_slice %5 {offsets = [2, 2, 0], sizes = [16, 16, 4], strides = [1, 1, 1]} : vector<18x18x4xf32> to vector<16x16x4xf32>
    %23 = vector.shape_cast %22 : vector<16x16x4xf32> to vector<256x4xf32>
    %24 = tpu.concatenate %7, %9, %11, %13, %15, %17, %19, %21, %23 in 1 : vector<256x4xf32>, vector<256x4xf32>, vector<256x4xf32>, vector<256x4xf32>, vector<256x4xf32>, vector<256x4xf32>, vector<256x4xf32>, vector<256x4xf32>, vector<256x4xf32> -> vector<256x36xf32>
    %c0_4 = arith.constant 0 : index
    %c0_5 = arith.constant 0 : index
    %25 = vector.load %arg2[%c0_4, %c0_5] : memref<36x128xf32, #tpu.memory_space<vmem>>, vector<36x128xf32>
    %cst_6 = arith.constant dense<0.000000e+00> : vector<256x128xf32>
    %26 = tpu.matmul %24, %25, %cst_6 {dimension_numbers = #tpu.dot_dimension_numbers<[1], [0], [0], [1], [0, 0, 1, 1], [], []>} : vector<256x36xf32>, vector<36x128xf32>, vector<256x128xf32> -> vector<256x128xf32>
    %c0_7 = arith.constant 0 : index
    %c0_8 = arith.constant 0 : index
    %c0_9 = arith.constant 0 : index
    %27 = vector.load %arg3[%c0_7, %c0_8, %c0_9] : memref<1x256x128xf32, #tpu.memory_space<vmem>>, vector<1x256x128xf32>
    %28 = vector.shape_cast %27 : vector<1x256x128xf32> to vector<256x128xf32>
    %29 = vector.shape_cast %26 : vector<256x128xf32> to vector<1x256x128xf32>
    tpu.vector_store %arg3[%c0_7, %c0_8, %c0_9], %29 {strides = array<i32>} : memref<1x256x128xf32, #tpu.memory_space<vmem>>, vector<1x256x128xf32>,
    %c0_i32 = arith.constant 0 : i32
    %30 = arith.cmpi eq, %arg0, %c0_i32 : i32
    %31 = arith.extui %30 : i1 to i32
    %c0_i32_10 = arith.constant 0 : i32
    %32 = arith.cmpi ne, %31, %c0_i32_10 : i32
    scf.if %32 {
      %cst_17 = arith.constant 0.000000e+00 : f32
      %42 = vector.broadcast %cst_17 : f32 to vector<2x128xf32>
      %c0_18 = arith.constant 0 : index
      %c0_19 = arith.constant 0 : index
      %43 = vector.load %arg4[%c0_18, %c0_19] : memref<2x128xf32, #tpu.memory_space<vmem>>, vector<2x128xf32>
      tpu.vector_store %arg4[%c0_18, %c0_19], %42 {strides = array<i32>} : memref<2x128xf32, #tpu.memory_space<vmem>>, vector<2x128xf32>,
    } else {
    }
    %c0_11 = arith.constant 0 : index
    %c0_12 = arith.constant 0 : index
    %33 = vector.load %arg4[%c0_11, %c0_12] : memref<2x128xf32, #tpu.memory_space<vmem>>, vector<2x128xf32>
    %cst_13 = arith.constant dense<0.000000e+00> : vector<128xf32>
    %34 = vector.multi_reduction <add>, %26, %cst_13 [0] : vector<256x128xf32> to vector<128xf32>
    %35 = vector.shape_cast %34 : vector<128xf32> to vector<1x128xf32>
    %36 = arith.mulf %26, %26 : vector<256x128xf32>
    %cst_14 = arith.constant dense<0.000000e+00> : vector<128xf32>
    %37 = vector.multi_reduction <add>, %36, %cst_14 [0] : vector<256x128xf32> to vector<128xf32>
    %38 = vector.shape_cast %37 : vector<128xf32> to vector<1x128xf32>
    %39 = tpu.concatenate %35, %38 in 0 : vector<1x128xf32>, vector<1x128xf32> -> vector<2x128xf32>
    %40 = arith.addf %33, %39 : vector<2x128xf32>
    %c0_15 = arith.constant 0 : index
    %c0_16 = arith.constant 0 : index
    %41 = vector.load %arg4[%c0_15, %c0_16] : memref<2x128xf32, #tpu.memory_space<vmem>>, vector<2x128xf32>
    tpu.vector_store %arg4[%c0_15, %c0_16], %40 {strides = array<i32>} : memref<2x128xf32, #tpu.memory_space<vmem>>, vector<2x128xf32>,
    return
  }
  func.func @transform_0(%arg0: i32) -> (i32, i32, i32, i32) {
    %c0_i32 = arith.constant 0 : i32
    %c0_i32_0 = arith.constant 0 : i32
    %c0_i32_1 = arith.constant 0 : i32
    %c0_i32_2 = arith.constant 0 : i32
    return %arg0, %c0_i32, %c0_i32_0, %c0_i32_1 : i32, i32, i32, i32
  }
  func.func @transform_1(%arg0: i32) -> (i32, i32) {
    %c0_i32 = arith.constant 0 : i32
    %c0_i32_0 = arith.constant 0 : i32
    %c0_i32_1 = arith.constant 0 : i32
    return %c0_i32, %c0_i32_0 : i32, i32
  }
  func.func @transform_2(%arg0: i32) -> (i32, i32, i32) {
    %c0_i32 = arith.constant 0 : i32
    %c0_i32_0 = arith.constant 0 : i32
    %c0_i32_1 = arith.constant 0 : i32
    return %arg0, %c0_i32, %c0_i32_0 : i32, i32, i32
  }
  func.func @transform_3(%arg0: i32) -> (i32, i32) {
    %c0_i32 = arith.constant 0 : i32
    %c0_i32_0 = arith.constant 0 : i32
    %c0_i32_1 = arith.constant 0 : i32
    return %c0_i32, %c0_i32_0 : i32, i32
  }
}

module attributes {stable_mosaic.version = 11 : i64} {
  func.func @bn_relu_conv_stats_kernel(%arg0: i32, %arg1: memref<1x256x128xf32, #tpu.memory_space<vmem>>, %arg2: memref<2x128xf32, #tpu.memory_space<vmem>>, %arg3: memref<1152x128xf32, #tpu.memory_space<vmem>>, %arg4: memref<1x256x128xf32, #tpu.memory_space<vmem>>, %arg5: memref<2x128xf32, #tpu.memory_space<vmem>>) attributes {dimension_semantics = [#tpu.dimension_semantics<arbitrary>], iteration_bounds = array<i64: 2>, scalar_prefetch = 0 : i64, scratch_operands = 0 : i64, tpu.core_type = #tpu.core_type<tc>, window_params = [{transform_indices = @transform_0, window_bounds = array<i64: 1, 256, 128>}, {pipeline_mode = #tpu.pipeline_mode<synchronous>, transform_indices = @transform_1, window_bounds = array<i64: 2, 128>}, {pipeline_mode = #tpu.pipeline_mode<synchronous>, transform_indices = @transform_2, window_bounds = array<i64: 1152, 128>}, {transform_indices = @transform_3, window_bounds = array<i64: 1, 256, 128>}, {pipeline_mode = #tpu.pipeline_mode<synchronous>, transform_indices = @transform_4, window_bounds = array<i64: 2, 128>}]} {
    %c0 = arith.constant 0 : index
    %c0_0 = arith.constant 0 : index
    %c0_1 = arith.constant 0 : index
    %0 = vector.load %arg1[%c0, %c0_0, %c0_1] : memref<1x256x128xf32, #tpu.memory_space<vmem>>, vector<1x256x128xf32>
    %1 = vector.shape_cast %0 : vector<1x256x128xf32> to vector<256x128xf32>
    %c0_2 = arith.constant 0 : index
    %c0_3 = arith.constant 0 : index
    %2 = vector.load %arg2[%c0_2, %c0_3] : memref<2x128xf32, #tpu.memory_space<vmem>>, vector<1x128xf32>
    %3 = vector.broadcast %2 : vector<1x128xf32> to vector<256x128xf32>
    %4 = arith.mulf %1, %3 : vector<256x128xf32>
    %c1 = arith.constant 1 : index
    %c0_4 = arith.constant 0 : index
    %5 = vector.load %arg2[%c1, %c0_4] : memref<2x128xf32, #tpu.memory_space<vmem>>, vector<1x128xf32>
    %6 = vector.broadcast %5 : vector<1x128xf32> to vector<256x128xf32>
    %7 = arith.addf %4, %6 : vector<256x128xf32>
    %cst = arith.constant 0.000000e+00 : f32
    %8 = vector.broadcast %cst : f32 to vector<256x128xf32>
    %9 = arith.maximumf %7, %8 : vector<256x128xf32>
    %10 = vector.shape_cast %9 : vector<256x128xf32> to vector<16x16x128xf32>
    %cst_5 = arith.constant 0.000000e+00 : f32
    %11 = vector.broadcast %cst_5 : f32 to vector<1x16x128xf32>
    %12 = tpu.concatenate %11, %10, %11 in 0 : vector<1x16x128xf32>, vector<16x16x128xf32>, vector<1x16x128xf32> -> vector<18x16x128xf32>
    %cst_6 = arith.constant 0.000000e+00 : f32
    %13 = vector.broadcast %cst_6 : f32 to vector<18x1x128xf32>
    %14 = tpu.concatenate %13, %12, %13 in 1 : vector<18x1x128xf32>, vector<18x16x128xf32>, vector<18x1x128xf32> -> vector<18x18x128xf32>
    %15 = vector.extract_strided_slice %14 {offsets = [0, 0, 0], sizes = [16, 16, 128], strides = [1, 1, 1]} : vector<18x18x128xf32> to vector<16x16x128xf32>
    %16 = vector.shape_cast %15 : vector<16x16x128xf32> to vector<256x128xf32>
    %17 = vector.extract_strided_slice %14 {offsets = [0, 1, 0], sizes = [16, 16, 128], strides = [1, 1, 1]} : vector<18x18x128xf32> to vector<16x16x128xf32>
    %18 = vector.shape_cast %17 : vector<16x16x128xf32> to vector<256x128xf32>
    %19 = vector.extract_strided_slice %14 {offsets = [0, 2, 0], sizes = [16, 16, 128], strides = [1, 1, 1]} : vector<18x18x128xf32> to vector<16x16x128xf32>
    %20 = vector.shape_cast %19 : vector<16x16x128xf32> to vector<256x128xf32>
    %21 = vector.extract_strided_slice %14 {offsets = [1, 0, 0], sizes = [16, 16, 128], strides = [1, 1, 1]} : vector<18x18x128xf32> to vector<16x16x128xf32>
    %22 = vector.shape_cast %21 : vector<16x16x128xf32> to vector<256x128xf32>
    %23 = vector.extract_strided_slice %14 {offsets = [1, 1, 0], sizes = [16, 16, 128], strides = [1, 1, 1]} : vector<18x18x128xf32> to vector<16x16x128xf32>
    %24 = vector.shape_cast %23 : vector<16x16x128xf32> to vector<256x128xf32>
    %25 = vector.extract_strided_slice %14 {offsets = [1, 2, 0], sizes = [16, 16, 128], strides = [1, 1, 1]} : vector<18x18x128xf32> to vector<16x16x128xf32>
    %26 = vector.shape_cast %25 : vector<16x16x128xf32> to vector<256x128xf32>
    %27 = vector.extract_strided_slice %14 {offsets = [2, 0, 0], sizes = [16, 16, 128], strides = [1, 1, 1]} : vector<18x18x128xf32> to vector<16x16x128xf32>
    %28 = vector.shape_cast %27 : vector<16x16x128xf32> to vector<256x128xf32>
    %29 = vector.extract_strided_slice %14 {offsets = [2, 1, 0], sizes = [16, 16, 128], strides = [1, 1, 1]} : vector<18x18x128xf32> to vector<16x16x128xf32>
    %30 = vector.shape_cast %29 : vector<16x16x128xf32> to vector<256x128xf32>
    %31 = vector.extract_strided_slice %14 {offsets = [2, 2, 0], sizes = [16, 16, 128], strides = [1, 1, 1]} : vector<18x18x128xf32> to vector<16x16x128xf32>
    %32 = vector.shape_cast %31 : vector<16x16x128xf32> to vector<256x128xf32>
    %33 = tpu.concatenate %16, %18, %20, %22, %24, %26, %28, %30, %32 in 1 : vector<256x128xf32>, vector<256x128xf32>, vector<256x128xf32>, vector<256x128xf32>, vector<256x128xf32>, vector<256x128xf32>, vector<256x128xf32>, vector<256x128xf32>, vector<256x128xf32> -> vector<256x1152xf32>
    %c0_7 = arith.constant 0 : index
    %c0_8 = arith.constant 0 : index
    %34 = vector.load %arg3[%c0_7, %c0_8] : memref<1152x128xf32, #tpu.memory_space<vmem>>, vector<1152x128xf32>
    %cst_9 = arith.constant dense<0.000000e+00> : vector<256x128xf32>
    %35 = tpu.matmul %33, %34, %cst_9 {dimension_numbers = #tpu.dot_dimension_numbers<[1], [0], [0], [1], [0, 0, 1, 1], [], []>} : vector<256x1152xf32>, vector<1152x128xf32>, vector<256x128xf32> -> vector<256x128xf32>
    %c0_10 = arith.constant 0 : index
    %c0_11 = arith.constant 0 : index
    %c0_12 = arith.constant 0 : index
    %36 = vector.load %arg4[%c0_10, %c0_11, %c0_12] : memref<1x256x128xf32, #tpu.memory_space<vmem>>, vector<1x256x128xf32>
    %37 = vector.shape_cast %36 : vector<1x256x128xf32> to vector<256x128xf32>
    %38 = vector.shape_cast %35 : vector<256x128xf32> to vector<1x256x128xf32>
    tpu.vector_store %arg4[%c0_10, %c0_11, %c0_12], %38 {strides = array<i32>} : memref<1x256x128xf32, #tpu.memory_space<vmem>>, vector<1x256x128xf32>,
    %c0_i32 = arith.constant 0 : i32
    %39 = arith.cmpi eq, %arg0, %c0_i32 : i32
    %40 = arith.extui %39 : i1 to i32
    %c0_i32_13 = arith.constant 0 : i32
    %41 = arith.cmpi ne, %40, %c0_i32_13 : i32
    scf.if %41 {
      %cst_20 = arith.constant 0.000000e+00 : f32
      %51 = vector.broadcast %cst_20 : f32 to vector<2x128xf32>
      %c0_21 = arith.constant 0 : index
      %c0_22 = arith.constant 0 : index
      %52 = vector.load %arg5[%c0_21, %c0_22] : memref<2x128xf32, #tpu.memory_space<vmem>>, vector<2x128xf32>
      tpu.vector_store %arg5[%c0_21, %c0_22], %51 {strides = array<i32>} : memref<2x128xf32, #tpu.memory_space<vmem>>, vector<2x128xf32>,
    } else {
    }
    %c0_14 = arith.constant 0 : index
    %c0_15 = arith.constant 0 : index
    %42 = vector.load %arg5[%c0_14, %c0_15] : memref<2x128xf32, #tpu.memory_space<vmem>>, vector<2x128xf32>
    %cst_16 = arith.constant dense<0.000000e+00> : vector<128xf32>
    %43 = vector.multi_reduction <add>, %35, %cst_16 [0] : vector<256x128xf32> to vector<128xf32>
    %44 = vector.shape_cast %43 : vector<128xf32> to vector<1x128xf32>
    %45 = arith.mulf %35, %35 : vector<256x128xf32>
    %cst_17 = arith.constant dense<0.000000e+00> : vector<128xf32>
    %46 = vector.multi_reduction <add>, %45, %cst_17 [0] : vector<256x128xf32> to vector<128xf32>
    %47 = vector.shape_cast %46 : vector<128xf32> to vector<1x128xf32>
    %48 = tpu.concatenate %44, %47 in 0 : vector<1x128xf32>, vector<1x128xf32> -> vector<2x128xf32>
    %49 = arith.addf %42, %48 : vector<2x128xf32>
    %c0_18 = arith.constant 0 : index
    %c0_19 = arith.constant 0 : index
    %50 = vector.load %arg5[%c0_18, %c0_19] : memref<2x128xf32, #tpu.memory_space<vmem>>, vector<2x128xf32>
    tpu.vector_store %arg5[%c0_18, %c0_19], %49 {strides = array<i32>} : memref<2x128xf32, #tpu.memory_space<vmem>>, vector<2x128xf32>,
    return
  }
  func.func @transform_0(%arg0: i32) -> (i32, i32, i32) {
    %c0_i32 = arith.constant 0 : i32
    %c0_i32_0 = arith.constant 0 : i32
    %c0_i32_1 = arith.constant 0 : i32
    return %arg0, %c0_i32, %c0_i32_0 : i32, i32, i32
  }
  func.func @transform_1(%arg0: i32) -> (i32, i32) {
    %c0_i32 = arith.constant 0 : i32
    %c0_i32_0 = arith.constant 0 : i32
    %c0_i32_1 = arith.constant 0 : i32
    return %c0_i32, %c0_i32_0 : i32, i32
  }
  func.func @transform_2(%arg0: i32) -> (i32, i32) {
    %c0_i32 = arith.constant 0 : i32
    %c0_i32_0 = arith.constant 0 : i32
    %c0_i32_1 = arith.constant 0 : i32
    return %c0_i32, %c0_i32_0 : i32, i32
  }
  func.func @transform_3(%arg0: i32) -> (i32, i32, i32) {
    %c0_i32 = arith.constant 0 : i32
    %c0_i32_0 = arith.constant 0 : i32
    %c0_i32_1 = arith.constant 0 : i32
    return %arg0, %c0_i32, %c0_i32_0 : i32, i32, i32
  }
  func.func @transform_4(%arg0: i32) -> (i32, i32) {
    %c0_i32 = arith.constant 0 : i32
    %c0_i32_0 = arith.constant 0 : i32
    %c0_i32_1 = arith.constant 0 : i32
    return %c0_i32, %c0_i32_0 : i32, i32
  }
}

module attributes {stable_mosaic.version = 11 : i64} {
  func.func @bn_relu_kernel(%arg0: i32, %arg1: memref<1x256x128xf32, #tpu.memory_space<vmem>>, %arg2: memref<2x128xf32, #tpu.memory_space<vmem>>, %arg3: memref<1x256x128xf32, #tpu.memory_space<vmem>>) attributes {dimension_semantics = [#tpu.dimension_semantics<parallel>], iteration_bounds = array<i64: 2>, scalar_prefetch = 0 : i64, scratch_operands = 0 : i64, tpu.core_type = #tpu.core_type<tc>, window_params = [{transform_indices = @transform_0, window_bounds = array<i64: 1, 256, 128>}, {pipeline_mode = #tpu.pipeline_mode<synchronous>, transform_indices = @transform_1, window_bounds = array<i64: 2, 128>}, {transform_indices = @transform_2, window_bounds = array<i64: 1, 256, 128>}]} {
    %c0 = arith.constant 0 : index
    %c0_0 = arith.constant 0 : index
    %c0_1 = arith.constant 0 : index
    %0 = vector.load %arg1[%c0, %c0_0, %c0_1] : memref<1x256x128xf32, #tpu.memory_space<vmem>>, vector<1x256x128xf32>
    %1 = vector.shape_cast %0 : vector<1x256x128xf32> to vector<256x128xf32>
    %c0_2 = arith.constant 0 : index
    %c0_3 = arith.constant 0 : index
    %2 = vector.load %arg2[%c0_2, %c0_3] : memref<2x128xf32, #tpu.memory_space<vmem>>, vector<1x128xf32>
    %3 = vector.broadcast %2 : vector<1x128xf32> to vector<256x128xf32>
    %4 = arith.mulf %1, %3 : vector<256x128xf32>
    %c1 = arith.constant 1 : index
    %c0_4 = arith.constant 0 : index
    %5 = vector.load %arg2[%c1, %c0_4] : memref<2x128xf32, #tpu.memory_space<vmem>>, vector<1x128xf32>
    %6 = vector.broadcast %5 : vector<1x128xf32> to vector<256x128xf32>
    %7 = arith.addf %4, %6 : vector<256x128xf32>
    %cst = arith.constant 0.000000e+00 : f32
    %8 = vector.broadcast %cst : f32 to vector<256x128xf32>
    %9 = arith.maximumf %7, %8 : vector<256x128xf32>
    %c0_5 = arith.constant 0 : index
    %c0_6 = arith.constant 0 : index
    %c0_7 = arith.constant 0 : index
    %10 = vector.load %arg3[%c0_5, %c0_6, %c0_7] : memref<1x256x128xf32, #tpu.memory_space<vmem>>, vector<1x256x128xf32>
    %11 = vector.shape_cast %10 : vector<1x256x128xf32> to vector<256x128xf32>
    %12 = vector.shape_cast %9 : vector<256x128xf32> to vector<1x256x128xf32>
    tpu.vector_store %arg3[%c0_5, %c0_6, %c0_7], %12 {strides = array<i32>} : memref<1x256x128xf32, #tpu.memory_space<vmem>>, vector<1x256x128xf32>,
    return
  }
  func.func @transform_0(%arg0: i32) -> (i32, i32, i32) {
    %c0_i32 = arith.constant 0 : i32
    %c0_i32_0 = arith.constant 0 : i32
    %c0_i32_1 = arith.constant 0 : i32
    return %arg0, %c0_i32, %c0_i32_0 : i32, i32, i32
  }
  func.func @transform_1(%arg0: i32) -> (i32, i32) {
    %c0_i32 = arith.constant 0 : i32
    %c0_i32_0 = arith.constant 0 : i32
    %c0_i32_1 = arith.constant 0 : i32
    return %c0_i32, %c0_i32_0 : i32, i32
  }
  func.func @transform_2(%arg0: i32) -> (i32, i32, i32) {
    %c0_i32 = arith.constant 0 : i32
    %c0_i32_0 = arith.constant 0 : i32
    %c0_i32_1 = arith.constant 0 : i32
    return %arg0, %c0_i32, %c0_i32_0 : i32, i32, i32
  }
}

</mosaic_0001>

<llo_original>
// kernel: unet_block_forward.5
$region0: #{unet_block_forward.5}
  #allocation0 [shape = 'u32[]', space=smem, size = 0x4, offset = 0x4, fixed_abs, tag = 'smem constant byte address 0x4 - core index']
  #allocation1 [shape = 'u32[144,128]{1,0:T(1,128)}', space=vmem, size = 0x12000, scoped, tag = 'internal scratch']
  %s0 = inlined_call_operand.vmem [shape: f32[2,256,128], index: 0, kind: input, shape index: {}]
  %s1 = inlined_call_operand.vmem [shape: f32[2,128], index: 1, kind: input, shape index: {}]
  %s2 = inlined_call_operand.vmem [shape: f32[2,256,128], index: 2, kind: output, shape index: {}]
  %s3 = sld [smem:[#allocation0]]
  $region41: #{unet_block_forward.5} parent=0
    _
  %s5 = ssub.s32 1, %s3
  %s6 = scalar_select 0, %s5, %s3
  loop: start=0, step=1, limit=4
  $region2: #{unet_block_forward.5} parent=0 // loop_pre_header
    _
  $region3: #{unet_block_forward.5} parent=0 // loop_header
    %s8 = sphi 0, %s12
    %p9 = scmp.ge.s32.totalorder %s8, 4
    %s18 = sphi 0, %s20
    %s21 = sphi 0, %s18
    %s22 = sphi 0, %s21
    %s38 = sphi 0, %s22
    %s42 = sphi 0, %s42
    %s44 = sphi 0, %s42
    %s45 = sphi 0, %s44
    %s59 = sphi 0, %s45
    %s65 = sphi 0, %s67
    %s68 = sphi 0, %s65
    %s69 = sphi 0, %s68
    %s85 = sphi 0, %s69
  $region4: #{unet_block_forward.5} parent=0 // loop_header_branch
    %11 = sbr.rel (%p9) target = $region8
  $region5: #{unet_block_forward.5} parent=0 // loop_body
    %s13 = ssub.s32 %s8, 1
    %s14 = ssub.s32 %s8, 2
    %s15 = sadd.s32 %s8, 1
    %s16 = ssub.s32 %s8, %s15
    %p17 = scmp.eq.s32.totalorder %s16, 0
    %s19 = sadd.s32 %s18, 1
    %s20 = scalar_select %p17, %s18, %s19
    %p23 = pneg %p17
    %p24 = scmp.eq.s32.totalorder %s8, 1
    %p25 = por %p23, %p24
    %p26 = scmp.ne.s32.totalorder %s18, %s21
    %p27 = scmp.eq.s32.totalorder %s8, 0
    %p28 = por %p26, %p27
    %p29 = scmp.ne.s32.totalorder %s18, %s21
    %p30 = scmp.eq.s32.totalorder %s13, 1
    %p31 = por %p29, %p30
    %p32 = scmp.ne.s32.totalorder %s21, %s22
    %p33 = scmp.eq.s32.totalorder %s13, 0
    %p34 = por %p32, %p33
    %p35 = scmp.ne.s32.totalorder %s21, %s22
    %p36 = scmp.eq.s32.totalorder %s14, 1
    %p37 = por %p35, %p36
    %p39 = scmp.ne.s32.totalorder %s22, %s38
    %p40 = scmp.eq.s32.totalorder %s14, 0
    %p41 = por %p39, %p40
    %s43 = sadd.s32 %s42, 1
    %p46 = scmp.eq.s32.totalorder %s8, 1
    %p47 = scmp.ne.s32.totalorder %s42, %s44
    %p48 = scmp.eq.s32.totalorder %s8, 0
    %p49 = por %p47, %p48
    %p50 = scmp.ne.s32.totalorder %s42, %s44
    %p51 = scmp.eq.s32.totalorder %s13, 1
    %p52 = por %p50, %p51
    %p53 = scmp.ne.s32.totalorder %s44, %s45
    %p54 = scmp.eq.s32.totalorder %s13, 0
    %p55 = por %p53, %p54
    %p56 = scmp.ne.s32.totalorder %s44, %s45
    %p57 = scmp.eq.s32.totalorder %s14, 1
    %p58 = por %p56, %p57
    %p60 = scmp.ne.s32.totalorder %s45, %s59
    %p61 = scmp.eq.s32.totalorder %s14, 0
    %p62 = por %p60, %p61
    %s63 = ssub.s32 %s8, %s15
    %p64 = scmp.eq.s32.totalorder %s63, 0
    %s66 = sadd.s32 %s65, 1
    %s67 = scalar_select %p64, %s65, %s66
    %p70 = pneg %p64
    %p71 = scmp.eq.s32.totalorder %s8, 1
    %p72 = por %p70, %p71
    %p73 = scmp.ne.s32.totalorder %s65, %s68
    %p74 = scmp.eq.s32.totalorder %s8, 0
    %p75 = por %p73, %p74
    %p76 = scmp.ne.s32.totalorder %s65, %s68
    %p77 = scmp.eq.s32.totalorder %s13, 1
    %p78 = por %p76, %p77
    %p79 = scmp.ne.s32.totalorder %s68, %s69
    %p80 = scmp.eq.s32.totalorder %s13, 0
    %p81 = por %p79, %p80
    %p82 = scmp.ne.s32.totalorder %s68, %s69
    %p83 = scmp.eq.s32.totalorder %s14, 1
    %p84 = por %p82, %p83
    %p86 = scmp.ne.s32.totalorder %s69, %s85
    %p87 = scmp.eq.s32.totalorder %s14, 0
    %p88 = por %p86, %p87
    %p89 = scmp.le.s32.totalorder 1, %s8
    %p90 = scmp.lt.s32.totalorder %s8, 3
    %p91 = pnand %p89, %p90
    %p92 = pneg %p91
    // Predicated region
    $region9: #{unet_block_forward.5} parent=5 // pred_check
      _
    $region10: #{unet_block_forward.5} parent=5 // pred_check_branch
      %94 = sbr.rel (%p91) target = $region12
    $region11: #{unet_block_forward.5} parent=5 // pred_region
      %s95 = ssub.s32 %s8, 1
      // Predicated region
      $region13: #{unet_block_forward.5} parent=11 // pred_check
        %p96 = pneg %p55
      $region14: #{unet_block_forward.5} parent=11 // pred_check_branch
        %98 = sbr.rel (%p96) target = $region16
      $region15: #{unet_block_forward.5} parent=11 // pred_region
        _
      $region16: #{unet_block_forward.5} parent=11 // pred_fallthru
        _
    $region12: #{unet_block_forward.5} parent=5 // pred_fallthru
      _
    %p99 = scmp.lt.s32.totalorder %s8, 2
    // Predicated region
    $region17: #{unet_block_forward.5} parent=5 // pred_check
      %p100 = pneg %p99
    $region18: #{unet_block_forward.5} parent=5 // pred_check_branch
      %102 = sbr.rel (%p100) target = $region20
    $region19: #{unet_block_forward.5} parent=5 // pred_region
      // Predicated region
      $region21: #{unet_block_forward.5} parent=19 // pred_check
        %p103 = pneg %p28
      $region22: #{unet_block_forward.5} parent=19 // pred_check_branch
        %105 = sbr.rel (%p103) target = $region24
      $region23: #{unet_block_forward.5} parent=19 // pred_region
        %p106 = scmp.lt.s32.totalorder %s8, 1
        %s107 = scalar_select %p106, %s8, 1
        %s108 = smul.addr %s107, 32
        %s109 = smul.addr %s108, 8
        %s110 = scalar_lea.vmem %s0, %s109
      $region24: #{unet_block_forward.5} parent=19 // pred_fallthru
        _
    $region20: #{unet_block_forward.5} parent=5 // pred_fallthru
      _
    %p111 = scmp.le.s32.totalorder 1, %s8
    %p112 = scmp.lt.s32.totalorder %s8, 3
    %p113 = pnand %p111, %p112
    %p114 = pneg %p113
    // Predicated region
    $region25: #{unet_block_forward.5} parent=5 // pred_check
      _
    $region26: #{unet_block_forward.5} parent=5 // pred_check_branch
      %116 = sbr.rel (%p113) target = $region28
    $region27: #{unet_block_forward.5} parent=5 // pred_region
      %s117 = ssub.s32 %s8, 1
      %p118 = scmp.lt.s32.totalorder %s13, 1
      %s119 = scalar_select %p118, %s13, 1
      %s120 = smul.addr %s119, 32
      %s121 = smul.addr %s120, 8
      %s122 = scalar_lea.vmem %s0, %s121
      %p123 = pneg %p34
      %p124 = pneg %p31
      %p125 = pneg %p55
      %p126 = pneg %p52
      %p127 = pneg %p81
      %p128 = pneg %p78
      %p129 = scmp.lt.s32.totalorder %s13, 1
      %s130 = scalar_select %p129, %s13, 1
      %s131 = smul.addr %s130, 32
      %s132 = smul.addr %s131, 8
      %s133 = scalar_lea.vmem %s2, %s132
      %p134 = scmp.lt.s32.totalorder %s13, 1
      %s135 = scalar_select %p134, %s13, 1
      %s136 = smul.addr %s135, 32
      %s137 = smul.addr %s136, 8
      %s138 = scalar_lea.vmem %s0, %s137
      %p139 = scmp.lt.s32.totalorder %s13, 1
      %s140 = scalar_select %p139, %s13, 1
      %s141 = smul.addr %s140, 32
      %s142 = smul.addr %s141, 8
      %s143 = scalar_lea.vmem %s2, %s142
      %v144 = vld [vmem:[%s138] sm:$0xff]
      %v145 = vld [vmem:[%s138 + $0x8] sm:$0xff]
      %v146 = vld [vmem:[%s138 + $0x10] sm:$0xff]
      %v147 = vld [vmem:[%s138 + $0x18] sm:$0xff]
      %v148 = vld [vmem:[%s138 + $0x20] sm:$0xff]
      %v149 = vld [vmem:[%s138 + $0x28] sm:$0xff]
      %v150 = vld [vmem:[%s138 + $0x30] sm:$0xff]
      %v151 = vld [vmem:[%s138 + $0x38] sm:$0xff]
      %v152 = vld [vmem:[%s138 + $0x40] sm:$0xff]
      %v153 = vld [vmem:[%s138 + $0x48] sm:$0xff]
      %v154 = vld [vmem:[%s138 + $0x50] sm:$0xff]
      %v155 = vld [vmem:[%s138 + $0x58] sm:$0xff]
      %v156 = vld [vmem:[%s138 + $0x60] sm:$0xff]
      %v157 = vld [vmem:[%s138 + $0x68] sm:$0xff]
      %v158 = vld [vmem:[%s138 + $0x70] sm:$0xff]
      %v159 = vld [vmem:[%s138 + $0x78] sm:$0xff]
      %v160 = vld [vmem:[%s138 + $0x80] sm:$0xff]
      %v161 = vld [vmem:[%s138 + $0x88] sm:$0xff]
      %v162 = vld [vmem:[%s138 + $0x90] sm:$0xff]
      %v163 = vld [vmem:[%s138 + $0x98] sm:$0xff]
      %v164 = vld [vmem:[%s138 + $0xa0] sm:$0xff]
      %v165 = vld [vmem:[%s138 + $0xa8] sm:$0xff]
      %v166 = vld [vmem:[%s138 + $0xb0] sm:$0xff]
      %v167 = vld [vmem:[%s138 + $0xb8] sm:$0xff]
      %v168 = vld [vmem:[%s138 + $0xc0] sm:$0xff]
      %v169 = vld [vmem:[%s138 + $0xc8] sm:$0xff]
      %v170 = vld [vmem:[%s138 + $0xd0] sm:$0xff]
      %v171 = vld [vmem:[%s138 + $0xd8] sm:$0xff]
      %v172 = vld [vmem:[%s138 + $0xe0] sm:$0xff]
      %v173 = vld [vmem:[%s138 + $0xe8] sm:$0xff]
      %v174 = vld [vmem:[%s138 + $0xf0] sm:$0xff]
      %v175 = vld [vmem:[%s138 + $0xf8] sm:$0xff]
      %v176 = vld [vmem:[%s1] sm:$0x1]
      %v177 = vlaneseq
      %v178 = vshrl.u32 %v177, 7
      %v179 = vsub.s32 0, %v178
      %v180 = vrot.slane %v176, %v179
      %v181 = vmul.f32 %v144, %v180
      %v182 = vmul.f32 %v145, %v180
      %v183 = vmul.f32 %v146, %v180
      %v184 = vmul.f32 %v147, %v180
      %v185 = vmul.f32 %v148, %v180
      %v186 = vmul.f32 %v149, %v180
      %v187 = vmul.f32 %v150, %v180
      %v188 = vmul.f32 %v151, %v180
      %v189 = vmul.f32 %v152, %v180
      %v190 = vmul.f32 %v153, %v180
      %v191 = vmul.f32 %v154, %v180
      %v192 = vmul.f32 %v155, %v180
      %v193 = vmul.f32 %v156, %v180
      %v194 = vmul.f32 %v157, %v180
      %v195 = vmul.f32 %v158, %v180
      %v196 = vmul.f32 %v159, %v180
      %v197 = vmul.f32 %v160, %v180
      %v198 = vmul.f32 %v161, %v180
      %v199 = vmul.f32 %v162, %v180
      %v200 = vmul.f32 %v163, %v180
      %v201 = vmul.f32 %v164, %v180
      %v202 = vmul.f32 %v165, %v180
      %v203 = vmul.f32 %v166, %v180
      %v204 = vmul.f32 %v167, %v180
      %v205 = vmul.f32 %v168, %v180
      %v206 = vmul.f32 %v169, %v180
      %v207 = vmul.f32 %v170, %v180
      %v208 = vmul.f32 %v171, %v180
      %v209 = vmul.f32 %v172, %v180
      %v210 = vmul.f32 %v173, %v180
      %v211 = vmul.f32 %v174, %v180
      %v212 = vmul.f32 %v175, %v180
      %v213 = vld [vmem:[%s1 + $0x1] sm:$0x1]
      %v214 = vlaneseq
      %v215 = vshrl.u32 %v214, 7
      %v216 = vsub.s32 0, %v215
      %v217 = vrot.slane %v213, %v216
      %v218 = vadd.f32 %v181, %v217
      %v219 = vadd.f32 %v182, %v217
      %v220 = vadd.f32 %v183, %v217
      %v221 = vadd.f32 %v184, %v217
      %v222 = vadd.f32 %v185, %v217
      %v223 = vadd.f32 %v186, %v217
      %v224 = vadd.f32 %v187, %v217
      %v225 = vadd.f32 %v188, %v217
      %v226 = vadd.f32 %v189, %v217
      %v227 = vadd.f32 %v190, %v217
      %v228 = vadd.f32 %v191, %v217
      %v229 = vadd.f32 %v192, %v217
      %v230 = vadd.f32 %v193, %v217
      %v231 = vadd.f32 %v194, %v217
      %v232 = vadd.f32 %v195, %v217
      %v233 = vadd.f32 %v196, %v217
      %v234 = vadd.f32 %v197, %v217
      %v235 = vadd.f32 %v198, %v217
      %v236 = vadd.f32 %v199, %v217
      %v237 = vadd.f32 %v200, %v217
      %v238 = vadd.f32 %v201, %v217
      %v239 = vadd.f32 %v202, %v217
      %v240 = vadd.f32 %v203, %v217
      %v241 = vadd.f32 %v204, %v217
      %v242 = vadd.f32 %v205, %v217
      %v243 = vadd.f32 %v206, %v217
      %v244 = vadd.f32 %v207, %v217
      %v245 = vadd.f32 %v208, %v217
      %v246 = vadd.f32 %v209, %v217
      %v247 = vadd.f32 %v210, %v217
      %v248 = vadd.f32 %v211, %v217
      %v249 = vadd.f32 %v212, %v217
      %v250 = vmax.f32 %v218, 0.0
      %v251 = vmax.f32 %v219, 0.0
      %v252 = vmax.f32 %v220, 0.0
      %v253 = vmax.f32 %v221, 0.0
      %v254 = vmax.f32 %v222, 0.0
      %v255 = vmax.f32 %v223, 0.0
      %v256 = vmax.f32 %v224, 0.0
      %v257 = vmax.f32 %v225, 0.0
      %v258 = vmax.f32 %v226, 0.0
      %v259 = vmax.f32 %v227, 0.0
      %v260 = vmax.f32 %v228, 0.0
      %v261 = vmax.f32 %v229, 0.0
      %v262 = vmax.f32 %v230, 0.0
      %v263 = vmax.f32 %v231, 0.0
      %v264 = vmax.f32 %v232, 0.0
      %v265 = vmax.f32 %v233, 0.0
      %v266 = vmax.f32 %v234, 0.0
      %v267 = vmax.f32 %v235, 0.0
      %v268 = vmax.f32 %v236, 0.0
      %v269 = vmax.f32 %v237, 0.0
      %v270 = vmax.f32 %v238, 0.0
      %v271 = vmax.f32 %v239, 0.0
      %v272 = vmax.f32 %v240, 0.0
      %v273 = vmax.f32 %v241, 0.0
      %v274 = vmax.f32 %v242, 0.0
      %v275 = vmax.f32 %v243, 0.0
      %v276 = vmax.f32 %v244, 0.0
      %v277 = vmax.f32 %v245, 0.0
      %v278 = vmax.f32 %v246, 0.0
      %v279 = vmax.f32 %v247, 0.0
      %v280 = vmax.f32 %v248, 0.0
      %v281 = vmax.f32 %v249, 0.0
      %282 = vst [vmem:[%s143] sm:$0xff] %v250
      %283 = vst [vmem:[%s143 + $0x8] sm:$0xff] %v251
      %284 = vst [vmem:[%s143 + $0x10] sm:$0xff] %v252
      %285 = vst [vmem:[%s143 + $0x18] sm:$0xff] %v253
      %286 = vst [vmem:[%s143 + $0x20] sm:$0xff] %v254
      %287 = vst [vmem:[%s143 + $0x28] sm:$0xff] %v255
      %288 = vst [vmem:[%s143 + $0x30] sm:$0xff] %v256
      %289 = vst [vmem:[%s143 + $0x38] sm:$0xff] %v257
      %290 = vst [vmem:[%s143 + $0x40] sm:$0xff] %v258
      %291 = vst [vmem:[%s143 + $0x48] sm:$0xff] %v259
      %292 = vst [vmem:[%s143 + $0x50] sm:$0xff] %v260
      %293 = vst [vmem:[%s143 + $0x58] sm:$0xff] %v261
      %294 = vst [vmem:[%s143 + $0x60] sm:$0xff] %v262
      %295 = vst [vmem:[%s143 + $0x68] sm:$0xff] %v263
      %296 = vst [vmem:[%s143 + $0x70] sm:$0xff] %v264
      %297 = vst [vmem:[%s143 + $0x78] sm:$0xff] %v265
      %298 = vst [vmem:[%s143 + $0x80] sm:$0xff] %v266
      %299 = vst [vmem:[%s143 + $0x88] sm:$0xff] %v267
      %300 = vst [vmem:[%s143 + $0x90] sm:$0xff] %v268
      %301 = vst [vmem:[%s143 + $0x98] sm:$0xff] %v269
      %302 = vst [vmem:[%s143 + $0xa0] sm:$0xff] %v270
      %303 = vst [vmem:[%s143 + $0xa8] sm:$0xff] %v271
      %304 = vst [vmem:[%s143 + $0xb0] sm:$0xff] %v272
      %305 = vst [vmem:[%s143 + $0xb8] sm:$0xff] %v273
      %306 = vst [vmem:[%s143 + $0xc0] sm:$0xff] %v274
      %307 = vst [vmem:[%s143 + $0xc8] sm:$0xff] %v275
      %308 = vst [vmem:[%s143 + $0xd0] sm:$0xff] %v276
      %309 = vst [vmem:[%s143 + $0xd8] sm:$0xff] %v277
      %310 = vst [vmem:[%s143 + $0xe0] sm:$0xff] %v278
      %311 = vst [vmem:[%s143 + $0xe8] sm:$0xff] %v279
      %312 = vst [vmem:[%s143 + $0xf0] sm:$0xff] %v280
      %313 = vst [vmem:[%s143 + $0xf8] sm:$0xff] %v281
      %p314 = scmp.lt.s32.totalorder %s13, 1
      %s315 = scalar_select %p314, %s13, 1
      %s316 = smul.addr %s315, 32
      %s317 = smul.addr %s316, 8
      %s318 = scalar_lea.vmem %s2, %s317
      // Predicated region
      $region29: #{unet_block_forward.5} parent=27 // pred_check
        %p319 = pneg %p78
      $region30: #{unet_block_forward.5} parent=27 // pred_check_branch
        %321 = sbr.rel (%p319) target = $region32
      $region31: #{unet_block_forward.5} parent=27 // pred_region
        _
      $region32: #{unet_block_forward.5} parent=27 // pred_fallthru
        _
    $region28: #{unet_block_forward.5} parent=5 // pred_fallthru
      _
    %p322 = scmp.le.s32.totalorder 2, %s8
    // Predicated region
    $region33: #{unet_block_forward.5} parent=5 // pred_check
      %p323 = pneg %p322
    $region34: #{unet_block_forward.5} parent=5 // pred_check_branch
      %325 = sbr.rel (%p323) target = $region36
    $region35: #{unet_block_forward.5} parent=5 // pred_region
      %s326 = ssub.s32 %s8, 2
      // Predicated region
      $region37: #{unet_block_forward.5} parent=35 // pred_check
        %p327 = pneg %p84
      $region38: #{unet_block_forward.5} parent=35 // pred_check_branch
        %329 = sbr.rel (%p327) target = $region40
      $region39: #{unet_block_forward.5} parent=35 // pred_region
        %p330 = scmp.lt.s32.totalorder %s14, 1
        %s331 = scalar_select %p330, %s14, 1
        %s332 = smul.addr %s331, 32
        %s333 = smul.addr %s332, 8
        %s334 = scalar_lea.vmem %s2, %s333
      $region40: #{unet_block_forward.5} parent=35 // pred_fallthru
        _
    $region36: #{unet_block_forward.5} parent=5 // pred_fallthru
      _
  $region6: #{unet_block_forward.5} parent=0 // loop_footer
    %s12 = sadd.s32 1, %s8
  $region7: #{unet_block_forward.5} parent=0 // loop_footer_branch
    %7 = sbr.rel target = $region3
  $region8: #{unet_block_forward.5} parent=0 // loop_exit
    _

// kernel: unet_block_forward.4
$region0: #{unet_block_forward.4}
  #allocation0 [shape = 'u32[]', space=smem, size = 0x4, offset = 0x4, fixed_abs, tag = 'smem constant byte address 0x4 - core index']
  #allocation1 [shape = 'u32[144,128]{1,0:T(1,128)}', space=vmem, size = 0x12000, scoped, tag = 'internal scratch']
  %s0 = inlined_call_operand.vmem [shape: f32[2,256,128], index: 0, kind: input, shape index: {}]
  %s1 = inlined_call_operand.vmem [shape: f32[2,128], index: 1, kind: input, shape index: {}]
  %s2 = inlined_call_operand.vmem [shape: f32[1152,128], index: 2, kind: input, shape index: {}]
  %s3 = inlined_call_operand.vmem [shape: f32[2,256,128], index: 3, kind: output, shape index: {0}]
  %s4 = inlined_call_operand.vmem [shape: f32[2,128], index: 4, kind: output, shape index: {1}]
  %5 = xla_tuple %s3, %s4
  %s6 = sld [smem:[#allocation0]]
  $region57: #{unet_block_forward.4} parent=0
    _
  %s8 = ssub.s32 1, %s6
  %s9 = scalar_select 0, %s8, %s6
  loop: start=0, step=1, limit=4
  $region2: #{unet_block_forward.4} parent=0 // loop_pre_header
    _
  $region3: #{unet_block_forward.4} parent=0 // loop_header
    %s11 = sphi 0, %s15
    %p12 = scmp.ge.s32.totalorder %s11, 4
    %s21 = sphi 0, %s23
    %s24 = sphi 0, %s21
    %s25 = sphi 0, %s24
    %s41 = sphi 0, %s25
    %s45 = sphi 0, %s45
    %s47 = sphi 0, %s45
    %s48 = sphi 0, %s47
    %s62 = sphi 0, %s48
    %s66 = sphi 0, %s66
    %s68 = sphi 0, %s66
    %s69 = sphi 0, %s68
    %s83 = sphi 0, %s69
    %s89 = sphi 0, %s91
    %s92 = sphi 0, %s89
    %s93 = sphi 0, %s92
    %s109 = sphi 0, %s93
    %s113 = sphi 0, %s113
    %s115 = sphi 0, %s113
    %s116 = sphi 0, %s115
    %s130 = sphi 0, %s116
  $region4: #{unet_block_forward.4} parent=0 // loop_header_branch
    %14 = sbr.rel (%p12) target = $region8
  $region5: #{unet_block_forward.4} parent=0 // loop_body
    %s16 = ssub.s32 %s11, 1
    %s17 = ssub.s32 %s11, 2
    %s18 = sadd.s32 %s11, 1
    %s19 = ssub.s32 %s11, %s18
    %p20 = scmp.eq.s32.totalorder %s19, 0
    %s22 = sadd.s32 %s21, 1
    %s23 = scalar_select %p20, %s21, %s22
    %p26 = pneg %p20
    %p27 = scmp.eq.s32.totalorder %s11, 1
    %p28 = por %p26, %p27
    %p29 = scmp.ne.s32.totalorder %s21, %s24
    %p30 = scmp.eq.s32.totalorder %s11, 0
    %p31 = por %p29, %p30
    %p32 = scmp.ne.s32.totalorder %s21, %s24
    %p33 = scmp.eq.s32.totalorder %s16, 1
    %p34 = por %p32, %p33
    %p35 = scmp.ne.s32.totalorder %s24, %s25
    %p36 = scmp.eq.s32.totalorder %s16, 0
    %p37 = por %p35, %p36
    %p38 = scmp.ne.s32.totalorder %s24, %s25
    %p39 = scmp.eq.s32.totalorder %s17, 1
    %p40 = por %p38, %p39
    %p42 = scmp.ne.s32.totalorder %s25, %s41
    %p43 = scmp.eq.s32.totalorder %s17, 0
    %p44 = por %p42, %p43
    %s46 = sadd.s32 %s45, 1
    %p49 = scmp.eq.s32.totalorder %s11, 1
    %p50 = scmp.ne.s32.totalorder %s45, %s47
    %p51 = scmp.eq.s32.totalorder %s11, 0
    %p52 = por %p50, %p51
    %p53 = scmp.ne.s32.totalorder %s45, %s47
    %p54 = scmp.eq.s32.totalorder %s16, 1
    %p55 = por %p53, %p54
    %p56 = scmp.ne.s32.totalorder %s47, %s48
    %p57 = scmp.eq.s32.totalorder %s16, 0
    %p58 = por %p56, %p57
    %p59 = scmp.ne.s32.totalorder %s47, %s48
    %p60 = scmp.eq.s32.totalorder %s17, 1
    %p61 = por %p59, %p60
    %p63 = scmp.ne.s32.totalorder %s48, %s62
    %p64 = scmp.eq.s32.totalorder %s17, 0
    %p65 = por %p63, %p64
    %s67 = sadd.s32 %s66, 1
    %p70 = scmp.eq.s32.totalorder %s11, 1
    %p71 = scmp.ne.s32.totalorder %s66, %s68
    %p72 = scmp.eq.s32.totalorder %s11, 0
    %p73 = por %p71, %p72
    %p74 = scmp.ne.s32.totalorder %s66, %s68
    %p75 = scmp.eq.s32.totalorder %s16, 1
    %p76 = por %p74, %p75
    %p77 = scmp.ne.s32.totalorder %s68, %s69
    %p78 = scmp.eq.s32.totalorder %s16, 0
    %p79 = por %p77, %p78
    %p80 = scmp.ne.s32.totalorder %s68, %s69
    %p81 = scmp.eq.s32.totalorder %s17, 1
    %p82 = por %p80, %p81
    %p84 = scmp.ne.s32.totalorder %s69, %s83
    %p85 = scmp.eq.s32.totalorder %s17, 0
    %p86 = por %p84, %p85
    %s87 = ssub.s32 %s11, %s18
    %p88 = scmp.eq.s32.totalorder %s87, 0
    %s90 = sadd.s32 %s89, 1
    %s91 = scalar_select %p88, %s89, %s90
    %p94 = pneg %p88
    %p95 = scmp.eq.s32.totalorder %s11, 1
    %p96 = por %p94, %p95
    %p97 = scmp.ne.s32.totalorder %s89, %s92
    %p98 = scmp.eq.s32.totalorder %s11, 0
    %p99 = por %p97, %p98
    %p100 = scmp.ne.s32.totalorder %s89, %s92
    %p101 = scmp.eq.s32.totalorder %s16, 1
    %p102 = por %p100, %p101
    %p103 = scmp.ne.s32.totalorder %s92, %s93
    %p104 = scmp.eq.s32.totalorder %s16, 0
    %p105 = por %p103, %p104
    %p106 = scmp.ne.s32.totalorder %s92, %s93
    %p107 = scmp.eq.s32.totalorder %s17, 1
    %p108 = por %p106, %p107
    %p110 = scmp.ne.s32.totalorder %s93, %s109
    %p111 = scmp.eq.s32.totalorder %s17, 0
    %p112 = por %p110, %p111
    %s114 = sadd.s32 %s113, 1
    %p117 = scmp.eq.s32.totalorder %s11, 1
    %p118 = scmp.ne.s32.totalorder %s113, %s115
    %p119 = scmp.eq.s32.totalorder %s11, 0
    %p120 = por %p118, %p119
    %p121 = scmp.ne.s32.totalorder %s113, %s115
    %p122 = scmp.eq.s32.totalorder %s16, 1
    %p123 = por %p121, %p122
    %p124 = scmp.ne.s32.totalorder %s115, %s116
    %p125 = scmp.eq.s32.totalorder %s16, 0
    %p126 = por %p124, %p125
    %p127 = scmp.ne.s32.totalorder %s115, %s116
    %p128 = scmp.eq.s32.totalorder %s17, 1
    %p129 = por %p127, %p128
    %p131 = scmp.ne.s32.totalorder %s116, %s130
    %p132 = scmp.eq.s32.totalorder %s17, 0
    %p133 = por %p131, %p132
    %p134 = scmp.le.s32.totalorder 1, %s11
    %p135 = scmp.lt.s32.totalorder %s11, 3
    %p136 = pnand %p134, %p135
    %p137 = pneg %p136
    // Predicated region
    $region9: #{unet_block_forward.4} parent=5 // pred_check
      _
    $region10: #{unet_block_forward.4} parent=5 // pred_check_branch
      %139 = sbr.rel (%p136) target = $region12
    $region11: #{unet_block_forward.4} parent=5 // pred_region
      %s140 = ssub.s32 %s11, 1
      // Predicated region
      $region13: #{unet_block_forward.4} parent=11 // pred_check
        %p141 = pneg %p58
      $region14: #{unet_block_forward.4} parent=11 // pred_check_branch
        %143 = sbr.rel (%p141) target = $region16
      $region15: #{unet_block_forward.4} parent=11 // pred_region
        _
      $region16: #{unet_block_forward.4} parent=11 // pred_fallthru
        _
      // Predicated region
      $region17: #{unet_block_forward.4} parent=11 // pred_check
        %p144 = pneg %p79
      $region18: #{unet_block_forward.4} parent=11 // pred_check_branch
        %146 = sbr.rel (%p144) target = $region20
      $region19: #{unet_block_forward.4} parent=11 // pred_region
        _
      $region20: #{unet_block_forward.4} parent=11 // pred_fallthru
        _
    $region12: #{unet_block_forward.4} parent=5 // pred_fallthru
      _
    %p147 = scmp.lt.s32.totalorder %s11, 2
    // Predicated region
    $region21: #{unet_block_forward.4} parent=5 // pred_check
      %p148 = pneg %p147
    $region22: #{unet_block_forward.4} parent=5 // pred_check_branch
      %150 = sbr.rel (%p148) target = $region24
    $region23: #{unet_block_forward.4} parent=5 // pred_region
      // Predicated region
      $region25: #{unet_block_forward.4} parent=23 // pred_check
        %p151 = pneg %p31
      $region26: #{unet_block_forward.4} parent=23 // pred_check_branch
        %153 = sbr.rel (%p151) target = $region28
      $region27: #{unet_block_forward.4} parent=23 // pred_region
        %p154 = scmp.lt.s32.totalorder %s11, 1
        %s155 = scalar_select %p154, %s11, 1
        %s156 = smul.addr %s155, 32
        %s157 = smul.addr %s156, 8
        %s158 = scalar_lea.vmem %s0, %s157
      $region28: #{unet_block_forward.4} parent=23 // pred_fallthru
        _
    $region24: #{unet_block_forward.4} parent=5 // pred_fallthru
      _
    %p159 = scmp.le.s32.totalorder 1, %s11
    %p160 = scmp.lt.s32.totalorder %s11, 3
    %p161 = pnand %p159, %p160
    %p162 = pneg %p161
    // Predicated region
    $region29: #{unet_block_forward.4} parent=5 // pred_check
      _
    $region30: #{unet_block_forward.4} parent=5 // pred_check_branch
      %164 = sbr.rel (%p161) target = $region32
    $region31: #{unet_block_forward.4} parent=5 // pred_region
      %s165 = ssub.s32 %s11, 1
      %p166 = scmp.lt.s32.totalorder %s16, 1
      %s167 = scalar_select %p166, %s16, 1
      %s168 = smul.addr %s167, 32
      %s169 = smul.addr %s168, 8
      %s170 = scalar_lea.vmem %s0, %s169
      %p171 = pneg %p37
      %p172 = pneg %p34
      %p173 = pneg %p58
      %p174 = pneg %p55
      %p175 = pneg %p79
      %p176 = pneg %p76
      %p177 = pneg %p105
      %p178 = pneg %p102
      %p179 = scmp.lt.s32.totalorder %s16, 1
      %s180 = scalar_select %p179, %s16, 1
      %s181 = smul.addr %s180, 32
      %s182 = smul.addr %s181, 8
      %s183 = scalar_lea.vmem %s3, %s182
      %p184 = pneg %p126
      %p185 = pneg %p123
      %p186 = scmp.lt.s32.totalorder %s16, 1
      %s187 = scalar_select %p186, %s16, 1
      %s188 = smul.addr %s187, 32
      %s189 = smul.addr %s188, 8
      %s190 = scalar_lea.vmem %s0, %s189
      %p191 = scmp.lt.s32.totalorder %s16, 1
      %s192 = scalar_select %p191, %s16, 1
      %s193 = smul.addr %s192, 32
      %s194 = smul.addr %s193, 8
      %s195 = scalar_lea.vmem %s3, %s194
      %v196 = vld [vmem:[%s190] sm:$0xff]
      %v197 = vld [vmem:[%s190 + $0x8] sm:$0xff]
      %v198 = vld [vmem:[%s190 + $0x10] sm:$0xff]
      %v199 = vld [vmem:[%s190 + $0x18] sm:$0xff]
      %v200 = vld [vmem:[%s190 + $0x20] sm:$0xff]
      %v201 = vld [vmem:[%s190 + $0x28] sm:$0xff]
      %v202 = vld [vmem:[%s190 + $0x30] sm:$0xff]
      %v203 = vld [vmem:[%s190 + $0x38] sm:$0xff]
      %v204 = vld [vmem:[%s190 + $0x40] sm:$0xff]
      %v205 = vld [vmem:[%s190 + $0x48] sm:$0xff]
      %v206 = vld [vmem:[%s190 + $0x50] sm:$0xff]
      %v207 = vld [vmem:[%s190 + $0x58] sm:$0xff]
      %v208 = vld [vmem:[%s190 + $0x60] sm:$0xff]
      %v209 = vld [vmem:[%s190 + $0x68] sm:$0xff]
      %v210 = vld [vmem:[%s190 + $0x70] sm:$0xff]
      %v211 = vld [vmem:[%s190 + $0x78] sm:$0xff]
      %v212 = vld [vmem:[%s190 + $0x80] sm:$0xff]
      %v213 = vld [vmem:[%s190 + $0x88] sm:$0xff]
      %v214 = vld [vmem:[%s190 + $0x90] sm:$0xff]
      %v215 = vld [vmem:[%s190 + $0x98] sm:$0xff]
      %v216 = vld [vmem:[%s190 + $0xa0] sm:$0xff]
      %v217 = vld [vmem:[%s190 + $0xa8] sm:$0xff]
      %v218 = vld [vmem:[%s190 + $0xb0] sm:$0xff]
      %v219 = vld [vmem:[%s190 + $0xb8] sm:$0xff]
      %v220 = vld [vmem:[%s190 + $0xc0] sm:$0xff]
      %v221 = vld [vmem:[%s190 + $0xc8] sm:$0xff]
      %v222 = vld [vmem:[%s190 + $0xd0] sm:$0xff]
      %v223 = vld [vmem:[%s190 + $0xd8] sm:$0xff]
      %v224 = vld [vmem:[%s190 + $0xe0] sm:$0xff]
      %v225 = vld [vmem:[%s190 + $0xe8] sm:$0xff]
      %v226 = vld [vmem:[%s190 + $0xf0] sm:$0xff]
      %v227 = vld [vmem:[%s190 + $0xf8] sm:$0xff]
      %v228 = vld [vmem:[%s1] sm:$0x1]
      %v229 = vlaneseq
      %v230 = vshrl.u32 %v229, 7
      %v231 = vsub.s32 0, %v230
      %v232 = vrot.slane %v228, %v231
      %v233 = vmul.f32 %v196, %v232
      %v234 = vmul.f32 %v197, %v232
      %v235 = vmul.f32 %v198, %v232
      %v236 = vmul.f32 %v199, %v232
      %v237 = vmul.f32 %v200, %v232
      %v238 = vmul.f32 %v201, %v232
      %v239 = vmul.f32 %v202, %v232
      %v240 = vmul.f32 %v203, %v232
      %v241 = vmul.f32 %v204, %v232
      %v242 = vmul.f32 %v205, %v232
      %v243 = vmul.f32 %v206, %v232
      %v244 = vmul.f32 %v207, %v232
      %v245 = vmul.f32 %v208, %v232
      %v246 = vmul.f32 %v209, %v232
      %v247 = vmul.f32 %v210, %v232
      %v248 = vmul.f32 %v211, %v232
      %v249 = vmul.f32 %v212, %v232
      %v250 = vmul.f32 %v213, %v232
      %v251 = vmul.f32 %v214, %v232
      %v252 = vmul.f32 %v215, %v232
      %v253 = vmul.f32 %v216, %v232
      %v254 = vmul.f32 %v217, %v232
      %v255 = vmul.f32 %v218, %v232
      %v256 = vmul.f32 %v219, %v232
      %v257 = vmul.f32 %v220, %v232
      %v258 = vmul.f32 %v221, %v232
      %v259 = vmul.f32 %v222, %v232
      %v260 = vmul.f32 %v223, %v232
      %v261 = vmul.f32 %v224, %v232
      %v262 = vmul.f32 %v225, %v232
      %v263 = vmul.f32 %v226, %v232
      %v264 = vmul.f32 %v227, %v232
      %v265 = vld [vmem:[%s1 + $0x1] sm:$0x1]
      %v266 = vlaneseq
      %v267 = vshrl.u32 %v266, 7
      %v268 = vsub.s32 0, %v267
      %v269 = vrot.slane %v265, %v268
      %v270 = vadd.f32 %v233, %v269
      %v271 = vadd.f32 %v234, %v269
      %v272 = vadd.f32 %v235, %v269
      %v273 = vadd.f32 %v236, %v269
      %v274 = vadd.f32 %v237, %v269
      %v275 = vadd.f32 %v238, %v269
      %v276 = vadd.f32 %v239, %v269
      %v277 = vadd.f32 %v240, %v269
      %v278 = vadd.f32 %v241, %v269
      %v279 = vadd.f32 %v242, %v269
      %v280 = vadd.f32 %v243, %v269
      %v281 = vadd.f32 %v244, %v269
      %v282 = vadd.f32 %v245, %v269
      %v283 = vadd.f32 %v246, %v269
      %v284 = vadd.f32 %v247, %v269
      %v285 = vadd.f32 %v248, %v269
      %v286 = vadd.f32 %v249, %v269
      %v287 = vadd.f32 %v250, %v269
      %v288 = vadd.f32 %v251, %v269
      %v289 = vadd.f32 %v252, %v269
      %v290 = vadd.f32 %v253, %v269
      %v291 = vadd.f32 %v254, %v269
      %v292 = vadd.f32 %v255, %v269
      %v293 = vadd.f32 %v256, %v269
      %v294 = vadd.f32 %v257, %v269
      %v295 = vadd.f32 %v258, %v269
      %v296 = vadd.f32 %v259, %v269
      %v297 = vadd.f32 %v260, %v269
      %v298 = vadd.f32 %v261, %v269
      %v299 = vadd.f32 %v262, %v269
      %v300 = vadd.f32 %v263, %v269
      %v301 = vadd.f32 %v264, %v269
      %v302 = vmax.f32 %v270, 0.0
      %v303 = vmax.f32 %v271, 0.0
      %v304 = vmax.f32 %v272, 0.0
      %v305 = vmax.f32 %v273, 0.0
      %v306 = vmax.f32 %v274, 0.0
      %v307 = vmax.f32 %v275, 0.0
      %v308 = vmax.f32 %v276, 0.0
      %v309 = vmax.f32 %v277, 0.0
      %v310 = vmax.f32 %v278, 0.0
      %v311 = vmax.f32 %v279, 0.0
      %v312 = vmax.f32 %v280, 0.0
      %v313 = vmax.f32 %v281, 0.0
      %v314 = vmax.f32 %v282, 0.0
      %v315 = vmax.f32 %v283, 0.0
      %v316 = vmax.f32 %v284, 0.0
      %v317 = vmax.f32 %v285, 0.0
      %v318 = vmax.f32 %v286, 0.0
      %v319 = vmax.f32 %v287, 0.0
      %v320 = vmax.f32 %v288, 0.0
      %v321 = vmax.f32 %v289, 0.0
      %v322 = vmax.f32 %v290, 0.0
      %v323 = vmax.f32 %v291, 0.0
      %v324 = vmax.f32 %v292, 0.0
      %v325 = vmax.f32 %v293, 0.0
      %v326 = vmax.f32 %v294, 0.0
      %v327 = vmax.f32 %v295, 0.0
      %v328 = vmax.f32 %v296, 0.0
      %v329 = vmax.f32 %v297, 0.0
      %v330 = vmax.f32 %v298, 0.0
      %v331 = vmax.f32 %v299, 0.0
      %v332 = vmax.f32 %v300, 0.0
      %v333 = vmax.f32 %v301, 0.0
      %vm367 = vcmask 1040384
      %v368 = vrot.slane 0.0, 7
      %v369 = vsel %vm367, %v368, %v368
      %v370 = vrot.slane %v302, 7
      %v371 = vrot.slane %v303, 7
      %v372 = vsel %vm367, %v370, %v371
      %v373 = vrot.slane %v304, 7
      %v374 = vrot.slane %v305, 7
      %v375 = vsel %vm367, %v373, %v374
      %v376 = vrot.slane %v306, 7
      %v377 = vrot.slane %v307, 7
      %v378 = vsel %vm367, %v376, %v377
      %v379 = vrot.slane %v308, 7
      %v380 = vrot.slane %v309, 7
      %v381 = vsel %vm367, %v379, %v380
      %v382 = vrot.slane %v310, 7
      %v383 = vrot.slane %v311, 7
      %v384 = vsel %vm367, %v382, %v383
      %v385 = vrot.slane %v312, 7
      %v386 = vrot.slane %v313, 7
      %v387 = vsel %vm367, %v385, %v386
      %v388 = vrot.slane %v314, 7
      %v389 = vrot.slane %v315, 7
      %v390 = vsel %vm367, %v388, %v389
      %v391 = vrot.slane %v316, 7
      %v392 = vrot.slane %v317, 7
      %v393 = vsel %vm367, %v391, %v392
      %v394 = vrot.slane %v318, 7
      %v395 = vrot.slane %v319, 7
      %v396 = vsel %vm367, %v394, %v395
      %v397 = vrot.slane %v320, 7
      %v398 = vrot.slane %v321, 7
      %v399 = vsel %vm367, %v397, %v398
      %v400 = vrot.slane %v322, 7
      %v401 = vrot.slane %v323, 7
      %v402 = vsel %vm367, %v400, %v401
      %v403 = vrot.slane %v324, 7
      %v404 = vrot.slane %v325, 7
      %v405 = vsel %vm367, %v403, %v404
      %v406 = vrot.slane %v326, 7
      %v407 = vrot.slane %v327, 7
      %v408 = vsel %vm367, %v406, %v407
      %v409 = vrot.slane %v328, 7
      %v410 = vrot.slane %v329, 7
      %v411 = vsel %vm367, %v409, %v410
      %v412 = vrot.slane %v330, 7
      %v413 = vrot.slane %v331, 7
      %v414 = vsel %vm367, %v412, %v413
      %v415 = vrot.slane %v332, 7
      %v416 = vrot.slane %v333, 7
      %v417 = vsel %vm367, %v415, %v416
      %v468 = vsel %vm367, 0.0, %v368
      %v469 = vsel %vm367, 0.0, %v370
      %v470 = vsel %vm367, 0.0, %v373
      %v471 = vsel %vm367, 0.0, %v376
      %v472 = vsel %vm367, 0.0, %v379
      %v473 = vsel %vm367, 0.0, %v382
      %v474 = vsel %vm367, 0.0, %v385
      %v475 = vsel %vm367, 0.0, %v388
      %v476 = vsel %vm367, 0.0, %v391
      %v477 = vsel %vm367, 0.0, %v394
      %v478 = vsel %vm367, 0.0, %v397
      %v479 = vsel %vm367, 0.0, %v400
      %v480 = vsel %vm367, 0.0, %v403
      %v481 = vsel %vm367, 0.0, %v406
      %v482 = vsel %vm367, 0.0, %v409
      %v483 = vsel %vm367, 0.0, %v412
      %v484 = vsel %vm367, 0.0, %v415
      %v485 = vsel %vm367, %v368, 0.0
      %v486 = vsel %vm367, %v371, 0.0
      %v487 = vsel %vm367, %v374, 0.0
      %v488 = vsel %vm367, %v377, 0.0
      %v489 = vsel %vm367, %v380, 0.0
      %v490 = vsel %vm367, %v383, 0.0
      %v491 = vsel %vm367, %v386, 0.0
      %v492 = vsel %vm367, %v389, 0.0
      %v493 = vsel %vm367, %v392, 0.0
      %v494 = vsel %vm367, %v395, 0.0
      %v495 = vsel %vm367, %v398, 0.0
      %v496 = vsel %vm367, %v401, 0.0
      %v497 = vsel %vm367, %v404, 0.0
      %v498 = vsel %vm367, %v407, 0.0
      %v499 = vsel %vm367, %v410, 0.0
      %v500 = vsel %vm367, %v413, 0.0
      %v501 = vsel %vm367, %v416, 0.0
      %vm534 = vcmask 1046528
      %v535 = vrot.slane %v468, 1
      %v536 = vrot.slane %v369, 1
      %v537 = vsel %vm534, %v535, %v536
      %v538 = vrot.slane %v485, 1
      %v539 = vsel %vm534, %v536, %v538
      %v540 = vrot.slane %v469, 1
      %v541 = vrot.slane %v372, 1
      %v542 = vsel %vm534, %v540, %v541
      %v543 = vrot.slane %v486, 1
      %v544 = vsel %vm534, %v541, %v543
      %v545 = vrot.slane %v470, 1
      %v546 = vrot.slane %v375, 1
      %v547 = vsel %vm534, %v545, %v546
      %v548 = vrot.slane %v487, 1
      %v549 = vsel %vm534, %v546, %v548
      %v550 = vrot.slane %v471, 1
      %v551 = vrot.slane %v378, 1
      %v552 = vsel %vm534, %v550, %v551
      %v553 = vrot.slane %v488, 1
      %v554 = vsel %vm534, %v551, %v553
      %v555 = vrot.slane %v472, 1
      %v556 = vrot.slane %v381, 1
      %v557 = vsel %vm534, %v555, %v556
      %v558 = vrot.slane %v489, 1
      %v559 = vsel %vm534, %v556, %v558
      %v560 = vrot.slane %v473, 1
      %v561 = vrot.slane %v384, 1
      %v562 = vsel %vm534, %v560, %v561
      %v563 = vrot.slane %v490, 1
      %v564 = vsel %vm534, %v561, %v563
      %v565 = vrot.slane %v474, 1
      %v566 = vrot.slane %v387, 1
      %v567 = vsel %vm534, %v565, %v566
      %v568 = vrot.slane %v491, 1
      %v569 = vsel %vm534, %v566, %v568
      %v570 = vrot.slane %v475, 1
      %v571 = vrot.slane %v390, 1
      %v572 = vsel %vm534, %v570, %v571
      %v573 = vrot.slane %v492, 1
      %v574 = vsel %vm534, %v571, %v573
      %v575 = vrot.slane %v476, 1
      %v576 = vrot.slane %v393, 1
      %v577 = vsel %vm534, %v575, %v576
      %v578 = vrot.slane %v493, 1
      %v579 = vsel %vm534, %v576, %v578
      %v580 = vrot.slane %v477, 1
      %v581 = vrot.slane %v396, 1
      %v582 = vsel %vm534, %v580, %v581
      %v583 = vrot.slane %v494, 1
      %v584 = vsel %vm534, %v581, %v583
      %v585 = vrot.slane %v478, 1
      %v586 = vrot.slane %v399, 1
      %v587 = vsel %vm534, %v585, %v586
      %v588 = vrot.slane %v495, 1
      %v589 = vsel %vm534, %v586, %v588
      %v590 = vrot.slane %v479, 1
      %v591 = vrot.slane %v402, 1
      %v592 = vsel %vm534, %v590, %v591
      %v593 = vrot.slane %v496, 1
      %v594 = vsel %vm534, %v591, %v593
      %v595 = vrot.slane %v480, 1
      %v596 = vrot.slane %v405, 1
      %v597 = vsel %vm534, %v595, %v596
      %v598 = vrot.slane %v497, 1
      %v599 = vsel %vm534, %v596, %v598
      %v600 = vrot.slane %v481, 1
      %v601 = vrot.slane %v408, 1
      %v602 = vsel %vm534, %v600, %v601
      %v603 = vrot.slane %v498, 1
      %v604 = vsel %vm534, %v601, %v603
      %v605 = vrot.slane %v482, 1
      %v606 = vrot.slane %v411, 1
      %v607 = vsel %vm534, %v605, %v606
      %v608 = vrot.slane %v499, 1
      %v609 = vsel %vm534, %v606, %v608
      %v610 = vrot.slane %v483, 1
      %v611 = vrot.slane %v414, 1
      %v612 = vsel %vm534, %v610, %v611
      %v613 = vrot.slane %v500, 1
      %v614 = vsel %vm534, %v611, %v613
      %vm647 = vcmask 1045504
      %v648 = vrot.slane %v468, 2
      %v649 = vrot.slane %v369, 2
      %v650 = vsel %vm647, %v648, %v649
      %v651 = vrot.slane %v485, 2
      %v652 = vsel %vm647, %v649, %v651
      %v653 = vrot.slane %v469, 2
      %v654 = vrot.slane %v372, 2
      %v655 = vsel %vm647, %v653, %v654
      %v656 = vrot.slane %v486, 2
      %v657 = vsel %vm647, %v654, %v656
      %v658 = vrot.slane %v470, 2
      %v659 = vrot.slane %v375, 2
      %v660 = vsel %vm647, %v658, %v659
      %v661 = vrot.slane %v487, 2
      %v662 = vsel %vm647, %v659, %v661
      %v663 = vrot.slane %v471, 2
      %v664 = vrot.slane %v378, 2
      %v665 = vsel %vm647, %v663, %v664
      %v666 = vrot.slane %v488, 2
      %v667 = vsel %vm647, %v664, %v666
      %v668 = vrot.slane %v472, 2
      %v669 = vrot.slane %v381, 2
      %v670 = vsel %vm647, %v668, %v669
      %v671 = vrot.slane %v489, 2
      %v672 = vsel %vm647, %v669, %v671
      %v673 = vrot.slane %v473, 2
      %v674 = vrot.slane %v384, 2
      %v675 = vsel %vm647, %v673, %v674
      %v676 = vrot.slane %v490, 2
      %v677 = vsel %vm647, %v674, %v676
      %v678 = vrot.slane %v474, 2
      %v679 = vrot.slane %v387, 2
      %v680 = vsel %vm647, %v678, %v679
      %v681 = vrot.slane %v491, 2
      %v682 = vsel %vm647, %v679, %v681
      %v683 = vrot.slane %v475, 2
      %v684 = vrot.slane %v390, 2
      %v685 = vsel %vm647, %v683, %v684
      %v686 = vrot.slane %v492, 2
      %v687 = vsel %vm647, %v684, %v686
      %v688 = vrot.slane %v476, 2
      %v689 = vrot.slane %v393, 2
      %v690 = vsel %vm647, %v688, %v689
      %v691 = vrot.slane %v493, 2
      %v692 = vsel %vm647, %v689, %v691
      %v693 = vrot.slane %v477, 2
      %v694 = vrot.slane %v396, 2
      %v695 = vsel %vm647, %v693, %v694
      %v696 = vrot.slane %v494, 2
      %v697 = vsel %vm647, %v694, %v696
      %v698 = vrot.slane %v478, 2
      %v699 = vrot.slane %v399, 2
      %v700 = vsel %vm647, %v698, %v699
      %v701 = vrot.slane %v495, 2
      %v702 = vsel %vm647, %v699, %v701
      %v703 = vrot.slane %v479, 2
      %v704 = vrot.slane %v402, 2
      %v705 = vsel %vm647, %v703, %v704
      %v706 = vrot.slane %v496, 2
      %v707 = vsel %vm647, %v704, %v706
      %v708 = vrot.slane %v480, 2
      %v709 = vrot.slane %v405, 2
      %v710 = vsel %vm647, %v708, %v709
      %v711 = vrot.slane %v497, 2
      %v712 = vsel %vm647, %v709, %v711
      %v713 = vrot.slane %v481, 2
      %v714 = vrot.slane %v408, 2
      %v715 = vsel %vm647, %v713, %v714
      %v716 = vrot.slane %v498, 2
      %v717 = vsel %vm647, %v714, %v716
      %v718 = vrot.slane %v482, 2
      %v719 = vrot.slane %v411, 2
      %v720 = vsel %vm647, %v718, %v719
      %v721 = vrot.slane %v499, 2
      %v722 = vsel %vm647, %v719, %v721
      %v723 = vrot.slane %v483, 2
      %v724 = vrot.slane %v414, 2
      %v725 = vsel %vm647, %v723, %v724
      %v726 = vrot.slane %v500, 2
      %v727 = vsel %vm647, %v724, %v726
      %v762 = vrot.slane %v484, 1
      %v763 = vrot.slane %v417, 1
      %v764 = vsel %vm534, %v762, %v763
      %v765 = vrot.slane %v501, 1
      %v766 = vsel %vm534, %v763, %v765
      %v769 = vrot.slane %v484, 2
      %v770 = vrot.slane %v417, 2
      %v771 = vsel %vm647, %v769, %v770
      %v772 = vrot.slane %v501, 2
      %v773 = vsel %vm647, %v770, %v772
      %v776 = vld [vmem:[%s2] sm:$0xff]
      %v777 = vld [vmem:[%s2 + $0x8] sm:$0xff]
      %v778 = vld [vmem:[%s2 + $0x10] sm:$0xff]
      %v779 = vld [vmem:[%s2 + $0x18] sm:$0xff]
      %v780 = vld [vmem:[%s2 + $0x20] sm:$0xff]
      %v781 = vld [vmem:[%s2 + $0x28] sm:$0xff]
      %v782 = vld [vmem:[%s2 + $0x30] sm:$0xff]
      %v783 = vld [vmem:[%s2 + $0x38] sm:$0xff]
      %v784 = vld [vmem:[%s2 + $0x40] sm:$0xff]
      %v785 = vld [vmem:[%s2 + $0x48] sm:$0xff]
      %v786 = vld [vmem:[%s2 + $0x50] sm:$0xff]
      %v787 = vld [vmem:[%s2 + $0x58] sm:$0xff]
      %v788 = vld [vmem:[%s2 + $0x60] sm:$0xff]
      %v789 = vld [vmem:[%s2 + $0x68] sm:$0xff]
      %v790 = vld [vmem:[%s2 + $0x70] sm:$0xff]
      %v791 = vld [vmem:[%s2 + $0x78] sm:$0xff]
      %v792 = vld [vmem:[%s2 + $0x80] sm:$0xff]
      %v793 = vld [vmem:[%s2 + $0x88] sm:$0xff]
      %v794 = vld [vmem:[%s2 + $0x90] sm:$0xff]
      %v795 = vld [vmem:[%s2 + $0x98] sm:$0xff]
      %v796 = vld [vmem:[%s2 + $0xa0] sm:$0xff]
      %v797 = vld [vmem:[%s2 + $0xa8] sm:$0xff]
      %v798 = vld [vmem:[%s2 + $0xb0] sm:$0xff]
      %v799 = vld [vmem:[%s2 + $0xb8] sm:$0xff]
      %v800 = vld [vmem:[%s2 + $0xc0] sm:$0xff]
      %v801 = vld [vmem:[%s2 + $0xc8] sm:$0xff]
      %v802 = vld [vmem:[%s2 + $0xd0] sm:$0xff]
      %v803 = vld [vmem:[%s2 + $0xd8] sm:$0xff]
      %v804 = vld [vmem:[%s2 + $0xe0] sm:$0xff]
      %v805 = vld [vmem:[%s2 + $0xe8] sm:$0xff]
      %v806 = vld [vmem:[%s2 + $0xf0] sm:$0xff]
      %v807 = vld [vmem:[%s2 + $0xf8] sm:$0xff]
      %v808 = vld [vmem:[%s2 + $0x100] sm:$0xff]
      %v809 = vld [vmem:[%s2 + $0x108] sm:$0xff]
      %v810 = vld [vmem:[%s2 + $0x110] sm:$0xff]
      %v811 = vld [vmem:[%s2 + $0x118] sm:$0xff]
      %v812 = vld [vmem:[%s2 + $0x120] sm:$0xff]
      %v813 = vld [vmem:[%s2 + $0x128] sm:$0xff]
      %v814 = vld [vmem:[%s2 + $0x130] sm:$0xff]
      %v815 = vld [vmem:[%s2 + $0x138] sm:$0xff]
      %v816 = vld [vmem:[%s2 + $0x140] sm:$0xff]
      %v817 = vld [vmem:[%s2 + $0x148] sm:$0xff]
      %v818 = vld [vmem:[%s2 + $0x150] sm:$0xff]
      %v819 = vld [vmem:[%s2 + $0x158] sm:$0xff]
      %v820 = vld [vmem:[%s2 + $0x160] sm:$0xff]
      %v821 = vld [vmem:[%s2 + $0x168] sm:$0xff]
      %v822 = vld [vmem:[%s2 + $0x170] sm:$0xff]
      %v823 = vld [vmem:[%s2 + $0x178] sm:$0xff]
      %v824 = vld [vmem:[%s2 + $0x180] sm:$0xff]
      %v825 = vld [vmem:[%s2 + $0x188] sm:$0xff]
      %v826 = vld [vmem:[%s2 + $0x190] sm:$0xff]
      %v827 = vld [vmem:[%s2 + $0x198] sm:$0xff]
      %v828 = vld [vmem:[%s2 + $0x1a0] sm:$0xff]
      %v829 = vld [vmem:[%s2 + $0x1a8] sm:$0xff]
      %v830 = vld [vmem:[%s2 + $0x1b0] sm:$0xff]
      %v831 = vld [vmem:[%s2 + $0x1b8] sm:$0xff]
      %v832 = vld [vmem:[%s2 + $0x1c0] sm:$0xff]
      %v833 = vld [vmem:[%s2 + $0x1c8] sm:$0xff]
      %v834 = vld [vmem:[%s2 + $0x1d0] sm:$0xff]
      %v835 = vld [vmem:[%s2 + $0x1d8] sm:$0xff]
      %v836 = vld [vmem:[%s2 + $0x1e0] sm:$0xff]
      %v837 = vld [vmem:[%s2 + $0x1e8] sm:$0xff]
      %v838 = vld [vmem:[%s2 + $0x1f0] sm:$0xff]
      %v839 = vld [vmem:[%s2 + $0x1f8] sm:$0xff]
      %v840 = vld [vmem:[%s2 + $0x200] sm:$0xff]
      %v841 = vld [vmem:[%s2 + $0x208] sm:$0xff]
      %v842 = vld [vmem:[%s2 + $0x210] sm:$0xff]
      %v843 = vld [vmem:[%s2 + $0x218] sm:$0xff]
      %v844 = vld [vmem:[%s2 + $0x220] sm:$0xff]
      %v845 = vld [vmem:[%s2 + $0x228] sm:$0xff]
      %v846 = vld [vmem:[%s2 + $0x230] sm:$0xff]
      %v847 = vld [vmem:[%s2 + $0x238] sm:$0xff]
      %v848 = vld [vmem:[%s2 + $0x240] sm:$0xff]
      %v849 = vld [vmem:[%s2 + $0x248] sm:$0xff]
      %v850 = vld [vmem:[%s2 + $0x250] sm:$0xff]
      %v851 = vld [vmem:[%s2 + $0x258] sm:$0xff]
      %v852 = vld [vmem:[%s2 + $0x260] sm:$0xff]
      %v853 = vld [vmem:[%s2 + $0x268] sm:$0xff]
      %v854 = vld [vmem:[%s2 + $0x270] sm:$0xff]
      %v855 = vld [vmem:[%s2 + $0x278] sm:$0xff]
      %v856 = vld [vmem:[%s2 + $0x280] sm:$0xff]
      %v857 = vld [vmem:[%s2 + $0x288] sm:$0xff]
      %v858 = vld [vmem:[%s2 + $0x290] sm:$0xff]
      %v859 = vld [vmem:[%s2 + $0x298] sm:$0xff]
      %v860 = vld [vmem:[%s2 + $0x2a0] sm:$0xff]
      %v861 = vld [vmem:[%s2 + $0x2a8] sm:$0xff]
      %v862 = vld [vmem:[%s2 + $0x2b0] sm:$0xff]
      %v863 = vld [vmem:[%s2 + $0x2b8] sm:$0xff]
      %v864 = vld [vmem:[%s2 + $0x2c0] sm:$0xff]
      %v865 = vld [vmem:[%s2 + $0x2c8] sm:$0xff]
      %v866 = vld [vmem:[%s2 + $0x2d0] sm:$0xff]
      %v867 = vld [vmem:[%s2 + $0x2d8] sm:$0xff]
      %v868 = vld [vmem:[%s2 + $0x2e0] sm:$0xff]
      %v869 = vld [vmem:[%s2 + $0x2e8] sm:$0xff]
      %v870 = vld [vmem:[%s2 + $0x2f0] sm:$0xff]
      %v871 = vld [vmem:[%s2 + $0x2f8] sm:$0xff]
      %v872 = vld [vmem:[%s2 + $0x300] sm:$0xff]
      %v873 = vld [vmem:[%s2 + $0x308] sm:$0xff]
      %v874 = vld [vmem:[%s2 + $0x310] sm:$0xff]
      %v875 = vld [vmem:[%s2 + $0x318] sm:$0xff]
      %v876 = vld [vmem:[%s2 + $0x320] sm:$0xff]
      %v877 = vld [vmem:[%s2 + $0x328] sm:$0xff]
      %v878 = vld [vmem:[%s2 + $0x330] sm:$0xff]
      %v879 = vld [vmem:[%s2 + $0x338] sm:$0xff]
      %v880 = vld [vmem:[%s2 + $0x340] sm:$0xff]
      %v881 = vld [vmem:[%s2 + $0x348] sm:$0xff]
      %v882 = vld [vmem:[%s2 + $0x350] sm:$0xff]
      %v883 = vld [vmem:[%s2 + $0x358] sm:$0xff]
      %v884 = vld [vmem:[%s2 + $0x360] sm:$0xff]
      %v885 = vld [vmem:[%s2 + $0x368] sm:$0xff]
      %v886 = vld [vmem:[%s2 + $0x370] sm:$0xff]
      %v887 = vld [vmem:[%s2 + $0x378] sm:$0xff]
      %v888 = vld [vmem:[%s2 + $0x380] sm:$0xff]
      %v889 = vld [vmem:[%s2 + $0x388] sm:$0xff]
      %v890 = vld [vmem:[%s2 + $0x390] sm:$0xff]
      %v891 = vld [vmem:[%s2 + $0x398] sm:$0xff]
      %v892 = vld [vmem:[%s2 + $0x3a0] sm:$0xff]
      %v893 = vld [vmem:[%s2 + $0x3a8] sm:$0xff]
      %v894 = vld [vmem:[%s2 + $0x3b0] sm:$0xff]
      %v895 = vld [vmem:[%s2 + $0x3b8] sm:$0xff]
      %v896 = vld [vmem:[%s2 + $0x3c0] sm:$0xff]
      %v897 = vld [vmem:[%s2 + $0x3c8] sm:$0xff]
      %v898 = vld [vmem:[%s2 + $0x3d0] sm:$0xff]
      %v899 = vld [vmem:[%s2 + $0x3d8] sm:$0xff]
      %v900 = vld [vmem:[%s2 + $0x3e0] sm:$0xff]
      %v901 = vld [vmem:[%s2 + $0x3e8] sm:$0xff]
      %v902 = vld [vmem:[%s2 + $0x3f0] sm:$0xff]
      %v903 = vld [vmem:[%s2 + $0x3f8] sm:$0xff]
      %v904 = vld [vmem:[%s2 + $0x400] sm:$0xff]
      %v905 = vld [vmem:[%s2 + $0x408] sm:$0xff]
      %v906 = vld [vmem:[%s2 + $0x410] sm:$0xff]
      %v907 = vld [vmem:[%s2 + $0x418] sm:$0xff]
      %v908 = vld [vmem:[%s2 + $0x420] sm:$0xff]
      %v909 = vld [vmem:[%s2 + $0x428] sm:$0xff]
      %v910 = vld [vmem:[%s2 + $0x430] sm:$0xff]
      %v911 = vld [vmem:[%s2 + $0x438] sm:$0xff]
      %v912 = vld [vmem:[%s2 + $0x440] sm:$0xff]
      %v913 = vld [vmem:[%s2 + $0x448] sm:$0xff]
      %v914 = vld [vmem:[%s2 + $0x450] sm:$0xff]
      %v915 = vld [vmem:[%s2 + $0x458] sm:$0xff]
      %v916 = vld [vmem:[%s2 + $0x460] sm:$0xff]
      %v917 = vld [vmem:[%s2 + $0x468] sm:$0xff]
      %v918 = vld [vmem:[%s2 + $0x470] sm:$0xff]
      %v919 = vld [vmem:[%s2 + $0x478] sm:$0xff]
      %920 = vmatprep.subr.mxu0 0.0
      %921 = vmatpush1.msra.mxu0 %v791
      %922 = vmatprep.subr.mxu0 0.0
      %923 = vmatpush1.msra.mxu0 %v790
      %924 = vmatprep.subr.mxu0 0.0
      %925 = vmatpush1.msra.mxu0 %v789
      %926 = vmatprep.subr.mxu0 0.0
      %927 = vmatpush1.msra.mxu0 %v788
      %928 = vmatprep.subr.mxu0 0.0
      %929 = vmatpush1.msra.mxu0 %v787
      %930 = vmatprep.subr.mxu0 0.0
      %931 = vmatpush1.msra.mxu0 %v786
      %932 = vmatprep.subr.mxu0 0.0
      %933 = vmatpush1.msra.mxu0 %v785
      %934 = vmatprep.subr.mxu0 0.0
      %935 = vmatpush1.msra.mxu0 %v784
      %936 = vmatprep.subr.mxu0 0.0
      %937 = vmatpush1.msra.mxu0 %v783
      %938 = vmatprep.subr.mxu0 0.0
      %939 = vmatpush1.msra.mxu0 %v782
      %940 = vmatprep.subr.mxu0 0.0
      %941 = vmatpush1.msra.mxu0 %v781
      %942 = vmatprep.subr.mxu0 0.0
      %943 = vmatpush1.msra.mxu0 %v780
      %944 = vmatprep.subr.mxu0 0.0
      %945 = vmatpush1.msra.mxu0 %v779
      %946 = vmatprep.subr.mxu0 0.0
      %947 = vmatpush1.msra.mxu0 %v778
      %948 = vmatprep.subr.mxu0 0.0
      %949 = vmatpush1.msra.mxu0 %v777
      %950 = vmatprep.subr.mxu0 0.0
      %951 = vmatpush1.msra.mxu0 %v776
      %952 = vmatprep.subr.mxu0 0.0
      %953 = vmatpush2.msra.mxu0 %v807
      %954 = vmatprep.subr.mxu0 0.0
      %955 = vmatpush2.msra.mxu0 %v806
      %956 = vmatprep.subr.mxu0 0.0
      %957 = vmatpush2.msra.mxu0 %v805
      %958 = vmatprep.subr.mxu0 0.0
      %959 = vmatpush2.msra.mxu0 %v804
      %960 = vmatprep.subr.mxu0 0.0
      %961 = vmatpush2.msra.mxu0 %v803
      %962 = vmatprep.subr.mxu0 0.0
      %963 = vmatpush2.msra.mxu0 %v802
      %964 = vmatprep.subr.mxu0 0.0
      %965 = vmatpush2.msra.mxu0 %v801
      %966 = vmatprep.subr.mxu0 0.0
      %967 = vmatpush2.msra.mxu0 %v800
      %968 = vmatprep.subr.mxu0 0.0
      %969 = vmatpush2.msra.mxu0 %v799
      %970 = vmatprep.subr.mxu0 0.0
      %971 = vmatpush2.msra.mxu0 %v798
      %972 = vmatprep.subr.mxu0 0.0
      %973 = vmatpush2.msra.mxu0 %v797
      %974 = vmatprep.subr.mxu0 0.0
      %975 = vmatpush2.msra.mxu0 %v796
      %976 = vmatprep.subr.mxu0 0.0
      %977 = vmatpush2.msra.mxu0 %v795
      %978 = vmatprep.subr.mxu0 0.0
      %979 = vmatpush2.msra.mxu0 %v794
      %980 = vmatprep.subr.mxu0 0.0
      %981 = vmatpush2.msra.mxu0 %v793
      %982 = vmatprep.subr.mxu0 0.0
      %983 = vmatpush2.msra.mxu0 %v792
      %984 = vmatprep.mubr.f32.mxu0 %v537
      %985 = vmatmul.mubr.f32.gmra.mxu0 %v468
      %v986 = vpop.f32.mrf.mxu0
      %v987 = vadd.f32 0.0, %v986
      %v988 = vpop.f32.mrf.mxu0
      %989 = vmatprep.mubr.f32.mxu0 %v539
      %990 = vmatmul.mubr.f32.gmra.mxu0 %v369
      %v991 = vpop.f32.mrf.mxu0
      %v992 = vadd.f32 0.0, %v991
      %v993 = vpop.f32.mrf.mxu0
      %994 = vmatprep.mubr.f32.mxu0 %v542
      %995 = vmatmul.mubr.f32.gmra.mxu0 %v469
      %v996 = vpop.f32.mrf.mxu0
      %v997 = vadd.f32 0.0, %v996
      %v998 = vpop.f32.mrf.mxu0
      %999 = vmatprep.mubr.f32.mxu0 %v544
      %1000 = vmatmul.mubr.f32.gmra.mxu0 %v372
      %v1001 = vpop.f32.mrf.mxu0
      %v1002 = vadd.f32 0.0, %v1001
      %v1003 = vpop.f32.mrf.mxu0
      %1004 = vmatprep.mubr.f32.mxu0 %v547
      %1005 = vmatmul.mubr.f32.gmra.mxu0 %v470
      %v1006 = vpop.f32.mrf.mxu0
      %v1007 = vadd.f32 0.0, %v1006
      %v1008 = vpop.f32.mrf.mxu0
      %1009 = vmatprep.mubr.f32.mxu0 %v549
      %1010 = vmatmul.mubr.f32.gmra.mxu0 %v375
      %v1011 = vpop.f32.mrf.mxu0
      %v1012 = vadd.f32 0.0, %v1011
      %v1013 = vpop.f32.mrf.mxu0
      %1014 = vmatprep.mubr.f32.mxu0 %v552
      %1015 = vmatmul.mubr.f32.gmra.mxu0 %v471
      %v1016 = vpop.f32.mrf.mxu0
      %v1017 = vadd.f32 0.0, %v1016
      %v1018 = vpop.f32.mrf.mxu0
      %1019 = vmatprep.mubr.f32.mxu0 %v554
      %1020 = vmatmul.mubr.f32.gmra.mxu0 %v378
      %v1021 = vpop.f32.mrf.mxu0
      %v1022 = vadd.f32 0.0, %v1021
      %v1023 = vpop.f32.mrf.mxu0
      %1024 = vmatprep.mubr.f32.mxu0 %v557
      %1025 = vmatmul.mubr.f32.gmra.mxu0 %v472
      %v1026 = vpop.f32.mrf.mxu0
      %v1027 = vadd.f32 0.0, %v1026
      %v1028 = vpop.f32.mrf.mxu0
      %1029 = vmatprep.mubr.f32.mxu0 %v559
      %1030 = vmatmul.mubr.f32.gmra.mxu0 %v381
      %v1031 = vpop.f32.mrf.mxu0
      %v1032 = vadd.f32 0.0, %v1031
      %v1033 = vpop.f32.mrf.mxu0
      %1034 = vmatprep.mubr.f32.mxu0 %v562
      %1035 = vmatmul.mubr.f32.gmra.mxu0 %v473
      %v1036 = vpop.f32.mrf.mxu0
      %v1037 = vadd.f32 0.0, %v1036
      %v1038 = vpop.f32.mrf.mxu0
      %1039 = vmatprep.mubr.f32.mxu0 %v564
      %1040 = vmatmul.mubr.f32.gmra.mxu0 %v384
      %v1041 = vpop.f32.mrf.mxu0
      %v1042 = vadd.f32 0.0, %v1041
      %v1043 = vpop.f32.mrf.mxu0
      %1044 = vmatprep.mubr.f32.mxu0 %v567
      %1045 = vmatmul.mubr.f32.gmra.mxu0 %v474
      %v1046 = vpop.f32.mrf.mxu0
      %v1047 = vadd.f32 0.0, %v1046
      %v1048 = vpop.f32.mrf.mxu0
      %1049 = vmatprep.mubr.f32.mxu0 %v569
      %1050 = vmatmul.mubr.f32.gmra.mxu0 %v387
      %v1051 = vpop.f32.mrf.mxu0
      %v1052 = vadd.f32 0.0, %v1051
      %v1053 = vpop.f32.mrf.mxu0
      %1054 = vmatprep.mubr.f32.mxu0 %v572
      %1055 = vmatmul.mubr.f32.gmra.mxu0 %v475
      %v1056 = vpop.f32.mrf.mxu0
      %v1057 = vadd.f32 0.0, %v1056
      %v1058 = vpop.f32.mrf.mxu0
      %1059 = vmatprep.mubr.f32.mxu0 %v574
      %1060 = vmatmul.mubr.f32.gmra.mxu0 %v390
      %v1061 = vpop.f32.mrf.mxu0
      %v1062 = vadd.f32 0.0, %v1061
      %v1063 = vpop.f32.mrf.mxu0
      %1064 = vmatprep.mubr.f32.mxu0 %v577
      %1065 = vmatmul.mubr.f32.gmra.mxu0 %v476
      %v1066 = vpop.f32.mrf.mxu0
      %v1067 = vadd.f32 0.0, %v1066
      %v1068 = vpop.f32.mrf.mxu0
      %1069 = vmatprep.mubr.f32.mxu0 %v579
      %1070 = vmatmul.mubr.f32.gmra.mxu0 %v393
      %v1071 = vpop.f32.mrf.mxu0
      %v1072 = vadd.f32 0.0, %v1071
      %v1073 = vpop.f32.mrf.mxu0
      %1074 = vmatprep.mubr.f32.mxu0 %v582
      %1075 = vmatmul.mubr.f32.gmra.mxu0 %v477
      %v1076 = vpop.f32.mrf.mxu0
      %v1077 = vadd.f32 0.0, %v1076
      %v1078 = vpop.f32.mrf.mxu0
      %1079 = vmatprep.mubr.f32.mxu0 %v584
      %1080 = vmatmul.mubr.f32.gmra.mxu0 %v396
      %v1081 = vpop.f32.mrf.mxu0
      %v1082 = vadd.f32 0.0, %v1081
      %v1083 = vpop.f32.mrf.mxu0
      %1084 = vmatprep.mubr.f32.mxu0 %v587
      %1085 = vmatmul.mubr.f32.gmra.mxu0 %v478
      %v1086 = vpop.f32.mrf.mxu0
      %v1087 = vadd.f32 0.0, %v1086
      %v1088 = vpop.f32.mrf.mxu0
      %1089 = vmatprep.mubr.f32.mxu0 %v589
      %1090 = vmatmul.mubr.f32.gmra.mxu0 %v399
      %v1091 = vpop.f32.mrf.mxu0
      %v1092 = vadd.f32 0.0, %v1091
      %v1093 = vpop.f32.mrf.mxu0
      %1094 = vmatprep.mubr.f32.mxu0 %v592
      %1095 = vmatmul.mubr.f32.gmra.mxu0 %v479
      %v1096 = vpop.f32.mrf.mxu0
      %v1097 = vadd.f32 0.0, %v1096
      %v1098 = vpop.f32.mrf.mxu0
      %1099 = vmatprep.mubr.f32.mxu0 %v594
      %1100 = vmatmul.mubr.f32.gmra.mxu0 %v402
      %v1101 = vpop.f32.mrf.mxu0
      %v1102 = vadd.f32 0.0, %v1101
      %v1103 = vpop.f32.mrf.mxu0
      %1104 = vmatprep.mubr.f32.mxu0 %v597
      %1105 = vmatmul.mubr.f32.gmra.mxu0 %v480
      %v1106 = vpop.f32.mrf.mxu0
      %v1107 = vadd.f32 0.0, %v1106
      %v1108 = vpop.f32.mrf.mxu0
      %1109 = vmatprep.mubr.f32.mxu0 %v599
      %1110 = vmatmul.mubr.f32.gmra.mxu0 %v405
      %v1111 = vpop.f32.mrf.mxu0
      %v1112 = vadd.f32 0.0, %v1111
      %v1113 = vpop.f32.mrf.mxu0
      %1114 = vmatprep.mubr.f32.mxu0 %v602
      %1115 = vmatmul.mubr.f32.gmra.mxu0 %v481
      %v1116 = vpop.f32.mrf.mxu0
      %v1117 = vadd.f32 0.0, %v1116
      %v1118 = vpop.f32.mrf.mxu0
      %1119 = vmatprep.mubr.f32.mxu0 %v604
      %1120 = vmatmul.mubr.f32.gmra.mxu0 %v408
      %v1121 = vpop.f32.mrf.mxu0
      %v1122 = vadd.f32 0.0, %v1121
      %v1123 = vpop.f32.mrf.mxu0
      %1124 = vmatprep.mubr.f32.mxu0 %v607
      %1125 = vmatmul.mubr.f32.gmra.mxu0 %v482
      %v1126 = vpop.f32.mrf.mxu0
      %v1127 = vadd.f32 0.0, %v1126
      %v1128 = vpop.f32.mrf.mxu0
      %1129 = vmatprep.mubr.f32.mxu0 %v609
      %1130 = vmatmul.mubr.f32.gmra.mxu0 %v411
      %v1131 = vpop.f32.mrf.mxu0
      %v1132 = vadd.f32 0.0, %v1131
      %v1133 = vpop.f32.mrf.mxu0
      %1134 = vmatprep.mubr.f32.mxu0 %v612
      %1135 = vmatmul.mubr.f32.gmra.mxu0 %v483
      %v1136 = vpop.f32.mrf.mxu0
      %v1137 = vadd.f32 0.0, %v1136
      %v1138 = vpop.f32.mrf.mxu0
      %1139 = vmatprep.mubr.f32.mxu0 %v614
      %1140 = vmatmul.mubr.f32.gmra.mxu0 %v414
      %v1141 = vpop.f32.mrf.mxu0
      %v1142 = vadd.f32 0.0, %v1141
      %v1143 = vpop.f32.mrf.mxu0
      %1144 = vdwg.mxu0
      %1145 = vmatprep.subr.mxu0 0.0
      %1146 = vmatpush1.msra.mxu0 %v823
      %1147 = vmatprep.subr.mxu0 0.0
      %1148 = vmatpush1.msra.mxu0 %v822
      %1149 = vmatprep.subr.mxu0 0.0
      %1150 = vmatpush1.msra.mxu0 %v821
      %1151 = vmatprep.subr.mxu0 0.0
      %1152 = vmatpush1.msra.mxu0 %v820
      %1153 = vmatprep.subr.mxu0 0.0
      %1154 = vmatpush1.msra.mxu0 %v819
      %1155 = vmatprep.subr.mxu0 0.0
      %1156 = vmatpush1.msra.mxu0 %v818
      %1157 = vmatprep.subr.mxu0 0.0
      %1158 = vmatpush1.msra.mxu0 %v817
      %1159 = vmatprep.subr.mxu0 0.0
      %1160 = vmatpush1.msra.mxu0 %v816
      %1161 = vmatprep.subr.mxu0 0.0
      %1162 = vmatpush1.msra.mxu0 %v815
      %1163 = vmatprep.subr.mxu0 0.0
      %1164 = vmatpush1.msra.mxu0 %v814
      %1165 = vmatprep.subr.mxu0 0.0
      %1166 = vmatpush1.msra.mxu0 %v813
      %1167 = vmatprep.subr.mxu0 0.0
      %1168 = vmatpush1.msra.mxu0 %v812
      %1169 = vmatprep.subr.mxu0 0.0
      %1170 = vmatpush1.msra.mxu0 %v811
      %1171 = vmatprep.subr.mxu0 0.0
      %1172 = vmatpush1.msra.mxu0 %v810
      %1173 = vmatprep.subr.mxu0 0.0
      %1174 = vmatpush1.msra.mxu0 %v809
      %1175 = vmatprep.subr.mxu0 0.0
      %1176 = vmatpush1.msra.mxu0 %v808
      %1177 = vmatprep.subr.mxu0 0.0
      %1178 = vmatpush2.msra.mxu0 %v839
      %1179 = vmatprep.subr.mxu0 0.0
      %1180 = vmatpush2.msra.mxu0 %v838
      %1181 = vmatprep.subr.mxu0 0.0
      %1182 = vmatpush2.msra.mxu0 %v837
      %1183 = vmatprep.subr.mxu0 0.0
      %1184 = vmatpush2.msra.mxu0 %v836
      %1185 = vmatprep.subr.mxu0 0.0
      %1186 = vmatpush2.msra.mxu0 %v835
      %1187 = vmatprep.subr.mxu0 0.0
      %1188 = vmatpush2.msra.mxu0 %v834
      %1189 = vmatprep.subr.mxu0 0.0
      %1190 = vmatpush2.msra.mxu0 %v833
      %1191 = vmatprep.subr.mxu0 0.0
      %1192 = vmatpush2.msra.mxu0 %v832
      %1193 = vmatprep.subr.mxu0 0.0
      %1194 = vmatpush2.msra.mxu0 %v831
      %1195 = vmatprep.subr.mxu0 0.0
      %1196 = vmatpush2.msra.mxu0 %v830
      %1197 = vmatprep.subr.mxu0 0.0
      %1198 = vmatpush2.msra.mxu0 %v829
      %1199 = vmatprep.subr.mxu0 0.0
      %1200 = vmatpush2.msra.mxu0 %v828
      %1201 = vmatprep.subr.mxu0 0.0
      %1202 = vmatpush2.msra.mxu0 %v827
      %1203 = vmatprep.subr.mxu0 0.0
      %1204 = vmatpush2.msra.mxu0 %v826
      %1205 = vmatprep.subr.mxu0 0.0
      %1206 = vmatpush2.msra.mxu0 %v825
      %1207 = vmatprep.subr.mxu0 0.0
      %1208 = vmatpush2.msra.mxu0 %v824
      %1209 = vmatprep.mubr.f32.mxu0 %v469
      %1210 = vmatmul.mubr.f32.gmra.mxu0 %v650
      %v1211 = vpop.f32.mrf.mxu0
      %v1212 = vadd.f32 %v987, %v1211
      %v1213 = vpop.f32.mrf.mxu0
      %1214 = vmatprep.mubr.f32.mxu0 %v372
      %1215 = vmatmul.mubr.f32.gmra.mxu0 %v652
      %v1216 = vpop.f32.mrf.mxu0
      %v1217 = vadd.f32 %v992, %v1216
      %v1218 = vpop.f32.mrf.mxu0
      %1219 = vmatprep.mubr.f32.mxu0 %v470
      %1220 = vmatmul.mubr.f32.gmra.mxu0 %v655
      %v1221 = vpop.f32.mrf.mxu0
      %v1222 = vadd.f32 %v997, %v1221
      %v1223 = vpop.f32.mrf.mxu0
      %1224 = vmatprep.mubr.f32.mxu0 %v375
      %1225 = vmatmul.mubr.f32.gmra.mxu0 %v657
      %v1226 = vpop.f32.mrf.mxu0
      %v1227 = vadd.f32 %v1002, %v1226
      %v1228 = vpop.f32.mrf.mxu0
      %1229 = vmatprep.mubr.f32.mxu0 %v471
      %1230 = vmatmul.mubr.f32.gmra.mxu0 %v660
      %v1231 = vpop.f32.mrf.mxu0
      %v1232 = vadd.f32 %v1007, %v1231
      %v1233 = vpop.f32.mrf.mxu0
      %1234 = vmatprep.mubr.f32.mxu0 %v378
      %1235 = vmatmul.mubr.f32.gmra.mxu0 %v662
      %v1236 = vpop.f32.mrf.mxu0
      %v1237 = vadd.f32 %v1012, %v1236
      %v1238 = vpop.f32.mrf.mxu0
      %1239 = vmatprep.mubr.f32.mxu0 %v472
      %1240 = vmatmul.mubr.f32.gmra.mxu0 %v665
      %v1241 = vpop.f32.mrf.mxu0
      %v1242 = vadd.f32 %v1017, %v1241
      %v1243 = vpop.f32.mrf.mxu0
      %1244 = vmatprep.mubr.f32.mxu0 %v381
      %1245 = vmatmul.mubr.f32.gmra.mxu0 %v667
      %v1246 = vpop.f32.mrf.mxu0
      %v1247 = vadd.f32 %v1022, %v1246
      %v1248 = vpop.f32.mrf.mxu0
      %1249 = vmatprep.mubr.f32.mxu0 %v473
      %1250 = vmatmul.mubr.f32.gmra.mxu0 %v670
      %v1251 = vpop.f32.mrf.mxu0
      %v1252 = vadd.f32 %v1027, %v1251
      %v1253 = vpop.f32.mrf.mxu0
      %1254 = vmatprep.mubr.f32.mxu0 %v384
      %1255 = vmatmul.mubr.f32.gmra.mxu0 %v672
      %v1256 = vpop.f32.mrf.mxu0
      %v1257 = vadd.f32 %v1032, %v1256
      %v1258 = vpop.f32.mrf.mxu0
      %1259 = vmatprep.mubr.f32.mxu0 %v474
      %1260 = vmatmul.mubr.f32.gmra.mxu0 %v675
      %v1261 = vpop.f32.mrf.mxu0
      %v1262 = vadd.f32 %v1037, %v1261
      %v1263 = vpop.f32.mrf.mxu0
      %1264 = vmatprep.mubr.f32.mxu0 %v387
      %1265 = vmatmul.mubr.f32.gmra.mxu0 %v677
      %v1266 = vpop.f32.mrf.mxu0
      %v1267 = vadd.f32 %v1042, %v1266
      %v1268 = vpop.f32.mrf.mxu0
      %1269 = vmatprep.mubr.f32.mxu0 %v475
      %1270 = vmatmul.mubr.f32.gmra.mxu0 %v680
      %v1271 = vpop.f32.mrf.mxu0
      %v1272 = vadd.f32 %v1047, %v1271
      %v1273 = vpop.f32.mrf.mxu0
      %1274 = vmatprep.mubr.f32.mxu0 %v390
      %1275 = vmatmul.mubr.f32.gmra.mxu0 %v682
      %v1276 = vpop.f32.mrf.mxu0
      %v1277 = vadd.f32 %v1052, %v1276
      %v1278 = vpop.f32.mrf.mxu0
      %1279 = vmatprep.mubr.f32.mxu0 %v476
      %1280 = vmatmul.mubr.f32.gmra.mxu0 %v685
      %v1281 = vpop.f32.mrf.mxu0
      %v1282 = vadd.f32 %v1057, %v1281
      %v1283 = vpop.f32.mrf.mxu0
      %1284 = vmatprep.mubr.f32.mxu0 %v393
      %1285 = vmatmul.mubr.f32.gmra.mxu0 %v687
      %v1286 = vpop.f32.mrf.mxu0
      %v1287 = vadd.f32 %v1062, %v1286
      %v1288 = vpop.f32.mrf.mxu0
      %1289 = vmatprep.mubr.f32.mxu0 %v477
      %1290 = vmatmul.mubr.f32.gmra.mxu0 %v690
      %v1291 = vpop.f32.mrf.mxu0
      %v1292 = vadd.f32 %v1067, %v1291
      %v1293 = vpop.f32.mrf.mxu0
      %1294 = vmatprep.mubr.f32.mxu0 %v396
      %1295 = vmatmul.mubr.f32.gmra.mxu0 %v692
      %v1296 = vpop.f32.mrf.mxu0
      %v1297 = vadd.f32 %v1072, %v1296
      %v1298 = vpop.f32.mrf.mxu0
      %1299 = vmatprep.mubr.f32.mxu0 %v478
      %1300 = vmatmul.mubr.f32.gmra.mxu0 %v695
      %v1301 = vpop.f32.mrf.mxu0
      %v1302 = vadd.f32 %v1077, %v1301
      %v1303 = vpop.f32.mrf.mxu0
      %1304 = vmatprep.mubr.f32.mxu0 %v399
      %1305 = vmatmul.mubr.f32.gmra.mxu0 %v697
      %v1306 = vpop.f32.mrf.mxu0
      %v1307 = vadd.f32 %v1082, %v1306
      %v1308 = vpop.f32.mrf.mxu0
      %1309 = vmatprep.mubr.f32.mxu0 %v479
      %1310 = vmatmul.mubr.f32.gmra.mxu0 %v700
      %v1311 = vpop.f32.mrf.mxu0
      %v1312 = vadd.f32 %v1087, %v1311
      %v1313 = vpop.f32.mrf.mxu0
      %1314 = vmatprep.mubr.f32.mxu0 %v402
      %1315 = vmatmul.mubr.f32.gmra.mxu0 %v702
      %v1316 = vpop.f32.mrf.mxu0
      %v1317 = vadd.f32 %v1092, %v1316
      %v1318 = vpop.f32.mrf.mxu0
      %1319 = vmatprep.mubr.f32.mxu0 %v480
      %1320 = vmatmul.mubr.f32.gmra.mxu0 %v705
      %v1321 = vpop.f32.mrf.mxu0
      %v1322 = vadd.f32 %v1097, %v1321
      %v1323 = vpop.f32.mrf.mxu0
      %1324 = vmatprep.mubr.f32.mxu0 %v405
      %1325 = vmatmul.mubr.f32.gmra.mxu0 %v707
      %v1326 = vpop.f32.mrf.mxu0
      %v1327 = vadd.f32 %v1102, %v1326
      %v1328 = vpop.f32.mrf.mxu0
      %1329 = vmatprep.mubr.f32.mxu0 %v481
      %1330 = vmatmul.mubr.f32.gmra.mxu0 %v710
      %v1331 = vpop.f32.mrf.mxu0
      %v1332 = vadd.f32 %v1107, %v1331
      %v1333 = vpop.f32.mrf.mxu0
      %1334 = vmatprep.mubr.f32.mxu0 %v408
      %1335 = vmatmul.mubr.f32.gmra.mxu0 %v712
      %v1336 = vpop.f32.mrf.mxu0
      %v1337 = vadd.f32 %v1112, %v1336
      %v1338 = vpop.f32.mrf.mxu0
      %1339 = vmatprep.mubr.f32.mxu0 %v482
      %1340 = vmatmul.mubr.f32.gmra.mxu0 %v715
      %v1341 = vpop.f32.mrf.mxu0
      %v1342 = vadd.f32 %v1117, %v1341
      %v1343 = vpop.f32.mrf.mxu0
      %1344 = vmatprep.mubr.f32.mxu0 %v411
      %1345 = vmatmul.mubr.f32.gmra.mxu0 %v717
      %v1346 = vpop.f32.mrf.mxu0
      %v1347 = vadd.f32 %v1122, %v1346
      %v1348 = vpop.f32.mrf.mxu0
      %1349 = vmatprep.mubr.f32.mxu0 %v483
      %1350 = vmatmul.mubr.f32.gmra.mxu0 %v720
      %v1351 = vpop.f32.mrf.mxu0
      %v1352 = vadd.f32 %v1127, %v1351
      %v1353 = vpop.f32.mrf.mxu0
      %1354 = vmatprep.mubr.f32.mxu0 %v414
      %1355 = vmatmul.mubr.f32.gmra.mxu0 %v722
      %v1356 = vpop.f32.mrf.mxu0
      %v1357 = vadd.f32 %v1132, %v1356
      %v1358 = vpop.f32.mrf.mxu0
      %1359 = vmatprep.mubr.f32.mxu0 %v484
      %1360 = vmatmul.mubr.f32.gmra.mxu0 %v725
      %v1361 = vpop.f32.mrf.mxu0
      %v1362 = vadd.f32 %v1137, %v1361
      %v1363 = vpop.f32.mrf.mxu0
      %1364 = vmatprep.mubr.f32.mxu0 %v417
      %1365 = vmatmul.mubr.f32.gmra.mxu0 %v727
      %v1366 = vpop.f32.mrf.mxu0
      %v1367 = vadd.f32 %v1142, %v1366
      %v1368 = vpop.f32.mrf.mxu0
      %1369 = vdwg.mxu0
      %1370 = vmatprep.subr.mxu0 0.0
      %1371 = vmatpush1.msra.mxu0 %v855
      %1372 = vmatprep.subr.mxu0 0.0
      %1373 = vmatpush1.msra.mxu0 %v854
      %1374 = vmatprep.subr.mxu0 0.0
      %1375 = vmatpush1.msra.mxu0 %v853
      %1376 = vmatprep.subr.mxu0 0.0
      %1377 = vmatpush1.msra.mxu0 %v852
      %1378 = vmatprep.subr.mxu0 0.0
      %1379 = vmatpush1.msra.mxu0 %v851
      %1380 = vmatprep.subr.mxu0 0.0
      %1381 = vmatpush1.msra.mxu0 %v850
      %1382 = vmatprep.subr.mxu0 0.0
      %1383 = vmatpush1.msra.mxu0 %v849
      %1384 = vmatprep.subr.mxu0 0.0
      %1385 = vmatpush1.msra.mxu0 %v848
      %1386 = vmatprep.subr.mxu0 0.0
      %1387 = vmatpush1.msra.mxu0 %v847
      %1388 = vmatprep.subr.mxu0 0.0
      %1389 = vmatpush1.msra.mxu0 %v846
      %1390 = vmatprep.subr.mxu0 0.0
      %1391 = vmatpush1.msra.mxu0 %v845
      %1392 = vmatprep.subr.mxu0 0.0
      %1393 = vmatpush1.msra.mxu0 %v844
      %1394 = vmatprep.subr.mxu0 0.0
      %1395 = vmatpush1.msra.mxu0 %v843
      %1396 = vmatprep.subr.mxu0 0.0
      %1397 = vmatpush1.msra.mxu0 %v842
      %1398 = vmatprep.subr.mxu0 0.0
      %1399 = vmatpush1.msra.mxu0 %v841
      %1400 = vmatprep.subr.mxu0 0.0
      %1401 = vmatpush1.msra.mxu0 %v840
      %1402 = vmatprep.subr.mxu0 0.0
      %1403 = vmatpush2.msra.mxu0 %v871
      %1404 = vmatprep.subr.mxu0 0.0
      %1405 = vmatpush2.msra.mxu0 %v870
      %1406 = vmatprep.subr.mxu0 0.0
      %1407 = vmatpush2.msra.mxu0 %v869
      %1408 = vmatprep.subr.mxu0 0.0
      %1409 = vmatpush2.msra.mxu0 %v868
      %1410 = vmatprep.subr.mxu0 0.0
      %1411 = vmatpush2.msra.mxu0 %v867
      %1412 = vmatprep.subr.mxu0 0.0
      %1413 = vmatpush2.msra.mxu0 %v866
      %1414 = vmatprep.subr.mxu0 0.0
      %1415 = vmatpush2.msra.mxu0 %v865
      %1416 = vmatprep.subr.mxu0 0.0
      %1417 = vmatpush2.msra.mxu0 %v864
      %1418 = vmatprep.subr.mxu0 0.0
      %1419 = vmatpush2.msra.mxu0 %v863
      %1420 = vmatprep.subr.mxu0 0.0
      %1421 = vmatpush2.msra.mxu0 %v862
      %1422 = vmatprep.subr.mxu0 0.0
      %1423 = vmatpush2.msra.mxu0 %v861
      %1424 = vmatprep.subr.mxu0 0.0
      %1425 = vmatpush2.msra.mxu0 %v860
      %1426 = vmatprep.subr.mxu0 0.0
      %1427 = vmatpush2.msra.mxu0 %v859
      %1428 = vmatprep.subr.mxu0 0.0
      %1429 = vmatpush2.msra.mxu0 %v858
      %1430 = vmatprep.subr.mxu0 0.0
      %1431 = vmatpush2.msra.mxu0 %v857
      %1432 = vmatprep.subr.mxu0 0.0
      %1433 = vmatpush2.msra.mxu0 %v856
      %1434 = vmatprep.mubr.f32.mxu0 %v655
      %1435 = vmatmul.mubr.f32.gmra.mxu0 %v542
      %v1436 = vpop.f32.mrf.mxu0
      %v1437 = vadd.f32 %v1212, %v1436
      %v1438 = vpop.f32.mrf.mxu0
      %1439 = vmatprep.mubr.f32.mxu0 %v657
      %1440 = vmatmul.mubr.f32.gmra.mxu0 %v544
      %v1441 = vpop.f32.mrf.mxu0
      %v1442 = vadd.f32 %v1217, %v1441
      %v1443 = vpop.f32.mrf.mxu0
      %1444 = vmatprep.mubr.f32.mxu0 %v660
      %1445 = vmatmul.mubr.f32.gmra.mxu0 %v547
      %v1446 = vpop.f32.mrf.mxu0
      %v1447 = vadd.f32 %v1222, %v1446
      %v1448 = vpop.f32.mrf.mxu0
      %1449 = vmatprep.mubr.f32.mxu0 %v662
      %1450 = vmatmul.mubr.f32.gmra.mxu0 %v549
      %v1451 = vpop.f32.mrf.mxu0
      %v1452 = vadd.f32 %v1227, %v1451
      %v1453 = vpop.f32.mrf.mxu0
      %1454 = vmatprep.mubr.f32.mxu0 %v665
      %1455 = vmatmul.mubr.f32.gmra.mxu0 %v552
      %v1456 = vpop.f32.mrf.mxu0
      %v1457 = vadd.f32 %v1232, %v1456
      %v1458 = vpop.f32.mrf.mxu0
      %1459 = vmatprep.mubr.f32.mxu0 %v667
      %1460 = vmatmul.mubr.f32.gmra.mxu0 %v554
      %v1461 = vpop.f32.mrf.mxu0
      %v1462 = vadd.f32 %v1237, %v1461
      %v1463 = vpop.f32.mrf.mxu0
      %1464 = vmatprep.mubr.f32.mxu0 %v670
      %1465 = vmatmul.mubr.f32.gmra.mxu0 %v557
      %v1466 = vpop.f32.mrf.mxu0
      %v1467 = vadd.f32 %v1242, %v1466
      %v1468 = vpop.f32.mrf.mxu0
      %1469 = vmatprep.mubr.f32.mxu0 %v672
      %1470 = vmatmul.mubr.f32.gmra.mxu0 %v559
      %v1471 = vpop.f32.mrf.mxu0
      %v1472 = vadd.f32 %v1247, %v1471
      %v1473 = vpop.f32.mrf.mxu0
      %1474 = vmatprep.mubr.f32.mxu0 %v675
      %1475 = vmatmul.mubr.f32.gmra.mxu0 %v562
      %v1476 = vpop.f32.mrf.mxu0
      %v1477 = vadd.f32 %v1252, %v1476
      %v1478 = vpop.f32.mrf.mxu0
      %1479 = vmatprep.mubr.f32.mxu0 %v677
      %1480 = vmatmul.mubr.f32.gmra.mxu0 %v564
      %v1481 = vpop.f32.mrf.mxu0
      %v1482 = vadd.f32 %v1257, %v1481
      %v1483 = vpop.f32.mrf.mxu0
      %1484 = vmatprep.mubr.f32.mxu0 %v680
      %1485 = vmatmul.mubr.f32.gmra.mxu0 %v567
      %v1486 = vpop.f32.mrf.mxu0
      %v1487 = vadd.f32 %v1262, %v1486
      %v1488 = vpop.f32.mrf.mxu0
      %1489 = vmatprep.mubr.f32.mxu0 %v682
      %1490 = vmatmul.mubr.f32.gmra.mxu0 %v569
      %v1491 = vpop.f32.mrf.mxu0
      %v1492 = vadd.f32 %v1267, %v1491
      %v1493 = vpop.f32.mrf.mxu0
      %1494 = vmatprep.mubr.f32.mxu0 %v685
      %1495 = vmatmul.mubr.f32.gmra.mxu0 %v572
      %v1496 = vpop.f32.mrf.mxu0
      %v1497 = vadd.f32 %v1272, %v1496
      %v1498 = vpop.f32.mrf.mxu0
      %1499 = vmatprep.mubr.f32.mxu0 %v687
      %1500 = vmatmul.mubr.f32.gmra.mxu0 %v574
      %v1501 = vpop.f32.mrf.mxu0
      %v1502 = vadd.f32 %v1277, %v1501
      %v1503 = vpop.f32.mrf.mxu0
      %1504 = vmatprep.mubr.f32.mxu0 %v690
      %1505 = vmatmul.mubr.f32.gmra.mxu0 %v577
      %v1506 = vpop.f32.mrf.mxu0
      %v1507 = vadd.f32 %v1282, %v1506
      %v1508 = vpop.f32.mrf.mxu0
      %1509 = vmatprep.mubr.f32.mxu0 %v692
      %1510 = vmatmul.mubr.f32.gmra.mxu0 %v579
      %v1511 = vpop.f32.mrf.mxu0
      %v1512 = vadd.f32 %v1287, %v1511
      %v1513 = vpop.f32.mrf.mxu0
      %1514 = vmatprep.mubr.f32.mxu0 %v695
      %1515 = vmatmul.mubr.f32.gmra.mxu0 %v582
      %v1516 = vpop.f32.mrf.mxu0
      %v1517 = vadd.f32 %v1292, %v1516
      %v1518 = vpop.f32.mrf.mxu0
      %1519 = vmatprep.mubr.f32.mxu0 %v697
      %1520 = vmatmul.mubr.f32.gmra.mxu0 %v584
      %v1521 = vpop.f32.mrf.mxu0
      %v1522 = vadd.f32 %v1297, %v1521
      %v1523 = vpop.f32.mrf.mxu0
      %1524 = vmatprep.mubr.f32.mxu0 %v700
      %1525 = vmatmul.mubr.f32.gmra.mxu0 %v587
      %v1526 = vpop.f32.mrf.mxu0
      %v1527 = vadd.f32 %v1302, %v1526
      %v1528 = vpop.f32.mrf.mxu0
      %1529 = vmatprep.mubr.f32.mxu0 %v702
      %1530 = vmatmul.mubr.f32.gmra.mxu0 %v589
      %v1531 = vpop.f32.mrf.mxu0
      %v1532 = vadd.f32 %v1307, %v1531
      %v1533 = vpop.f32.mrf.mxu0
      %1534 = vmatprep.mubr.f32.mxu0 %v705
      %1535 = vmatmul.mubr.f32.gmra.mxu0 %v592
      %v1536 = vpop.f32.mrf.mxu0
      %v1537 = vadd.f32 %v1312, %v1536
      %v1538 = vpop.f32.mrf.mxu0
      %1539 = vmatprep.mubr.f32.mxu0 %v707
      %1540 = vmatmul.mubr.f32.gmra.mxu0 %v594
      %v1541 = vpop.f32.mrf.mxu0
      %v1542 = vadd.f32 %v1317, %v1541
      %v1543 = vpop.f32.mrf.mxu0
      %1544 = vmatprep.mubr.f32.mxu0 %v710
      %1545 = vmatmul.mubr.f32.gmra.mxu0 %v597
      %v1546 = vpop.f32.mrf.mxu0
      %v1547 = vadd.f32 %v1322, %v1546
      %v1548 = vpop.f32.mrf.mxu0
      %1549 = vmatprep.mubr.f32.mxu0 %v712
      %1550 = vmatmul.mubr.f32.gmra.mxu0 %v599
      %v1551 = vpop.f32.mrf.mxu0
      %v1552 = vadd.f32 %v1327, %v1551
      %v1553 = vpop.f32.mrf.mxu0
      %1554 = vmatprep.mubr.f32.mxu0 %v715
      %1555 = vmatmul.mubr.f32.gmra.mxu0 %v602
      %v1556 = vpop.f32.mrf.mxu0
      %v1557 = vadd.f32 %v1332, %v1556
      %v1558 = vpop.f32.mrf.mxu0
      %1559 = vmatprep.mubr.f32.mxu0 %v717
      %1560 = vmatmul.mubr.f32.gmra.mxu0 %v604
      %v1561 = vpop.f32.mrf.mxu0
      %v1562 = vadd.f32 %v1337, %v1561
      %v1563 = vpop.f32.mrf.mxu0
      %1564 = vmatprep.mubr.f32.mxu0 %v720
      %1565 = vmatmul.mubr.f32.gmra.mxu0 %v607
      %v1566 = vpop.f32.mrf.mxu0
      %v1567 = vadd.f32 %v1342, %v1566
      %v1568 = vpop.f32.mrf.mxu0
      %1569 = vmatprep.mubr.f32.mxu0 %v722
      %1570 = vmatmul.mubr.f32.gmra.mxu0 %v609
      %v1571 = vpop.f32.mrf.mxu0
      %v1572 = vadd.f32 %v1347, %v1571
      %v1573 = vpop.f32.mrf.mxu0
      %1574 = vmatprep.mubr.f32.mxu0 %v725
      %1575 = vmatmul.mubr.f32.gmra.mxu0 %v612
      %v1576 = vpop.f32.mrf.mxu0
      %v1577 = vadd.f32 %v1352, %v1576
      %v1578 = vpop.f32.mrf.mxu0
      %1579 = vmatprep.mubr.f32.mxu0 %v727
      %1580 = vmatmul.mubr.f32.gmra.mxu0 %v614
      %v1581 = vpop.f32.mrf.mxu0
      %v1582 = vadd.f32 %v1357, %v1581
      %v1583 = vpop.f32.mrf.mxu0
      %1584 = vmatprep.mubr.f32.mxu0 %v771
      %1585 = vmatmul.mubr.f32.gmra.mxu0 %v764
      %v1586 = vpop.f32.mrf.mxu0
      %v1587 = vadd.f32 %v1362, %v1586
      %v1588 = vpop.f32.mrf.mxu0
      %1589 = vmatprep.mubr.f32.mxu0 %v773
      %1590 = vmatmul.mubr.f32.gmra.mxu0 %v766
      %v1591 = vpop.f32.mrf.mxu0
      %v1592 = vadd.f32 %v1367, %v1591
      %v1593 = vpop.f32.mrf.mxu0
      %1594 = vdwg.mxu0
      %1595 = vmatprep.subr.mxu0 0.0
      %1596 = vmatpush1.msra.mxu0 %v887
      %1597 = vmatprep.subr.mxu0 0.0
      %1598 = vmatpush1.msra.mxu0 %v886
      %1599 = vmatprep.subr.mxu0 0.0
      %1600 = vmatpush1.msra.mxu0 %v885
      %1601 = vmatprep.subr.mxu0 0.0
      %1602 = vmatpush1.msra.mxu0 %v884
      %1603 = vmatprep.subr.mxu0 0.0
      %1604 = vmatpush1.msra.mxu0 %v883
      %1605 = vmatprep.subr.mxu0 0.0
      %1606 = vmatpush1.msra.mxu0 %v882
      %1607 = vmatprep.subr.mxu0 0.0
      %1608 = vmatpush1.msra.mxu0 %v881
      %1609 = vmatprep.subr.mxu0 0.0
      %1610 = vmatpush1.msra.mxu0 %v880
      %1611 = vmatprep.subr.mxu0 0.0
      %1612 = vmatpush1.msra.mxu0 %v879
      %1613 = vmatprep.subr.mxu0 0.0
      %1614 = vmatpush1.msra.mxu0 %v878
      %1615 = vmatprep.subr.mxu0 0.0
      %1616 = vmatpush1.msra.mxu0 %v877
      %1617 = vmatprep.subr.mxu0 0.0
      %1618 = vmatpush1.msra.mxu0 %v876
      %1619 = vmatprep.subr.mxu0 0.0
      %1620 = vmatpush1.msra.mxu0 %v875
      %1621 = vmatprep.subr.mxu0 0.0
      %1622 = vmatpush1.msra.mxu0 %v874
      %1623 = vmatprep.subr.mxu0 0.0
      %1624 = vmatpush1.msra.mxu0 %v873
      %1625 = vmatprep.subr.mxu0 0.0
      %1626 = vmatpush1.msra.mxu0 %v872
      %1627 = vmatprep.subr.mxu0 0.0
      %1628 = vmatpush2.msra.mxu0 %v903
      %1629 = vmatprep.subr.mxu0 0.0
      %1630 = vmatpush2.msra.mxu0 %v902
      %1631 = vmatprep.subr.mxu0 0.0
      %1632 = vmatpush2.msra.mxu0 %v901
      %1633 = vmatprep.subr.mxu0 0.0
      %1634 = vmatpush2.msra.mxu0 %v900
      %1635 = vmatprep.subr.mxu0 0.0
      %1636 = vmatpush2.msra.mxu0 %v899
      %1637 = vmatprep.subr.mxu0 0.0
      %1638 = vmatpush2.msra.mxu0 %v898
      %1639 = vmatprep.subr.mxu0 0.0
      %1640 = vmatpush2.msra.mxu0 %v897
      %1641 = vmatprep.subr.mxu0 0.0
      %1642 = vmatpush2.msra.mxu0 %v896
      %1643 = vmatprep.subr.mxu0 0.0
      %1644 = vmatpush2.msra.mxu0 %v895
      %1645 = vmatprep.subr.mxu0 0.0
      %1646 = vmatpush2.msra.mxu0 %v894
      %1647 = vmatprep.subr.mxu0 0.0
      %1648 = vmatpush2.msra.mxu0 %v893
      %1649 = vmatprep.subr.mxu0 0.0
      %1650 = vmatpush2.msra.mxu0 %v892
      %1651 = vmatprep.subr.mxu0 0.0
      %1652 = vmatpush2.msra.mxu0 %v891
      %1653 = vmatprep.subr.mxu0 0.0
      %1654 = vmatpush2.msra.mxu0 %v890
      %1655 = vmatprep.subr.mxu0 0.0
      %1656 = vmatpush2.msra.mxu0 %v889
      %1657 = vmatprep.subr.mxu0 0.0
      %1658 = vmatpush2.msra.mxu0 %v888
      %1659 = vmatprep.mubr.f32.mxu0 %v547
      %1660 = vmatmul.mubr.f32.gmra.mxu0 %v470
      %v1661 = vpop.f32.mrf.mxu0
      %v1662 = vadd.f32 %v1437, %v1661
      %v1663 = vpop.f32.mrf.mxu0
      %1664 = vmatprep.mubr.f32.mxu0 %v549
      %1665 = vmatmul.mubr.f32.gmra.mxu0 %v375
      %v1666 = vpop.f32.mrf.mxu0
      %v1667 = vadd.f32 %v1442, %v1666
      %v1668 = vpop.f32.mrf.mxu0
      %1669 = vmatprep.mubr.f32.mxu0 %v552
      %1670 = vmatmul.mubr.f32.gmra.mxu0 %v471
      %v1671 = vpop.f32.mrf.mxu0
      %v1672 = vadd.f32 %v1447, %v1671
      %v1673 = vpop.f32.mrf.mxu0
      %1674 = vmatprep.mubr.f32.mxu0 %v554
      %1675 = vmatmul.mubr.f32.gmra.mxu0 %v378
      %v1676 = vpop.f32.mrf.mxu0
      %v1677 = vadd.f32 %v1452, %v1676
      %v1678 = vpop.f32.mrf.mxu0
      %1679 = vmatprep.mubr.f32.mxu0 %v557
      %1680 = vmatmul.mubr.f32.gmra.mxu0 %v472
      %v1681 = vpop.f32.mrf.mxu0
      %v1682 = vadd.f32 %v1457, %v1681
      %v1683 = vpop.f32.mrf.mxu0
      %1684 = vmatprep.mubr.f32.mxu0 %v559
      %1685 = vmatmul.mubr.f32.gmra.mxu0 %v381
      %v1686 = vpop.f32.mrf.mxu0
      %v1687 = vadd.f32 %v1462, %v1686
      %v1688 = vpop.f32.mrf.mxu0
      %1689 = vmatprep.mubr.f32.mxu0 %v562
      %1690 = vmatmul.mubr.f32.gmra.mxu0 %v473
      %v1691 = vpop.f32.mrf.mxu0
      %v1692 = vadd.f32 %v1467, %v1691
      %v1693 = vpop.f32.mrf.mxu0
      %1694 = vmatprep.mubr.f32.mxu0 %v564
      %1695 = vmatmul.mubr.f32.gmra.mxu0 %v384
      %v1696 = vpop.f32.mrf.mxu0
      %v1697 = vadd.f32 %v1472, %v1696
      %v1698 = vpop.f32.mrf.mxu0
      %1699 = vmatprep.mubr.f32.mxu0 %v567
      %1700 = vmatmul.mubr.f32.gmra.mxu0 %v474
      %v1701 = vpop.f32.mrf.mxu0
      %v1702 = vadd.f32 %v1477, %v1701
      %v1703 = vpop.f32.mrf.mxu0
      %1704 = vmatprep.mubr.f32.mxu0 %v569
      %1705 = vmatmul.mubr.f32.gmra.mxu0 %v387
      %v1706 = vpop.f32.mrf.mxu0
      %v1707 = vadd.f32 %v1482, %v1706
      %v1708 = vpop.f32.mrf.mxu0
      %1709 = vmatprep.mubr.f32.mxu0 %v572
      %1710 = vmatmul.mubr.f32.gmra.mxu0 %v475
      %v1711 = vpop.f32.mrf.mxu0
      %v1712 = vadd.f32 %v1487, %v1711
      %v1713 = vpop.f32.mrf.mxu0
      %1714 = vmatprep.mubr.f32.mxu0 %v574
      %1715 = vmatmul.mubr.f32.gmra.mxu0 %v390
      %v1716 = vpop.f32.mrf.mxu0
      %v1717 = vadd.f32 %v1492, %v1716
      %v1718 = vpop.f32.mrf.mxu0
      %1719 = vmatprep.mubr.f32.mxu0 %v577
      %1720 = vmatmul.mubr.f32.gmra.mxu0 %v476
      %v1721 = vpop.f32.mrf.mxu0
      %v1722 = vadd.f32 %v1497, %v1721
      %v1723 = vpop.f32.mrf.mxu0
      %1724 = vmatprep.mubr.f32.mxu0 %v579
      %1725 = vmatmul.mubr.f32.gmra.mxu0 %v393
      %v1726 = vpop.f32.mrf.mxu0
      %v1727 = vadd.f32 %v1502, %v1726
      %v1728 = vpop.f32.mrf.mxu0
      %1729 = vmatprep.mubr.f32.mxu0 %v582
      %1730 = vmatmul.mubr.f32.gmra.mxu0 %v477
      %v1731 = vpop.f32.mrf.mxu0
      %v1732 = vadd.f32 %v1507, %v1731
      %v1733 = vpop.f32.mrf.mxu0
      %1734 = vmatprep.mubr.f32.mxu0 %v584
      %1735 = vmatmul.mubr.f32.gmra.mxu0 %v396
      %v1736 = vpop.f32.mrf.mxu0
      %v1737 = vadd.f32 %v1512, %v1736
      %v1738 = vpop.f32.mrf.mxu0
      %1739 = vmatprep.mubr.f32.mxu0 %v587
      %1740 = vmatmul.mubr.f32.gmra.mxu0 %v478
      %v1741 = vpop.f32.mrf.mxu0
      %v1742 = vadd.f32 %v1517, %v1741
      %v1743 = vpop.f32.mrf.mxu0
      %1744 = vmatprep.mubr.f32.mxu0 %v589
      %1745 = vmatmul.mubr.f32.gmra.mxu0 %v399
      %v1746 = vpop.f32.mrf.mxu0
      %v1747 = vadd.f32 %v1522, %v1746
      %v1748 = vpop.f32.mrf.mxu0
      %1749 = vmatprep.mubr.f32.mxu0 %v592
      %1750 = vmatmul.mubr.f32.gmra.mxu0 %v479
      %v1751 = vpop.f32.mrf.mxu0
      %v1752 = vadd.f32 %v1527, %v1751
      %v1753 = vpop.f32.mrf.mxu0
      %1754 = vmatprep.mubr.f32.mxu0 %v594
      %1755 = vmatmul.mubr.f32.gmra.mxu0 %v402
      %v1756 = vpop.f32.mrf.mxu0
      %v1757 = vadd.f32 %v1532, %v1756
      %v1758 = vpop.f32.mrf.mxu0
      %1759 = vmatprep.mubr.f32.mxu0 %v597
      %1760 = vmatmul.mubr.f32.gmra.mxu0 %v480
      %v1761 = vpop.f32.mrf.mxu0
      %v1762 = vadd.f32 %v1537, %v1761
      %v1763 = vpop.f32.mrf.mxu0
      %1764 = vmatprep.mubr.f32.mxu0 %v599
      %1765 = vmatmul.mubr.f32.gmra.mxu0 %v405
      %v1766 = vpop.f32.mrf.mxu0
      %v1767 = vadd.f32 %v1542, %v1766
      %v1768 = vpop.f32.mrf.mxu0
      %1769 = vmatprep.mubr.f32.mxu0 %v602
      %1770 = vmatmul.mubr.f32.gmra.mxu0 %v481
      %v1771 = vpop.f32.mrf.mxu0
      %v1772 = vadd.f32 %v1547, %v1771
      %v1773 = vpop.f32.mrf.mxu0
      %1774 = vmatprep.mubr.f32.mxu0 %v604
      %1775 = vmatmul.mubr.f32.gmra.mxu0 %v408
      %v1776 = vpop.f32.mrf.mxu0
      %v1777 = vadd.f32 %v1552, %v1776
      %v1778 = vpop.f32.mrf.mxu0
      %1779 = vmatprep.mubr.f32.mxu0 %v607
      %1780 = vmatmul.mubr.f32.gmra.mxu0 %v482
      %v1781 = vpop.f32.mrf.mxu0
      %v1782 = vadd.f32 %v1557, %v1781
      %v1783 = vpop.f32.mrf.mxu0
      %1784 = vmatprep.mubr.f32.mxu0 %v609
      %1785 = vmatmul.mubr.f32.gmra.mxu0 %v411
      %v1786 = vpop.f32.mrf.mxu0
      %v1787 = vadd.f32 %v1562, %v1786
      %v1788 = vpop.f32.mrf.mxu0
      %1789 = vmatprep.mubr.f32.mxu0 %v612
      %1790 = vmatmul.mubr.f32.gmra.mxu0 %v483
      %v1791 = vpop.f32.mrf.mxu0
      %v1792 = vadd.f32 %v1567, %v1791
      %v1793 = vpop.f32.mrf.mxu0
      %1794 = vmatprep.mubr.f32.mxu0 %v614
      %1795 = vmatmul.mubr.f32.gmra.mxu0 %v414
      %v1796 = vpop.f32.mrf.mxu0
      %v1797 = vadd.f32 %v1572, %v1796
      %v1798 = vpop.f32.mrf.mxu0
      %1799 = vmatprep.mubr.f32.mxu0 %v764
      %1800 = vmatmul.mubr.f32.gmra.mxu0 %v484
      %v1801 = vpop.f32.mrf.mxu0
      %v1802 = vadd.f32 %v1577, %v1801
      %v1803 = vpop.f32.mrf.mxu0
      %1804 = vmatprep.mubr.f32.mxu0 %v766
      %1805 = vmatmul.mubr.f32.gmra.mxu0 %v417
      %v1806 = vpop.f32.mrf.mxu0
      %v1807 = vadd.f32 %v1582, %v1806
      %v1808 = vpop.f32.mrf.mxu0
      %1809 = vmatprep.mubr.f32.mxu0 %v537
      %1810 = vmatmul.mubr.f32.gmra.mxu0 %v468
      %v1811 = vpop.f32.mrf.mxu0
      %v1812 = vadd.f32 %v1587, %v1811
      %v1813 = vpop.f32.mrf.mxu0
      %1814 = vmatprep.mubr.f32.mxu0 %v539
      %1815 = vmatmul.mubr.f32.gmra.mxu0 %v369
      %v1816 = vpop.f32.mrf.mxu0
      %v1817 = vadd.f32 %v1592, %v1816
      %v1818 = vpop.f32.mrf.mxu0
      %1819 = vdwg.mxu0
      %1820 = vmatprep.subr.mxu0 0.0
      %1821 = vmatpush1.msra.mxu0 %v919
      %1822 = vmatprep.subr.mxu0 0.0
      %1823 = vmatpush1.msra.mxu0 %v918
      %1824 = vmatprep.subr.mxu0 0.0
      %1825 = vmatpush1.msra.mxu0 %v917
      %1826 = vmatprep.subr.mxu0 0.0
      %1827 = vmatpush1.msra.mxu0 %v916
      %1828 = vmatprep.subr.mxu0 0.0
      %1829 = vmatpush1.msra.mxu0 %v915
      %1830 = vmatprep.subr.mxu0 0.0
      %1831 = vmatpush1.msra.mxu0 %v914
      %1832 = vmatprep.subr.mxu0 0.0
      %1833 = vmatpush1.msra.mxu0 %v913
      %1834 = vmatprep.subr.mxu0 0.0
      %1835 = vmatpush1.msra.mxu0 %v912
      %1836 = vmatprep.subr.mxu0 0.0
      %1837 = vmatpush1.msra.mxu0 %v911
      %1838 = vmatprep.subr.mxu0 0.0
      %1839 = vmatpush1.msra.mxu0 %v910
      %1840 = vmatprep.subr.mxu0 0.0
      %1841 = vmatpush1.msra.mxu0 %v909
      %1842 = vmatprep.subr.mxu0 0.0
      %1843 = vmatpush1.msra.mxu0 %v908
      %1844 = vmatprep.subr.mxu0 0.0
      %1845 = vmatpush1.msra.mxu0 %v907
      %1846 = vmatprep.subr.mxu0 0.0
      %1847 = vmatpush1.msra.mxu0 %v906
      %1848 = vmatprep.subr.mxu0 0.0
      %1849 = vmatpush1.msra.mxu0 %v905
      %1850 = vmatprep.subr.mxu0 0.0
      %1851 = vmatpush1.msra.mxu0 %v904
      %1852 = vmatprep.subr.mxu0 0.0
      %1853 = vmatpush2.msra.mxu0 0.0
      %1854 = vmatprep.subr.mxu0 0.0
      %1855 = vmatpush2.msra.mxu0 0.0
      %1856 = vmatprep.subr.mxu0 0.0
      %1857 = vmatpush2.msra.mxu0 0.0
      %1858 = vmatprep.subr.mxu0 0.0
      %1859 = vmatpush2.msra.mxu0 0.0
      %1860 = vmatprep.subr.mxu0 0.0
      %1861 = vmatpush2.msra.mxu0 0.0
      %1862 = vmatprep.subr.mxu0 0.0
      %1863 = vmatpush2.msra.mxu0 0.0
      %1864 = vmatprep.subr.mxu0 0.0
      %1865 = vmatpush2.msra.mxu0 0.0
      %1866 = vmatprep.subr.mxu0 0.0
      %1867 = vmatpush2.msra.mxu0 0.0
      %1868 = vmatprep.subr.mxu0 0.0
      %1869 = vmatpush2.msra.mxu0 0.0
      %1870 = vmatprep.subr.mxu0 0.0
      %1871 = vmatpush2.msra.mxu0 0.0
      %1872 = vmatprep.subr.mxu0 0.0
      %1873 = vmatpush2.msra.mxu0 0.0
      %1874 = vmatprep.subr.mxu0 0.0
      %1875 = vmatpush2.msra.mxu0 0.0
      %1876 = vmatprep.subr.mxu0 0.0
      %1877 = vmatpush2.msra.mxu0 0.0
      %1878 = vmatprep.subr.mxu0 0.0
      %1879 = vmatpush2.msra.mxu0 0.0
      %1880 = vmatprep.subr.mxu0 0.0
      %1881 = vmatpush2.msra.mxu0 0.0
      %1882 = vmatprep.subr.mxu0 0.0
      %1883 = vmatpush2.msra.mxu0 0.0
      %1884 = vmatprep.mubr.f32.mxu0 0.0
      %1885 = vmatmul.mubr.f32.gmra.mxu0 %v660
      %v1886 = vpop.f32.mrf.mxu0
      %v1887 = vadd.f32 %v1662, %v1886
      %v1888 = vpop.f32.mrf.mxu0
      %1889 = vmatprep.mubr.f32.mxu0 0.0
      %1890 = vmatmul.mubr.f32.gmra.mxu0 %v662
      %v1891 = vpop.f32.mrf.mxu0
      %v1892 = vadd.f32 %v1667, %v1891
      %v1893 = vpop.f32.mrf.mxu0
      %1894 = vmatprep.mubr.f32.mxu0 0.0
      %1895 = vmatmul.mubr.f32.gmra.mxu0 %v665
      %v1896 = vpop.f32.mrf.mxu0
      %v1897 = vadd.f32 %v1672, %v1896
      %v1898 = vpop.f32.mrf.mxu0
      %1899 = vmatprep.mubr.f32.mxu0 0.0
      %1900 = vmatmul.mubr.f32.gmra.mxu0 %v667
      %v1901 = vpop.f32.mrf.mxu0
      %v1902 = vadd.f32 %v1677, %v1901
      %v1903 = vpop.f32.mrf.mxu0
      %1904 = vmatprep.mubr.f32.mxu0 0.0
      %1905 = vmatmul.mubr.f32.gmra.mxu0 %v670
      %v1906 = vpop.f32.mrf.mxu0
      %v1907 = vadd.f32 %v1682, %v1906
      %v1908 = vpop.f32.mrf.mxu0
      %1909 = vmatprep.mubr.f32.mxu0 0.0
      %1910 = vmatmul.mubr.f32.gmra.mxu0 %v672
      %v1911 = vpop.f32.mrf.mxu0
      %v1912 = vadd.f32 %v1687, %v1911
      %v1913 = vpop.f32.mrf.mxu0
      %1914 = vmatprep.mubr.f32.mxu0 0.0
      %1915 = vmatmul.mubr.f32.gmra.mxu0 %v675
      %v1916 = vpop.f32.mrf.mxu0
      %v1917 = vadd.f32 %v1692, %v1916
      %v1918 = vpop.f32.mrf.mxu0
      %1919 = vmatprep.mubr.f32.mxu0 0.0
      %1920 = vmatmul.mubr.f32.gmra.mxu0 %v677
      %v1921 = vpop.f32.mrf.mxu0
      %v1922 = vadd.f32 %v1697, %v1921
      %v1923 = vpop.f32.mrf.mxu0
      %1924 = vmatprep.mubr.f32.mxu0 0.0
      %1925 = vmatmul.mubr.f32.gmra.mxu0 %v680
      %v1926 = vpop.f32.mrf.mxu0
      %v1927 = vadd.f32 %v1702, %v1926
      %v1928 = vpop.f32.mrf.mxu0
      %1929 = vmatprep.mubr.f32.mxu0 0.0
      %1930 = vmatmul.mubr.f32.gmra.mxu0 %v682
      %v1931 = vpop.f32.mrf.mxu0
      %v1932 = vadd.f32 %v1707, %v1931
      %v1933 = vpop.f32.mrf.mxu0
      %1934 = vmatprep.mubr.f32.mxu0 0.0
      %1935 = vmatmul.mubr.f32.gmra.mxu0 %v685
      %v1936 = vpop.f32.mrf.mxu0
      %v1937 = vadd.f32 %v1712, %v1936
      %v1938 = vpop.f32.mrf.mxu0
      %1939 = vmatprep.mubr.f32.mxu0 0.0
      %1940 = vmatmul.mubr.f32.gmra.mxu0 %v687
      %v1941 = vpop.f32.mrf.mxu0
      %v1942 = vadd.f32 %v1717, %v1941
      %v1943 = vpop.f32.mrf.mxu0
      %1944 = vmatprep.mubr.f32.mxu0 0.0
      %1945 = vmatmul.mubr.f32.gmra.mxu0 %v690
      %v1946 = vpop.f32.mrf.mxu0
      %v1947 = vadd.f32 %v1722, %v1946
      %v1948 = vpop.f32.mrf.mxu0
      %1949 = vmatprep.mubr.f32.mxu0 0.0
      %1950 = vmatmul.mubr.f32.gmra.mxu0 %v692
      %v1951 = vpop.f32.mrf.mxu0
      %v1952 = vadd.f32 %v1727, %v1951
      %v1953 = vpop.f32.mrf.mxu0
      %1954 = vmatprep.mubr.f32.mxu0 0.0
      %1955 = vmatmul.mubr.f32.gmra.mxu0 %v695
      %v1956 = vpop.f32.mrf.mxu0
      %v1957 = vadd.f32 %v1732, %v1956
      %v1958 = vpop.f32.mrf.mxu0
      %1959 = vmatprep.mubr.f32.mxu0 0.0
      %1960 = vmatmul.mubr.f32.gmra.mxu0 %v697
      %v1961 = vpop.f32.mrf.mxu0
      %v1962 = vadd.f32 %v1737, %v1961
      %v1963 = vpop.f32.mrf.mxu0
      %1964 = vmatprep.mubr.f32.mxu0 0.0
      %1965 = vmatmul.mubr.f32.gmra.mxu0 %v700
      %v1966 = vpop.f32.mrf.mxu0
      %v1967 = vadd.f32 %v1742, %v1966
      %v1968 = vpop.f32.mrf.mxu0
      %1969 = vmatprep.mubr.f32.mxu0 0.0
      %1970 = vmatmul.mubr.f32.gmra.mxu0 %v702
      %v1971 = vpop.f32.mrf.mxu0
      %v1972 = vadd.f32 %v1747, %v1971
      %v1973 = vpop.f32.mrf.mxu0
      %1974 = vmatprep.mubr.f32.mxu0 0.0
      %1975 = vmatmul.mubr.f32.gmra.mxu0 %v705
      %v1976 = vpop.f32.mrf.mxu0
      %v1977 = vadd.f32 %v1752, %v1976
      %v1978 = vpop.f32.mrf.mxu0
      %1979 = vmatprep.mubr.f32.mxu0 0.0
      %1980 = vmatmul.mubr.f32.gmra.mxu0 %v707
      %v1981 = vpop.f32.mrf.mxu0
      %v1982 = vadd.f32 %v1757, %v1981
      %v1983 = vpop.f32.mrf.mxu0
      %1984 = vmatprep.mubr.f32.mxu0 0.0
      %1985 = vmatmul.mubr.f32.gmra.mxu0 %v710
      %v1986 = vpop.f32.mrf.mxu0
      %v1987 = vadd.f32 %v1762, %v1986
      %v1988 = vpop.f32.mrf.mxu0
      %1989 = vmatprep.mubr.f32.mxu0 0.0
      %1990 = vmatmul.mubr.f32.gmra.mxu0 %v712
      %v1991 = vpop.f32.mrf.mxu0
      %v1992 = vadd.f32 %v1767, %v1991
      %v1993 = vpop.f32.mrf.mxu0
      %1994 = vmatprep.mubr.f32.mxu0 0.0
      %1995 = vmatmul.mubr.f32.gmra.mxu0 %v715
      %v1996 = vpop.f32.mrf.mxu0
      %v1997 = vadd.f32 %v1772, %v1996
      %v1998 = vpop.f32.mrf.mxu0
      %1999 = vmatprep.mubr.f32.mxu0 0.0
      %2000 = vmatmul.mubr.f32.gmra.mxu0 %v717
      %v2001 = vpop.f32.mrf.mxu0
      %v2002 = vadd.f32 %v1777, %v2001
      %v2003 = vpop.f32.mrf.mxu0
      %2004 = vmatprep.mubr.f32.mxu0 0.0
      %2005 = vmatmul.mubr.f32.gmra.mxu0 %v720
      %v2006 = vpop.f32.mrf.mxu0
      %v2007 = vadd.f32 %v1782, %v2006
      %v2008 = vpop.f32.mrf.mxu0
      %2009 = vmatprep.mubr.f32.mxu0 0.0
      %2010 = vmatmul.mubr.f32.gmra.mxu0 %v722
      %v2011 = vpop.f32.mrf.mxu0
      %v2012 = vadd.f32 %v1787, %v2011
      %v2013 = vpop.f32.mrf.mxu0
      %2014 = vmatprep.mubr.f32.mxu0 0.0
      %2015 = vmatmul.mubr.f32.gmra.mxu0 %v725
      %v2016 = vpop.f32.mrf.mxu0
      %v2017 = vadd.f32 %v1792, %v2016
      %v2018 = vpop.f32.mrf.mxu0
      %2019 = vmatprep.mubr.f32.mxu0 0.0
      %2020 = vmatmul.mubr.f32.gmra.mxu0 %v727
      %v2021 = vpop.f32.mrf.mxu0
      %v2022 = vadd.f32 %v1797, %v2021
      %v2023 = vpop.f32.mrf.mxu0
      %2024 = vmatprep.mubr.f32.mxu0 0.0
      %2025 = vmatmul.mubr.f32.gmra.mxu0 %v771
      %v2026 = vpop.f32.mrf.mxu0
      %v2027 = vadd.f32 %v1802, %v2026
      %v2028 = vpop.f32.mrf.mxu0
      %2029 = vmatprep.mubr.f32.mxu0 0.0
      %2030 = vmatmul.mubr.f32.gmra.mxu0 %v773
      %v2031 = vpop.f32.mrf.mxu0
      %v2032 = vadd.f32 %v1807, %v2031
      %v2033 = vpop.f32.mrf.mxu0
      %2034 = vmatprep.mubr.f32.mxu0 0.0
      %2035 = vmatmul.mubr.f32.gmra.mxu0 %v650
      %v2036 = vpop.f32.mrf.mxu0
      %v2037 = vadd.f32 %v1812, %v2036
      %v2038 = vpop.f32.mrf.mxu0
      %2039 = vmatprep.mubr.f32.mxu0 0.0
      %2040 = vmatmul.mubr.f32.gmra.mxu0 %v652
      %v2041 = vpop.f32.mrf.mxu0
      %v2042 = vadd.f32 %v1817, %v2041
      %v2043 = vpop.f32.mrf.mxu0
      %2044 = vdwg.mxu0
      %2045 = vst [vmem:[%s195] sm:$0xff] %v1887
      %2046 = vst [vmem:[%s195 + $0x8] sm:$0xff] %v1892
      %2047 = vst [vmem:[%s195 + $0x10] sm:$0xff] %v1897
      %2048 = vst [vmem:[%s195 + $0x18] sm:$0xff] %v1902
      %2049 = vst [vmem:[%s195 + $0x20] sm:$0xff] %v1907
      %2050 = vst [vmem:[%s195 + $0x28] sm:$0xff] %v1912
      %2051 = vst [vmem:[%s195 + $0x30] sm:$0xff] %v1917
      %2052 = vst [vmem:[%s195 + $0x38] sm:$0xff] %v1922
      %2053 = vst [vmem:[%s195 + $0x40] sm:$0xff] %v1927
      %2054 = vst [vmem:[%s195 + $0x48] sm:$0xff] %v1932
      %2055 = vst [vmem:[%s195 + $0x50] sm:$0xff] %v1937
      %2056 = vst [vmem:[%s195 + $0x58] sm:$0xff] %v1942
      %2057 = vst [vmem:[%s195 + $0x60] sm:$0xff] %v1947
      %2058 = vst [vmem:[%s195 + $0x68] sm:$0xff] %v1952
      %2059 = vst [vmem:[%s195 + $0x70] sm:$0xff] %v1957
      %2060 = vst [vmem:[%s195 + $0x78] sm:$0xff] %v1962
      %2061 = vst [vmem:[%s195 + $0x80] sm:$0xff] %v1967
      %2062 = vst [vmem:[%s195 + $0x88] sm:$0xff] %v1972
      %2063 = vst [vmem:[%s195 + $0x90] sm:$0xff] %v1977
      %2064 = vst [vmem:[%s195 + $0x98] sm:$0xff] %v1982
      %2065 = vst [vmem:[%s195 + $0xa0] sm:$0xff] %v1987
      %2066 = vst [vmem:[%s195 + $0xa8] sm:$0xff] %v1992
      %2067 = vst [vmem:[%s195 + $0xb0] sm:$0xff] %v1997
      %2068 = vst [vmem:[%s195 + $0xb8] sm:$0xff] %v2002
      %2069 = vst [vmem:[%s195 + $0xc0] sm:$0xff] %v2007
      %2070 = vst [vmem:[%s195 + $0xc8] sm:$0xff] %v2012
      %2071 = vst [vmem:[%s195 + $0xd0] sm:$0xff] %v2017
      %2072 = vst [vmem:[%s195 + $0xd8] sm:$0xff] %v2022
      %2073 = vst [vmem:[%s195 + $0xe0] sm:$0xff] %v2027
      %2074 = vst [vmem:[%s195 + $0xe8] sm:$0xff] %v2032
      %2075 = vst [vmem:[%s195 + $0xf0] sm:$0xff] %v2037
      %2076 = vst [vmem:[%s195 + $0xf8] sm:$0xff] %v2042
      %p2077 = scmp.eq.s32.totalorder %s16, 0
      // Predicated region
      $region33: #{unet_block_forward.4} parent=31 // pred_check
        %p2078 = pneg %p2077
      $region34: #{unet_block_forward.4} parent=31 // pred_check_branch
        %2080 = sbr.rel (%p2078) target = $region36
      $region35: #{unet_block_forward.4} parent=31 // pred_region
        %2081 = vst [vmem:[%s4] sm:$0x3] 0.0
      $region36: #{unet_block_forward.4} parent=31 // pred_fallthru
        _
      %v2082 = vld [vmem:[%s4] sm:$0x3]
      %v2083 = vadd.f32 %v1887, %v1892
      %v2084 = vadd.f32 %v2083, %v1897
      %v2085 = vadd.f32 %v2084, %v1902
      %v2086 = vadd.f32 %v2085, %v1907
      %v2087 = vadd.f32 %v2086, %v1912
      %v2088 = vadd.f32 %v2087, %v1917
      %v2089 = vadd.f32 %v2088, %v1922
      %v2090 = vadd.f32 %v2089, %v1927
      %v2091 = vadd.f32 %v2090, %v1932
      %v2092 = vadd.f32 %v2091, %v1937
      %v2093 = vadd.f32 %v2092, %v1942
      %v2094 = vadd.f32 %v2093, %v1947
      %v2095 = vadd.f32 %v2094, %v1952
      %v2096 = vadd.f32 %v2095, %v1957
      %v2097 = vadd.f32 %v2096, %v1962
      %v2098 = vadd.f32 %v2097, %v1967
      %v2099 = vadd.f32 %v2098, %v1972
      %v2100 = vadd.f32 %v2099, %v1977
      %v2101 = vadd.f32 %v2100, %v1982
      %v2102 = vadd.f32 %v2101, %v1987
      %v2103 = vadd.f32 %v2102, %v1992
      %v2104 = vadd.f32 %v2103, %v1997
      %v2105 = vadd.f32 %v2104, %v2002
      %v2106 = vadd.f32 %v2105, %v2007
      %v2107 = vadd.f32 %v2106, %v2012
      %v2108 = vadd.f32 %v2107, %v2017
      %v2109 = vadd.f32 %v2108, %v2022
      %v2110 = vadd.f32 %v2109, %v2027
      %v2111 = vadd.f32 %v2110, %v2032
      %v2112 = vadd.f32 %v2111, %v2037
      %v2113 = vadd.f32 %v2112, %v2042
      %v2114 = vrot.slane %v2113, 4
      %v2115 = vadd.f32 %v2113, %v2114
      %v2116 = vrot.slane %v2115, 2
      %v2117 = vadd.f32 %v2115, %v2116
      %v2118 = vrot.slane %v2117, 1
      %v2119 = vadd.f32 %v2117, %v2118
      %v2120 = vmul.f32 %v1887, %v1887
      %v2121 = vmul.f32 %v1892, %v1892
      %v2122 = vmul.f32 %v1897, %v1897
      %v2123 = vmul.f32 %v1902, %v1902
      %v2124 = vmul.f32 %v1907, %v1907
      %v2125 = vmul.f32 %v1912, %v1912
      %v2126 = vmul.f32 %v1917, %v1917
      %v2127 = vmul.f32 %v1922, %v1922
      %v2128 = vmul.f32 %v1927, %v1927
      %v2129 = vmul.f32 %v1932, %v1932
      %v2130 = vmul.f32 %v1937, %v1937
      %v2131 = vmul.f32 %v1942, %v1942
      %v2132 = vmul.f32 %v1947, %v1947
      %v2133 = vmul.f32 %v1952, %v1952
      %v2134 = vmul.f32 %v1957, %v1957
      %v2135 = vmul.f32 %v1962, %v1962
      %v2136 = vmul.f32 %v1967, %v1967
      %v2137 = vmul.f32 %v1972, %v1972
      %v2138 = vmul.f32 %v1977, %v1977
      %v2139 = vmul.f32 %v1982, %v1982
      %v2140 = vmul.f32 %v1987, %v1987
      %v2141 = vmul.f32 %v1992, %v1992
      %v2142 = vmul.f32 %v1997, %v1997
      %v2143 = vmul.f32 %v2002, %v2002
      %v2144 = vmul.f32 %v2007, %v2007
      %v2145 = vmul.f32 %v2012, %v2012
      %v2146 = vmul.f32 %v2017, %v2017
      %v2147 = vmul.f32 %v2022, %v2022
      %v2148 = vmul.f32 %v2027, %v2027
      %v2149 = vmul.f32 %v2032, %v2032
      %v2150 = vmul.f32 %v2037, %v2037
      %v2151 = vmul.f32 %v2042, %v2042
      %v2152 = vadd.f32 %v2120, %v2121
      %v2153 = vadd.f32 %v2152, %v2122
      %v2154 = vadd.f32 %v2153, %v2123
      %v2155 = vadd.f32 %v2154, %v2124
      %v2156 = vadd.f32 %v2155, %v2125
      %v2157 = vadd.f32 %v2156, %v2126
      %v2158 = vadd.f32 %v2157, %v2127
      %v2159 = vadd.f32 %v2158, %v2128
      %v2160 = vadd.f32 %v2159, %v2129
      %v2161 = vadd.f32 %v2160, %v2130
      %v2162 = vadd.f32 %v2161, %v2131
      %v2163 = vadd.f32 %v2162, %v2132
      %v2164 = vadd.f32 %v2163, %v2133
      %v2165 = vadd.f32 %v2164, %v2134
      %v2166 = vadd.f32 %v2165, %v2135
      %v2167 = vadd.f32 %v2166, %v2136
      %v2168 = vadd.f32 %v2167, %v2137
      %v2169 = vadd.f32 %v2168, %v2138
      %v2170 = vadd.f32 %v2169, %v2139
      %v2171 = vadd.f32 %v2170, %v2140
      %v2172 = vadd.f32 %v2171, %v2141
      %v2173 = vadd.f32 %v2172, %v2142
      %v2174 = vadd.f32 %v2173, %v2143
      %v2175 = vadd.f32 %v2174, %v2144
      %v2176 = vadd.f32 %v2175, %v2145
      %v2177 = vadd.f32 %v2176, %v2146
      %v2178 = vadd.f32 %v2177, %v2147
      %v2179 = vadd.f32 %v2178, %v2148
      %v2180 = vadd.f32 %v2179, %v2149
      %v2181 = vadd.f32 %v2180, %v2150
      %v2182 = vadd.f32 %v2181, %v2151
      %v2183 = vrot.slane %v2182, 4
      %v2184 = vadd.f32 %v2182, %v2183
      %v2185 = vrot.slane %v2184, 2
      %v2186 = vadd.f32 %v2184, %v2185
      %v2187 = vrot.slane %v2186, 1
      %v2188 = vadd.f32 %v2186, %v2187
      %v2189 = vsel %vm367, %v2119, %v2188
      %v2190 = vadd.f32 %v2082, %v2189
      %2191 = vst [vmem:[%s4] sm:$0x3] %v2190
      %p2192 = scmp.lt.s32.totalorder %s16, 1
      %s2193 = scalar_select %p2192, %s16, 1
      %s2194 = smul.addr %s2193, 32
      %s2195 = smul.addr %s2194, 8
      %s2196 = scalar_lea.vmem %s3, %s2195
      // Predicated region
      $region37: #{unet_block_forward.4} parent=31 // pred_check
        %p2197 = pneg %p102
      $region38: #{unet_block_forward.4} parent=31 // pred_check_branch
        %2199 = sbr.rel (%p2197) target = $region40
      $region39: #{unet_block_forward.4} parent=31 // pred_region
        _
      $region40: #{unet_block_forward.4} parent=31 // pred_fallthru
        _
      // Predicated region
      $region41: #{unet_block_forward.4} parent=31 // pred_check
        %p2200 = pneg %p123
      $region42: #{unet_block_forward.4} parent=31 // pred_check_branch
        %2202 = sbr.rel (%p2200) target = $region44
      $region43: #{unet_block_forward.4} parent=31 // pred_region
        _
      $region44: #{unet_block_forward.4} parent=31 // pred_fallthru
        _
      // Predicated region
      $region45: #{unet_block_forward.4} parent=31 // pred_check
        %p2203 = pneg %p123
      $region46: #{unet_block_forward.4} parent=31 // pred_check_branch
        %2205 = sbr.rel (%p2203) target = $region48
      $region47: #{unet_block_forward.4} parent=31 // pred_region
        _
      $region48: #{unet_block_forward.4} parent=31 // pred_fallthru
        _
    $region32: #{unet_block_forward.4} parent=5 // pred_fallthru
      _
    %p2206 = scmp.le.s32.totalorder 2, %s11
    // Predicated region
    $region49: #{unet_block_forward.4} parent=5 // pred_check
      %p2207 = pneg %p2206
    $region50: #{unet_block_forward.4} parent=5 // pred_check_branch
      %2209 = sbr.rel (%p2207) target = $region52
    $region51: #{unet_block_forward.4} parent=5 // pred_region
      %s2210 = ssub.s32 %s11, 2
      // Predicated region
      $region53: #{unet_block_forward.4} parent=51 // pred_check
        %p2211 = pneg %p108
      $region54: #{unet_block_forward.4} parent=51 // pred_check_branch
        %2213 = sbr.rel (%p2211) target = $region56
      $region55: #{unet_block_forward.4} parent=51 // pred_region
        %p2214 = scmp.lt.s32.totalorder %s17, 1
        %s2215 = scalar_select %p2214, %s17, 1
        %s2216 = smul.addr %s2215, 32
        %s2217 = smul.addr %s2216, 8
        %s2218 = scalar_lea.vmem %s3, %s2217
      $region56: #{unet_block_forward.4} parent=51 // pred_fallthru
        _
    $region52: #{unet_block_forward.4} parent=5 // pred_fallthru
      _
  $region6: #{unet_block_forward.4} parent=0 // loop_footer
    %s15 = sadd.s32 1, %s11
  $region7: #{unet_block_forward.4} parent=0 // loop_footer_branch
    %10 = sbr.rel target = $region3
  $region8: #{unet_block_forward.4} parent=0 // loop_exit
    _

// kernel: unet_block_forward.3
$region0: #{unet_block_forward.3}
  #allocation0 [shape = 'u32[]', space=smem, size = 0x4, offset = 0x4, fixed_abs, tag = 'smem constant byte address 0x4 - core index']
  #allocation1 [shape = 'u32[144,128]{1,0:T(1,128)}', space=vmem, size = 0x12000, scoped, tag = 'internal scratch']
  %s0 = inlined_call_operand.vmem [shape: f32[2,16,16,4], index: 0, kind: input, shape index: {}]
  %s1 = inlined_call_operand.vmem [shape: f32[36,128], index: 1, kind: input, shape index: {}]
  %s2 = inlined_call_operand.vmem [shape: f32[2,256,128], index: 2, kind: output, shape index: {0}]
  %s3 = inlined_call_operand.vmem [shape: f32[2,128], index: 3, kind: output, shape index: {1}]
  %4 = xla_tuple %s2, %s3
  %s5 = sld [smem:[#allocation0]]
  $region53: #{unet_block_forward.3} parent=0
    _
  %s7 = ssub.s32 1, %s5
  %s8 = scalar_select 0, %s7, %s5
  loop: start=0, step=1, limit=4
  $region2: #{unet_block_forward.3} parent=0 // loop_pre_header
    _
  $region3: #{unet_block_forward.3} parent=0 // loop_header
    %s10 = sphi 0, %s14
    %p11 = scmp.ge.s32.totalorder %s10, 4
    %s20 = sphi 0, %s22
    %s23 = sphi 0, %s20
    %s24 = sphi 0, %s23
    %s40 = sphi 0, %s24
    %s44 = sphi 0, %s44
    %s46 = sphi 0, %s44
    %s47 = sphi 0, %s46
    %s61 = sphi 0, %s47
    %s67 = sphi 0, %s69
    %s70 = sphi 0, %s67
    %s71 = sphi 0, %s70
    %s87 = sphi 0, %s71
    %s91 = sphi 0, %s91
    %s93 = sphi 0, %s91
    %s94 = sphi 0, %s93
    %s108 = sphi 0, %s94
  $region4: #{unet_block_forward.3} parent=0 // loop_header_branch
    %13 = sbr.rel (%p11) target = $region8
  $region5: #{unet_block_forward.3} parent=0 // loop_body
    %s15 = ssub.s32 %s10, 1
    %s16 = ssub.s32 %s10, 2
    %s17 = sadd.s32 %s10, 1
    %s18 = ssub.s32 %s10, %s17
    %p19 = scmp.eq.s32.totalorder %s18, 0
    %s21 = sadd.s32 %s20, 1
    %s22 = scalar_select %p19, %s20, %s21
    %p25 = pneg %p19
    %p26 = scmp.eq.s32.totalorder %s10, 1
    %p27 = por %p25, %p26
    %p28 = scmp.ne.s32.totalorder %s20, %s23
    %p29 = scmp.eq.s32.totalorder %s10, 0
    %p30 = por %p28, %p29
    %p31 = scmp.ne.s32.totalorder %s20, %s23
    %p32 = scmp.eq.s32.totalorder %s15, 1
    %p33 = por %p31, %p32
    %p34 = scmp.ne.s32.totalorder %s23, %s24
    %p35 = scmp.eq.s32.totalorder %s15, 0
    %p36 = por %p34, %p35
    %p37 = scmp.ne.s32.totalorder %s23, %s24
    %p38 = scmp.eq.s32.totalorder %s16, 1
    %p39 = por %p37, %p38
    %p41 = scmp.ne.s32.totalorder %s24, %s40
    %p42 = scmp.eq.s32.totalorder %s16, 0
    %p43 = por %p41, %p42
    %s45 = sadd.s32 %s44, 1
    %p48 = scmp.eq.s32.totalorder %s10, 1
    %p49 = scmp.ne.s32.totalorder %s44, %s46
    %p50 = scmp.eq.s32.totalorder %s10, 0
    %p51 = por %p49, %p50
    %p52 = scmp.ne.s32.totalorder %s44, %s46
    %p53 = scmp.eq.s32.totalorder %s15, 1
    %p54 = por %p52, %p53
    %p55 = scmp.ne.s32.totalorder %s46, %s47
    %p56 = scmp.eq.s32.totalorder %s15, 0
    %p57 = por %p55, %p56
    %p58 = scmp.ne.s32.totalorder %s46, %s47
    %p59 = scmp.eq.s32.totalorder %s16, 1
    %p60 = por %p58, %p59
    %p62 = scmp.ne.s32.totalorder %s47, %s61
    %p63 = scmp.eq.s32.totalorder %s16, 0
    %p64 = por %p62, %p63
    %s65 = ssub.s32 %s10, %s17
    %p66 = scmp.eq.s32.totalorder %s65, 0
    %s68 = sadd.s32 %s67, 1
    %s69 = scalar_select %p66, %s67, %s68
    %p72 = pneg %p66
    %p73 = scmp.eq.s32.totalorder %s10, 1
    %p74 = por %p72, %p73
    %p75 = scmp.ne.s32.totalorder %s67, %s70
    %p76 = scmp.eq.s32.totalorder %s10, 0
    %p77 = por %p75, %p76
    %p78 = scmp.ne.s32.totalorder %s67, %s70
    %p79 = scmp.eq.s32.totalorder %s15, 1
    %p80 = por %p78, %p79
    %p81 = scmp.ne.s32.totalorder %s70, %s71
    %p82 = scmp.eq.s32.totalorder %s15, 0
    %p83 = por %p81, %p82
    %p84 = scmp.ne.s32.totalorder %s70, %s71
    %p85 = scmp.eq.s32.totalorder %s16, 1
    %p86 = por %p84, %p85
    %p88 = scmp.ne.s32.totalorder %s71, %s87
    %p89 = scmp.eq.s32.totalorder %s16, 0
    %p90 = por %p88, %p89
    %s92 = sadd.s32 %s91, 1
    %p95 = scmp.eq.s32.totalorder %s10, 1
    %p96 = scmp.ne.s32.totalorder %s91, %s93
    %p97 = scmp.eq.s32.totalorder %s10, 0
    %p98 = por %p96, %p97
    %p99 = scmp.ne.s32.totalorder %s91, %s93
    %p100 = scmp.eq.s32.totalorder %s15, 1
    %p101 = por %p99, %p100
    %p102 = scmp.ne.s32.totalorder %s93, %s94
    %p103 = scmp.eq.s32.totalorder %s15, 0
    %p104 = por %p102, %p103
    %p105 = scmp.ne.s32.totalorder %s93, %s94
    %p106 = scmp.eq.s32.totalorder %s16, 1
    %p107 = por %p105, %p106
    %p109 = scmp.ne.s32.totalorder %s94, %s108
    %p110 = scmp.eq.s32.totalorder %s16, 0
    %p111 = por %p109, %p110
    %p112 = scmp.le.s32.totalorder 1, %s10
    %p113 = scmp.lt.s32.totalorder %s10, 3
    %p114 = pnand %p112, %p113
    %p115 = pneg %p114
    // Predicated region
    $region9: #{unet_block_forward.3} parent=5 // pred_check
      _
    $region10: #{unet_block_forward.3} parent=5 // pred_check_branch
      %117 = sbr.rel (%p114) target = $region12
    $region11: #{unet_block_forward.3} parent=5 // pred_region
      %s118 = ssub.s32 %s10, 1
      // Predicated region
      $region13: #{unet_block_forward.3} parent=11 // pred_check
        %p119 = pneg %p57
      $region14: #{unet_block_forward.3} parent=11 // pred_check_branch
        %121 = sbr.rel (%p119) target = $region16
      $region15: #{unet_block_forward.3} parent=11 // pred_region
        _
      $region16: #{unet_block_forward.3} parent=11 // pred_fallthru
        _
    $region12: #{unet_block_forward.3} parent=5 // pred_fallthru
      _
    %p122 = scmp.lt.s32.totalorder %s10, 2
    // Predicated region
    $region17: #{unet_block_forward.3} parent=5 // pred_check
      %p123 = pneg %p122
    $region18: #{unet_block_forward.3} parent=5 // pred_check_branch
      %125 = sbr.rel (%p123) target = $region20
    $region19: #{unet_block_forward.3} parent=5 // pred_region
      // Predicated region
      $region21: #{unet_block_forward.3} parent=19 // pred_check
        %p126 = pneg %p30
      $region22: #{unet_block_forward.3} parent=19 // pred_check_branch
        %128 = sbr.rel (%p126) target = $region24
      $region23: #{unet_block_forward.3} parent=19 // pred_region
        %p129 = scmp.lt.s32.totalorder %s10, 1
        %s130 = scalar_select %p129, %s10, 1
        %s131 = smul.addr %s130, 32
        %s132 = smul.addr %s131, 8
        %s133 = scalar_lea.vmem %s0, %s132
      $region24: #{unet_block_forward.3} parent=19 // pred_fallthru
        _
    $region20: #{unet_block_forward.3} parent=5 // pred_fallthru
      _
    %p134 = scmp.le.s32.totalorder 1, %s10
    %p135 = scmp.lt.s32.totalorder %s10, 3
    %p136 = pnand %p134, %p135
    %p137 = pneg %p136
    // Predicated region
    $region25: #{unet_block_forward.3} parent=5 // pred_check
      _
    $region26: #{unet_block_forward.3} parent=5 // pred_check_branch
      %139 = sbr.rel (%p136) target = $region28
    $region27: #{unet_block_forward.3} parent=5 // pred_region
      %s140 = ssub.s32 %s10, 1
      %p141 = scmp.lt.s32.totalorder %s15, 1
      %s142 = scalar_select %p141, %s15, 1
      %s143 = smul.addr %s142, 32
      %s144 = smul.addr %s143, 8
      %s145 = scalar_lea.vmem %s0, %s144
      %p146 = pneg %p36
      %p147 = pneg %p33
      %p148 = pneg %p57
      %p149 = pneg %p54
      %p150 = pneg %p83
      %p151 = pneg %p80
      %p152 = scmp.lt.s32.totalorder %s15, 1
      %s153 = scalar_select %p152, %s15, 1
      %s154 = smul.addr %s153, 32
      %s155 = smul.addr %s154, 8
      %s156 = scalar_lea.vmem %s2, %s155
      %p157 = pneg %p104
      %p158 = pneg %p101
      %p159 = scmp.lt.s32.totalorder %s15, 1
      %s160 = scalar_select %p159, %s15, 1
      %s161 = smul.addr %s160, 32
      %s162 = smul.addr %s161, 8
      %s163 = scalar_lea.vmem %s0, %s162
      %p164 = scmp.lt.s32.totalorder %s15, 1
      %s165 = scalar_select %p164, %s15, 1
      %s166 = smul.addr %s165, 32
      %s167 = smul.addr %s166, 8
      %s168 = scalar_lea.vmem %s2, %s167
      %v169 = vld [vmem:[%s163] sm:$0xff]
      %v170 = vld [vmem:[%s163 + $0x8] sm:$0xff]
      %v171 = vld [vmem:[%s163 + $0x10] sm:$0xff]
      %v172 = vld [vmem:[%s163 + $0x18] sm:$0xff]
      %v173 = vld [vmem:[%s163 + $0x20] sm:$0xff]
      %v174 = vld [vmem:[%s163 + $0x28] sm:$0xff]
      %v175 = vld [vmem:[%s163 + $0x30] sm:$0xff]
      %v176 = vld [vmem:[%s163 + $0x38] sm:$0xff]
      %v177 = vld [vmem:[%s163 + $0x40] sm:$0xff]
      %v178 = vld [vmem:[%s163 + $0x48] sm:$0xff]
      %v179 = vld [vmem:[%s163 + $0x50] sm:$0xff]
      %v180 = vld [vmem:[%s163 + $0x58] sm:$0xff]
      %v181 = vld [vmem:[%s163 + $0x60] sm:$0xff]
      %v182 = vld [vmem:[%s163 + $0x68] sm:$0xff]
      %v183 = vld [vmem:[%s163 + $0x70] sm:$0xff]
      %v184 = vld [vmem:[%s163 + $0x78] sm:$0xff]
      %v185 = vld [vmem:[%s163 + $0x80] sm:$0xff]
      %v186 = vld [vmem:[%s163 + $0x88] sm:$0xff]
      %v187 = vld [vmem:[%s163 + $0x90] sm:$0xff]
      %v188 = vld [vmem:[%s163 + $0x98] sm:$0xff]
      %v189 = vld [vmem:[%s163 + $0xa0] sm:$0xff]
      %v190 = vld [vmem:[%s163 + $0xa8] sm:$0xff]
      %v191 = vld [vmem:[%s163 + $0xb0] sm:$0xff]
      %v192 = vld [vmem:[%s163 + $0xb8] sm:$0xff]
      %v193 = vld [vmem:[%s163 + $0xc0] sm:$0xff]
      %v194 = vld [vmem:[%s163 + $0xc8] sm:$0xff]
      %v195 = vld [vmem:[%s163 + $0xd0] sm:$0xff]
      %v196 = vld [vmem:[%s163 + $0xd8] sm:$0xff]
      %v197 = vld [vmem:[%s163 + $0xe0] sm:$0xff]
      %v198 = vld [vmem:[%s163 + $0xe8] sm:$0xff]
      %v199 = vld [vmem:[%s163 + $0xf0] sm:$0xff]
      %v200 = vld [vmem:[%s163 + $0xf8] sm:$0xff]
      %vm234 = vcmask 1040384
      %v235 = vrot.slane 0.0, 7
      %v236 = vsel %vm234, %v235, %v235
      %v237 = vrot.slane %v169, 7
      %v238 = vrot.slane %v170, 7
      %v239 = vsel %vm234, %v237, %v238
      %v240 = vrot.slane %v171, 7
      %v241 = vrot.slane %v172, 7
      %v242 = vsel %vm234, %v240, %v241
      %v243 = vrot.slane %v173, 7
      %v244 = vrot.slane %v174, 7
      %v245 = vsel %vm234, %v243, %v244
      %v246 = vrot.slane %v175, 7
      %v247 = vrot.slane %v176, 7
      %v248 = vsel %vm234, %v246, %v247
      %v249 = vrot.slane %v177, 7
      %v250 = vrot.slane %v178, 7
      %v251 = vsel %vm234, %v249, %v250
      %v252 = vrot.slane %v179, 7
      %v253 = vrot.slane %v180, 7
      %v254 = vsel %vm234, %v252, %v253
      %v255 = vrot.slane %v181, 7
      %v256 = vrot.slane %v182, 7
      %v257 = vsel %vm234, %v255, %v256
      %v258 = vrot.slane %v183, 7
      %v259 = vrot.slane %v184, 7
      %v260 = vsel %vm234, %v258, %v259
      %v261 = vrot.slane %v185, 7
      %v262 = vrot.slane %v186, 7
      %v263 = vsel %vm234, %v261, %v262
      %v264 = vrot.slane %v187, 7
      %v265 = vrot.slane %v188, 7
      %v266 = vsel %vm234, %v264, %v265
      %v267 = vrot.slane %v189, 7
      %v268 = vrot.slane %v190, 7
      %v269 = vsel %vm234, %v267, %v268
      %v270 = vrot.slane %v191, 7
      %v271 = vrot.slane %v192, 7
      %v272 = vsel %vm234, %v270, %v271
      %v273 = vrot.slane %v193, 7
      %v274 = vrot.slane %v194, 7
      %v275 = vsel %vm234, %v273, %v274
      %v276 = vrot.slane %v195, 7
      %v277 = vrot.slane %v196, 7
      %v278 = vsel %vm234, %v276, %v277
      %v279 = vrot.slane %v197, 7
      %v280 = vrot.slane %v198, 7
      %v281 = vsel %vm234, %v279, %v280
      %v282 = vrot.slane %v199, 7
      %v283 = vrot.slane %v200, 7
      %v284 = vsel %vm234, %v282, %v283
      %v334 = vsel %vm234, 0.0, %v235
      %v335 = vsel %vm234, 0.0, %v237
      %v336 = vsel %vm234, 0.0, %v240
      %v337 = vsel %vm234, 0.0, %v243
      %v338 = vsel %vm234, 0.0, %v246
      %v339 = vsel %vm234, 0.0, %v249
      %v340 = vsel %vm234, 0.0, %v252
      %v341 = vsel %vm234, 0.0, %v255
      %v342 = vsel %vm234, 0.0, %v258
      %v343 = vsel %vm234, 0.0, %v261
      %v344 = vsel %vm234, 0.0, %v264
      %v345 = vsel %vm234, 0.0, %v267
      %v346 = vsel %vm234, 0.0, %v270
      %v347 = vsel %vm234, 0.0, %v273
      %v348 = vsel %vm234, 0.0, %v276
      %v349 = vsel %vm234, 0.0, %v279
      %v350 = vsel %vm234, 0.0, %v282
      %v351 = vsel %vm234, %v235, 0.0
      %v352 = vsel %vm234, %v238, 0.0
      %v353 = vsel %vm234, %v241, 0.0
      %v354 = vsel %vm234, %v244, 0.0
      %v355 = vsel %vm234, %v247, 0.0
      %v356 = vsel %vm234, %v250, 0.0
      %v357 = vsel %vm234, %v253, 0.0
      %v358 = vsel %vm234, %v256, 0.0
      %v359 = vsel %vm234, %v259, 0.0
      %v360 = vsel %vm234, %v262, 0.0
      %v361 = vsel %vm234, %v265, 0.0
      %v362 = vsel %vm234, %v268, 0.0
      %v363 = vsel %vm234, %v271, 0.0
      %v364 = vsel %vm234, %v274, 0.0
      %v365 = vsel %vm234, %v277, 0.0
      %v366 = vsel %vm234, %v280, 0.0
      %v367 = vsel %vm234, %v283, 0.0
      %vm400 = vcmask 1046528
      %v401 = vrot.slane %v334, 1
      %v402 = vrot.slane %v236, 1
      %v403 = vsel %vm400, %v401, %v402
      %v404 = vrot.slane %v351, 1
      %v405 = vsel %vm400, %v402, %v404
      %v406 = vrot.slane %v335, 1
      %v407 = vrot.slane %v239, 1
      %v408 = vsel %vm400, %v406, %v407
      %v409 = vrot.slane %v352, 1
      %v410 = vsel %vm400, %v407, %v409
      %v411 = vrot.slane %v336, 1
      %v412 = vrot.slane %v242, 1
      %v413 = vsel %vm400, %v411, %v412
      %v414 = vrot.slane %v353, 1
      %v415 = vsel %vm400, %v412, %v414
      %v416 = vrot.slane %v337, 1
      %v417 = vrot.slane %v245, 1
      %v418 = vsel %vm400, %v416, %v417
      %v419 = vrot.slane %v354, 1
      %v420 = vsel %vm400, %v417, %v419
      %v421 = vrot.slane %v338, 1
      %v422 = vrot.slane %v248, 1
      %v423 = vsel %vm400, %v421, %v422
      %v424 = vrot.slane %v355, 1
      %v425 = vsel %vm400, %v422, %v424
      %v426 = vrot.slane %v339, 1
      %v427 = vrot.slane %v251, 1
      %v428 = vsel %vm400, %v426, %v427
      %v429 = vrot.slane %v356, 1
      %v430 = vsel %vm400, %v427, %v429
      %v431 = vrot.slane %v340, 1
      %v432 = vrot.slane %v254, 1
      %v433 = vsel %vm400, %v431, %v432
      %v434 = vrot.slane %v357, 1
      %v435 = vsel %vm400, %v432, %v434
      %v436 = vrot.slane %v341, 1
      %v437 = vrot.slane %v257, 1
      %v438 = vsel %vm400, %v436, %v437
      %v439 = vrot.slane %v358, 1
      %v440 = vsel %vm400, %v437, %v439
      %v441 = vrot.slane %v342, 1
      %v442 = vrot.slane %v260, 1
      %v443 = vsel %vm400, %v441, %v442
      %v444 = vrot.slane %v359, 1
      %v445 = vsel %vm400, %v442, %v444
      %v446 = vrot.slane %v343, 1
      %v447 = vrot.slane %v263, 1
      %v448 = vsel %vm400, %v446, %v447
      %v449 = vrot.slane %v360, 1
      %v450 = vsel %vm400, %v447, %v449
      %v451 = vrot.slane %v344, 1
      %v452 = vrot.slane %v266, 1
      %v453 = vsel %vm400, %v451, %v452
      %v454 = vrot.slane %v361, 1
      %v455 = vsel %vm400, %v452, %v454
      %v456 = vrot.slane %v345, 1
      %v457 = vrot.slane %v269, 1
      %v458 = vsel %vm400, %v456, %v457
      %v459 = vrot.slane %v362, 1
      %v460 = vsel %vm400, %v457, %v459
      %v461 = vrot.slane %v346, 1
      %v462 = vrot.slane %v272, 1
      %v463 = vsel %vm400, %v461, %v462
      %v464 = vrot.slane %v363, 1
      %v465 = vsel %vm400, %v462, %v464
      %v466 = vrot.slane %v347, 1
      %v467 = vrot.slane %v275, 1
      %v468 = vsel %vm400, %v466, %v467
      %v469 = vrot.slane %v364, 1
      %v470 = vsel %vm400, %v467, %v469
      %v471 = vrot.slane %v348, 1
      %v472 = vrot.slane %v278, 1
      %v473 = vsel %vm400, %v471, %v472
      %v474 = vrot.slane %v365, 1
      %v475 = vsel %vm400, %v472, %v474
      %v476 = vrot.slane %v349, 1
      %v477 = vrot.slane %v281, 1
      %v478 = vsel %vm400, %v476, %v477
      %v479 = vrot.slane %v366, 1
      %v480 = vsel %vm400, %v477, %v479
      %vm481 = vcmask 1045504
      %v482 = vrot.slane %v334, 2
      %v483 = vrot.slane %v236, 2
      %v484 = vsel %vm481, %v482, %v483
      %v485 = vrot.slane %v351, 2
      %v486 = vsel %vm481, %v483, %v485
      %v487 = vrot.slane %v335, 2
      %v488 = vrot.slane %v239, 2
      %v489 = vsel %vm481, %v487, %v488
      %v490 = vrot.slane %v352, 2
      %v491 = vsel %vm481, %v488, %v490
      %v492 = vrot.slane %v336, 2
      %v493 = vrot.slane %v242, 2
      %v494 = vsel %vm481, %v492, %v493
      %v495 = vrot.slane %v353, 2
      %v496 = vsel %vm481, %v493, %v495
      %v497 = vrot.slane %v337, 2
      %v498 = vrot.slane %v245, 2
      %v499 = vsel %vm481, %v497, %v498
      %v500 = vrot.slane %v354, 2
      %v501 = vsel %vm481, %v498, %v500
      %v502 = vrot.slane %v338, 2
      %v503 = vrot.slane %v248, 2
      %v504 = vsel %vm481, %v502, %v503
      %v505 = vrot.slane %v355, 2
      %v506 = vsel %vm481, %v503, %v505
      %v507 = vrot.slane %v339, 2
      %v508 = vrot.slane %v251, 2
      %v509 = vsel %vm481, %v507, %v508
      %v510 = vrot.slane %v356, 2
      %v511 = vsel %vm481, %v508, %v510
      %v512 = vrot.slane %v340, 2
      %v513 = vrot.slane %v254, 2
      %v514 = vsel %vm481, %v512, %v513
      %v515 = vrot.slane %v357, 2
      %v516 = vsel %vm481, %v513, %v515
      %v517 = vrot.slane %v341, 2
      %v518 = vrot.slane %v257, 2
      %v519 = vsel %vm481, %v517, %v518
      %v520 = vrot.slane %v358, 2
      %v521 = vsel %vm481, %v518, %v520
      %v522 = vrot.slane %v342, 2
      %v523 = vrot.slane %v260, 2
      %v524 = vsel %vm481, %v522, %v523
      %v525 = vrot.slane %v359, 2
      %v526 = vsel %vm481, %v523, %v525
      %v527 = vrot.slane %v343, 2
      %v528 = vrot.slane %v263, 2
      %v529 = vsel %vm481, %v527, %v528
      %v530 = vrot.slane %v360, 2
      %v531 = vsel %vm481, %v528, %v530
      %v532 = vrot.slane %v344, 2
      %v533 = vrot.slane %v266, 2
      %v534 = vsel %vm481, %v532, %v533
      %v535 = vrot.slane %v361, 2
      %v536 = vsel %vm481, %v533, %v535
      %v537 = vrot.slane %v345, 2
      %v538 = vrot.slane %v269, 2
      %v539 = vsel %vm481, %v537, %v538
      %v540 = vrot.slane %v362, 2
      %v541 = vsel %vm481, %v538, %v540
      %v542 = vrot.slane %v346, 2
      %v543 = vrot.slane %v272, 2
      %v544 = vsel %vm481, %v542, %v543
      %v545 = vrot.slane %v363, 2
      %v546 = vsel %vm481, %v543, %v545
      %v547 = vrot.slane %v347, 2
      %v548 = vrot.slane %v275, 2
      %v549 = vsel %vm481, %v547, %v548
      %v550 = vrot.slane %v364, 2
      %v551 = vsel %vm481, %v548, %v550
      %v552 = vrot.slane %v348, 2
      %v553 = vrot.slane %v278, 2
      %v554 = vsel %vm481, %v552, %v553
      %v555 = vrot.slane %v365, 2
      %v556 = vsel %vm481, %v553, %v555
      %v557 = vrot.slane %v349, 2
      %v558 = vrot.slane %v281, 2
      %v559 = vsel %vm481, %v557, %v558
      %v560 = vrot.slane %v366, 2
      %v561 = vsel %vm481, %v558, %v560
      %v564 = vrot.slane %v350, 1
      %v565 = vrot.slane %v284, 1
      %v566 = vsel %vm400, %v564, %v565
      %v567 = vrot.slane %v367, 1
      %v568 = vsel %vm400, %v565, %v567
      %v569 = vrot.slane %v350, 2
      %v570 = vrot.slane %v284, 2
      %v571 = vsel %vm481, %v569, %v570
      %v572 = vrot.slane %v367, 2
      %v573 = vsel %vm481, %v570, %v572
      %574 = vrot.lane.b32.xlu0 %v403, 4
      %v575 = vpop.permute.xlu0 %574
      %576 = vrot.lane.b32.xlu0 %v405, 4
      %v577 = vpop.permute.xlu0 %576
      %578 = vrot.lane.b32.xlu0 %v408, 4
      %v579 = vpop.permute.xlu0 %578
      %580 = vrot.lane.b32.xlu0 %v410, 4
      %v581 = vpop.permute.xlu0 %580
      %582 = vrot.lane.b32.xlu0 %v413, 4
      %v583 = vpop.permute.xlu0 %582
      %584 = vrot.lane.b32.xlu0 %v415, 4
      %v585 = vpop.permute.xlu0 %584
      %586 = vrot.lane.b32.xlu0 %v418, 4
      %v587 = vpop.permute.xlu0 %586
      %588 = vrot.lane.b32.xlu0 %v420, 4
      %v589 = vpop.permute.xlu0 %588
      %590 = vrot.lane.b32.xlu0 %v423, 4
      %v591 = vpop.permute.xlu0 %590
      %592 = vrot.lane.b32.xlu0 %v425, 4
      %v593 = vpop.permute.xlu0 %592
      %594 = vrot.lane.b32.xlu0 %v428, 4
      %v595 = vpop.permute.xlu0 %594
      %596 = vrot.lane.b32.xlu0 %v430, 4
      %v597 = vpop.permute.xlu0 %596
      %598 = vrot.lane.b32.xlu0 %v433, 4
      %v599 = vpop.permute.xlu0 %598
      %600 = vrot.lane.b32.xlu0 %v435, 4
      %v601 = vpop.permute.xlu0 %600
      %602 = vrot.lane.b32.xlu0 %v438, 4
      %v603 = vpop.permute.xlu0 %602
      %604 = vrot.lane.b32.xlu0 %v440, 4
      %v605 = vpop.permute.xlu0 %604
      %606 = vrot.lane.b32.xlu0 %v443, 4
      %v607 = vpop.permute.xlu0 %606
      %608 = vrot.lane.b32.xlu0 %v445, 4
      %v609 = vpop.permute.xlu0 %608
      %610 = vrot.lane.b32.xlu0 %v448, 4
      %v611 = vpop.permute.xlu0 %610
      %612 = vrot.lane.b32.xlu0 %v450, 4
      %v613 = vpop.permute.xlu0 %612
      %614 = vrot.lane.b32.xlu0 %v453, 4
      %v615 = vpop.permute.xlu0 %614
      %616 = vrot.lane.b32.xlu0 %v455, 4
      %v617 = vpop.permute.xlu0 %616
      %618 = vrot.lane.b32.xlu0 %v458, 4
      %v619 = vpop.permute.xlu0 %618
      %620 = vrot.lane.b32.xlu0 %v460, 4
      %v621 = vpop.permute.xlu0 %620
      %622 = vrot.lane.b32.xlu0 %v463, 4
      %v623 = vpop.permute.xlu0 %622
      %624 = vrot.lane.b32.xlu0 %v465, 4
      %v625 = vpop.permute.xlu0 %624
      %626 = vrot.lane.b32.xlu0 %v468, 4
      %v627 = vpop.permute.xlu0 %626
      %628 = vrot.lane.b32.xlu0 %v470, 4
      %v629 = vpop.permute.xlu0 %628
      %630 = vrot.lane.b32.xlu0 %v473, 4
      %v631 = vpop.permute.xlu0 %630
      %632 = vrot.lane.b32.xlu0 %v475, 4
      %v633 = vpop.permute.xlu0 %632
      %634 = vrot.lane.b32.xlu0 %v478, 4
      %v635 = vpop.permute.xlu0 %634
      %636 = vrot.lane.b32.xlu0 %v480, 4
      %v637 = vpop.permute.xlu0 %636
      %670 = vrot.lane.b32.xlu0 %v484, 8
      %v671 = vpop.permute.xlu0 %670
      %672 = vrot.lane.b32.xlu0 %v486, 8
      %v673 = vpop.permute.xlu0 %672
      %674 = vrot.lane.b32.xlu0 %v489, 8
      %v675 = vpop.permute.xlu0 %674
      %676 = vrot.lane.b32.xlu0 %v491, 8
      %v677 = vpop.permute.xlu0 %676
      %678 = vrot.lane.b32.xlu0 %v494, 8
      %v679 = vpop.permute.xlu0 %678
      %680 = vrot.lane.b32.xlu0 %v496, 8
      %v681 = vpop.permute.xlu0 %680
      %682 = vrot.lane.b32.xlu0 %v499, 8
      %v683 = vpop.permute.xlu0 %682
      %684 = vrot.lane.b32.xlu0 %v501, 8
      %v685 = vpop.permute.xlu0 %684
      %686 = vrot.lane.b32.xlu0 %v504, 8
      %v687 = vpop.permute.xlu0 %686
      %688 = vrot.lane.b32.xlu0 %v506, 8
      %v689 = vpop.permute.xlu0 %688
      %690 = vrot.lane.b32.xlu0 %v509, 8
      %v691 = vpop.permute.xlu0 %690
      %692 = vrot.lane.b32.xlu0 %v511, 8
      %v693 = vpop.permute.xlu0 %692
      %694 = vrot.lane.b32.xlu0 %v514, 8
      %v695 = vpop.permute.xlu0 %694
      %696 = vrot.lane.b32.xlu0 %v516, 8
      %v697 = vpop.permute.xlu0 %696
      %698 = vrot.lane.b32.xlu0 %v519, 8
      %v699 = vpop.permute.xlu0 %698
      %700 = vrot.lane.b32.xlu0 %v521, 8
      %v701 = vpop.permute.xlu0 %700
      %702 = vrot.lane.b32.xlu0 %v524, 8
      %v703 = vpop.permute.xlu0 %702
      %704 = vrot.lane.b32.xlu0 %v526, 8
      %v705 = vpop.permute.xlu0 %704
      %706 = vrot.lane.b32.xlu0 %v529, 8
      %v707 = vpop.permute.xlu0 %706
      %708 = vrot.lane.b32.xlu0 %v531, 8
      %v709 = vpop.permute.xlu0 %708
      %710 = vrot.lane.b32.xlu0 %v534, 8
      %v711 = vpop.permute.xlu0 %710
      %712 = vrot.lane.b32.xlu0 %v536, 8
      %v713 = vpop.permute.xlu0 %712
      %714 = vrot.lane.b32.xlu0 %v539, 8
      %v715 = vpop.permute.xlu0 %714
      %716 = vrot.lane.b32.xlu0 %v541, 8
      %v717 = vpop.permute.xlu0 %716
      %718 = vrot.lane.b32.xlu0 %v544, 8
      %v719 = vpop.permute.xlu0 %718
      %720 = vrot.lane.b32.xlu0 %v546, 8
      %v721 = vpop.permute.xlu0 %720
      %722 = vrot.lane.b32.xlu0 %v549, 8
      %v723 = vpop.permute.xlu0 %722
      %724 = vrot.lane.b32.xlu0 %v551, 8
      %v725 = vpop.permute.xlu0 %724
      %726 = vrot.lane.b32.xlu0 %v554, 8
      %v727 = vpop.permute.xlu0 %726
      %728 = vrot.lane.b32.xlu0 %v556, 8
      %v729 = vpop.permute.xlu0 %728
      %730 = vrot.lane.b32.xlu0 %v559, 8
      %v731 = vpop.permute.xlu0 %730
      %732 = vrot.lane.b32.xlu0 %v561, 8
      %v733 = vpop.permute.xlu0 %732
      %766 = vrot.lane.b32.xlu0 %v335, 12
      %v767 = vpop.permute.xlu0 %766
      %768 = vrot.lane.b32.xlu0 %v239, 12
      %v769 = vpop.permute.xlu0 %768
      %770 = vrot.lane.b32.xlu0 %v336, 12
      %v771 = vpop.permute.xlu0 %770
      %772 = vrot.lane.b32.xlu0 %v242, 12
      %v773 = vpop.permute.xlu0 %772
      %774 = vrot.lane.b32.xlu0 %v337, 12
      %v775 = vpop.permute.xlu0 %774
      %776 = vrot.lane.b32.xlu0 %v245, 12
      %v777 = vpop.permute.xlu0 %776
      %778 = vrot.lane.b32.xlu0 %v338, 12
      %v779 = vpop.permute.xlu0 %778
      %780 = vrot.lane.b32.xlu0 %v248, 12
      %v781 = vpop.permute.xlu0 %780
      %782 = vrot.lane.b32.xlu0 %v339, 12
      %v783 = vpop.permute.xlu0 %782
      %784 = vrot.lane.b32.xlu0 %v251, 12
      %v785 = vpop.permute.xlu0 %784
      %786 = vrot.lane.b32.xlu0 %v340, 12
      %v787 = vpop.permute.xlu0 %786
      %788 = vrot.lane.b32.xlu0 %v254, 12
      %v789 = vpop.permute.xlu0 %788
      %790 = vrot.lane.b32.xlu0 %v341, 12
      %v791 = vpop.permute.xlu0 %790
      %792 = vrot.lane.b32.xlu0 %v257, 12
      %v793 = vpop.permute.xlu0 %792
      %794 = vrot.lane.b32.xlu0 %v342, 12
      %v795 = vpop.permute.xlu0 %794
      %796 = vrot.lane.b32.xlu0 %v260, 12
      %v797 = vpop.permute.xlu0 %796
      %798 = vrot.lane.b32.xlu0 %v343, 12
      %v799 = vpop.permute.xlu0 %798
      %800 = vrot.lane.b32.xlu0 %v263, 12
      %v801 = vpop.permute.xlu0 %800
      %802 = vrot.lane.b32.xlu0 %v344, 12
      %v803 = vpop.permute.xlu0 %802
      %804 = vrot.lane.b32.xlu0 %v266, 12
      %v805 = vpop.permute.xlu0 %804
      %806 = vrot.lane.b32.xlu0 %v345, 12
      %v807 = vpop.permute.xlu0 %806
      %808 = vrot.lane.b32.xlu0 %v269, 12
      %v809 = vpop.permute.xlu0 %808
      %810 = vrot.lane.b32.xlu0 %v346, 12
      %v811 = vpop.permute.xlu0 %810
      %812 = vrot.lane.b32.xlu0 %v272, 12
      %v813 = vpop.permute.xlu0 %812
      %814 = vrot.lane.b32.xlu0 %v347, 12
      %v815 = vpop.permute.xlu0 %814
      %816 = vrot.lane.b32.xlu0 %v275, 12
      %v817 = vpop.permute.xlu0 %816
      %818 = vrot.lane.b32.xlu0 %v348, 12
      %v819 = vpop.permute.xlu0 %818
      %820 = vrot.lane.b32.xlu0 %v278, 12
      %v821 = vpop.permute.xlu0 %820
      %822 = vrot.lane.b32.xlu0 %v349, 12
      %v823 = vpop.permute.xlu0 %822
      %824 = vrot.lane.b32.xlu0 %v281, 12
      %v825 = vpop.permute.xlu0 %824
      %826 = vrot.lane.b32.xlu0 %v350, 12
      %v827 = vpop.permute.xlu0 %826
      %828 = vrot.lane.b32.xlu0 %v284, 12
      %v829 = vpop.permute.xlu0 %828
      %862 = vrot.lane.b32.xlu0 %v408, 16
      %v863 = vpop.permute.xlu0 %862
      %864 = vrot.lane.b32.xlu0 %v410, 16
      %v865 = vpop.permute.xlu0 %864
      %866 = vrot.lane.b32.xlu0 %v413, 16
      %v867 = vpop.permute.xlu0 %866
      %868 = vrot.lane.b32.xlu0 %v415, 16
      %v869 = vpop.permute.xlu0 %868
      %870 = vrot.lane.b32.xlu0 %v418, 16
      %v871 = vpop.permute.xlu0 %870
      %872 = vrot.lane.b32.xlu0 %v420, 16
      %v873 = vpop.permute.xlu0 %872
      %874 = vrot.lane.b32.xlu0 %v423, 16
      %v875 = vpop.permute.xlu0 %874
      %876 = vrot.lane.b32.xlu0 %v425, 16
      %v877 = vpop.permute.xlu0 %876
      %878 = vrot.lane.b32.xlu0 %v428, 16
      %v879 = vpop.permute.xlu0 %878
      %880 = vrot.lane.b32.xlu0 %v430, 16
      %v881 = vpop.permute.xlu0 %880
      %882 = vrot.lane.b32.xlu0 %v433, 16
      %v883 = vpop.permute.xlu0 %882
      %884 = vrot.lane.b32.xlu0 %v435, 16
      %v885 = vpop.permute.xlu0 %884
      %886 = vrot.lane.b32.xlu0 %v438, 16
      %v887 = vpop.permute.xlu0 %886
      %888 = vrot.lane.b32.xlu0 %v440, 16
      %v889 = vpop.permute.xlu0 %888
      %890 = vrot.lane.b32.xlu0 %v443, 16
      %v891 = vpop.permute.xlu0 %890
      %892 = vrot.lane.b32.xlu0 %v445, 16
      %v893 = vpop.permute.xlu0 %892
      %894 = vrot.lane.b32.xlu0 %v448, 16
      %v895 = vpop.permute.xlu0 %894
      %896 = vrot.lane.b32.xlu0 %v450, 16
      %v897 = vpop.permute.xlu0 %896
      %898 = vrot.lane.b32.xlu0 %v453, 16
      %v899 = vpop.permute.xlu0 %898
      %900 = vrot.lane.b32.xlu0 %v455, 16
      %v901 = vpop.permute.xlu0 %900
      %902 = vrot.lane.b32.xlu0 %v458, 16
      %v903 = vpop.permute.xlu0 %902
      %904 = vrot.lane.b32.xlu0 %v460, 16
      %v905 = vpop.permute.xlu0 %904
      %906 = vrot.lane.b32.xlu0 %v463, 16
      %v907 = vpop.permute.xlu0 %906
      %908 = vrot.lane.b32.xlu0 %v465, 16
      %v909 = vpop.permute.xlu0 %908
      %910 = vrot.lane.b32.xlu0 %v468, 16
      %v911 = vpop.permute.xlu0 %910
      %912 = vrot.lane.b32.xlu0 %v470, 16
      %v913 = vpop.permute.xlu0 %912
      %914 = vrot.lane.b32.xlu0 %v473, 16
      %v915 = vpop.permute.xlu0 %914
      %916 = vrot.lane.b32.xlu0 %v475, 16
      %v917 = vpop.permute.xlu0 %916
      %918 = vrot.lane.b32.xlu0 %v478, 16
      %v919 = vpop.permute.xlu0 %918
      %920 = vrot.lane.b32.xlu0 %v480, 16
      %v921 = vpop.permute.xlu0 %920
      %922 = vrot.lane.b32.xlu0 %v566, 16
      %v923 = vpop.permute.xlu0 %922
      %924 = vrot.lane.b32.xlu0 %v568, 16
      %v925 = vpop.permute.xlu0 %924
      %958 = vrot.lane.b32.xlu0 %v489, 20
      %v959 = vpop.permute.xlu0 %958
      %960 = vrot.lane.b32.xlu0 %v491, 20
      %v961 = vpop.permute.xlu0 %960
      %962 = vrot.lane.b32.xlu0 %v494, 20
      %v963 = vpop.permute.xlu0 %962
      %964 = vrot.lane.b32.xlu0 %v496, 20
      %v965 = vpop.permute.xlu0 %964
      %966 = vrot.lane.b32.xlu0 %v499, 20
      %v967 = vpop.permute.xlu0 %966
      %968 = vrot.lane.b32.xlu0 %v501, 20
      %v969 = vpop.permute.xlu0 %968
      %970 = vrot.lane.b32.xlu0 %v504, 20
      %v971 = vpop.permute.xlu0 %970
      %972 = vrot.lane.b32.xlu0 %v506, 20
      %v973 = vpop.permute.xlu0 %972
      %974 = vrot.lane.b32.xlu0 %v509, 20
      %v975 = vpop.permute.xlu0 %974
      %976 = vrot.lane.b32.xlu0 %v511, 20
      %v977 = vpop.permute.xlu0 %976
      %978 = vrot.lane.b32.xlu0 %v514, 20
      %v979 = vpop.permute.xlu0 %978
      %980 = vrot.lane.b32.xlu0 %v516, 20
      %v981 = vpop.permute.xlu0 %980
      %982 = vrot.lane.b32.xlu0 %v519, 20
      %v983 = vpop.permute.xlu0 %982
      %984 = vrot.lane.b32.xlu0 %v521, 20
      %v985 = vpop.permute.xlu0 %984
      %986 = vrot.lane.b32.xlu0 %v524, 20
      %v987 = vpop.permute.xlu0 %986
      %988 = vrot.lane.b32.xlu0 %v526, 20
      %v989 = vpop.permute.xlu0 %988
      %990 = vrot.lane.b32.xlu0 %v529, 20
      %v991 = vpop.permute.xlu0 %990
      %992 = vrot.lane.b32.xlu0 %v531, 20
      %v993 = vpop.permute.xlu0 %992
      %994 = vrot.lane.b32.xlu0 %v534, 20
      %v995 = vpop.permute.xlu0 %994
      %996 = vrot.lane.b32.xlu0 %v536, 20
      %v997 = vpop.permute.xlu0 %996
      %998 = vrot.lane.b32.xlu0 %v539, 20
      %v999 = vpop.permute.xlu0 %998
      %1000 = vrot.lane.b32.xlu0 %v541, 20
      %v1001 = vpop.permute.xlu0 %1000
      %1002 = vrot.lane.b32.xlu0 %v544, 20
      %v1003 = vpop.permute.xlu0 %1002
      %1004 = vrot.lane.b32.xlu0 %v546, 20
      %v1005 = vpop.permute.xlu0 %1004
      %1006 = vrot.lane.b32.xlu0 %v549, 20
      %v1007 = vpop.permute.xlu0 %1006
      %1008 = vrot.lane.b32.xlu0 %v551, 20
      %v1009 = vpop.permute.xlu0 %1008
      %1010 = vrot.lane.b32.xlu0 %v554, 20
      %v1011 = vpop.permute.xlu0 %1010
      %1012 = vrot.lane.b32.xlu0 %v556, 20
      %v1013 = vpop.permute.xlu0 %1012
      %1014 = vrot.lane.b32.xlu0 %v559, 20
      %v1015 = vpop.permute.xlu0 %1014
      %1016 = vrot.lane.b32.xlu0 %v561, 20
      %v1017 = vpop.permute.xlu0 %1016
      %1018 = vrot.lane.b32.xlu0 %v571, 20
      %v1019 = vpop.permute.xlu0 %1018
      %1020 = vrot.lane.b32.xlu0 %v573, 20
      %v1021 = vpop.permute.xlu0 %1020
      %1054 = vrot.lane.b32.xlu0 %v336, 24
      %v1055 = vpop.permute.xlu0 %1054
      %1056 = vrot.lane.b32.xlu0 %v242, 24
      %v1057 = vpop.permute.xlu0 %1056
      %1058 = vrot.lane.b32.xlu0 %v337, 24
      %v1059 = vpop.permute.xlu0 %1058
      %1060 = vrot.lane.b32.xlu0 %v245, 24
      %v1061 = vpop.permute.xlu0 %1060
      %1062 = vrot.lane.b32.xlu0 %v338, 24
      %v1063 = vpop.permute.xlu0 %1062
      %1064 = vrot.lane.b32.xlu0 %v248, 24
      %v1065 = vpop.permute.xlu0 %1064
      %1066 = vrot.lane.b32.xlu0 %v339, 24
      %v1067 = vpop.permute.xlu0 %1066
      %1068 = vrot.lane.b32.xlu0 %v251, 24
      %v1069 = vpop.permute.xlu0 %1068
      %1070 = vrot.lane.b32.xlu0 %v340, 24
      %v1071 = vpop.permute.xlu0 %1070
      %1072 = vrot.lane.b32.xlu0 %v254, 24
      %v1073 = vpop.permute.xlu0 %1072
      %1074 = vrot.lane.b32.xlu0 %v341, 24
      %v1075 = vpop.permute.xlu0 %1074
      %1076 = vrot.lane.b32.xlu0 %v257, 24
      %v1077 = vpop.permute.xlu0 %1076
      %1078 = vrot.lane.b32.xlu0 %v342, 24
      %v1079 = vpop.permute.xlu0 %1078
      %1080 = vrot.lane.b32.xlu0 %v260, 24
      %v1081 = vpop.permute.xlu0 %1080
      %1082 = vrot.lane.b32.xlu0 %v343, 24
      %v1083 = vpop.permute.xlu0 %1082
      %1084 = vrot.lane.b32.xlu0 %v263, 24
      %v1085 = vpop.permute.xlu0 %1084
      %1086 = vrot.lane.b32.xlu0 %v344, 24
      %v1087 = vpop.permute.xlu0 %1086
      %1088 = vrot.lane.b32.xlu0 %v266, 24
      %v1089 = vpop.permute.xlu0 %1088
      %1090 = vrot.lane.b32.xlu0 %v345, 24
      %v1091 = vpop.permute.xlu0 %1090
      %1092 = vrot.lane.b32.xlu0 %v269, 24
      %v1093 = vpop.permute.xlu0 %1092
      %1094 = vrot.lane.b32.xlu0 %v346, 24
      %v1095 = vpop.permute.xlu0 %1094
      %1096 = vrot.lane.b32.xlu0 %v272, 24
      %v1097 = vpop.permute.xlu0 %1096
      %1098 = vrot.lane.b32.xlu0 %v347, 24
      %v1099 = vpop.permute.xlu0 %1098
      %1100 = vrot.lane.b32.xlu0 %v275, 24
      %v1101 = vpop.permute.xlu0 %1100
      %1102 = vrot.lane.b32.xlu0 %v348, 24
      %v1103 = vpop.permute.xlu0 %1102
      %1104 = vrot.lane.b32.xlu0 %v278, 24
      %v1105 = vpop.permute.xlu0 %1104
      %1106 = vrot.lane.b32.xlu0 %v349, 24
      %v1107 = vpop.permute.xlu0 %1106
      %1108 = vrot.lane.b32.xlu0 %v281, 24
      %v1109 = vpop.permute.xlu0 %1108
      %1110 = vrot.lane.b32.xlu0 %v350, 24
      %v1111 = vpop.permute.xlu0 %1110
      %1112 = vrot.lane.b32.xlu0 %v284, 24
      %v1113 = vpop.permute.xlu0 %1112
      %1114 = vrot.lane.b32.xlu0 %v334, 24
      %v1115 = vpop.permute.xlu0 %1114
      %1116 = vrot.lane.b32.xlu0 %v236, 24
      %v1117 = vpop.permute.xlu0 %1116
      %1150 = vrot.lane.b32.xlu0 %v413, 28
      %v1151 = vpop.permute.xlu0 %1150
      %1152 = vrot.lane.b32.xlu0 %v415, 28
      %v1153 = vpop.permute.xlu0 %1152
      %1154 = vrot.lane.b32.xlu0 %v418, 28
      %v1155 = vpop.permute.xlu0 %1154
      %1156 = vrot.lane.b32.xlu0 %v420, 28
      %v1157 = vpop.permute.xlu0 %1156
      %1158 = vrot.lane.b32.xlu0 %v423, 28
      %v1159 = vpop.permute.xlu0 %1158
      %1160 = vrot.lane.b32.xlu0 %v425, 28
      %v1161 = vpop.permute.xlu0 %1160
      %1162 = vrot.lane.b32.xlu0 %v428, 28
      %v1163 = vpop.permute.xlu0 %1162
      %1164 = vrot.lane.b32.xlu0 %v430, 28
      %v1165 = vpop.permute.xlu0 %1164
      %1166 = vrot.lane.b32.xlu0 %v433, 28
      %v1167 = vpop.permute.xlu0 %1166
      %1168 = vrot.lane.b32.xlu0 %v435, 28
      %v1169 = vpop.permute.xlu0 %1168
      %1170 = vrot.lane.b32.xlu0 %v438, 28
      %v1171 = vpop.permute.xlu0 %1170
      %1172 = vrot.lane.b32.xlu0 %v440, 28
      %v1173 = vpop.permute.xlu0 %1172
      %1174 = vrot.lane.b32.xlu0 %v443, 28
      %v1175 = vpop.permute.xlu0 %1174
      %1176 = vrot.lane.b32.xlu0 %v445, 28
      %v1177 = vpop.permute.xlu0 %1176
      %1178 = vrot.lane.b32.xlu0 %v448, 28
      %v1179 = vpop.permute.xlu0 %1178
      %1180 = vrot.lane.b32.xlu0 %v450, 28
      %v1181 = vpop.permute.xlu0 %1180
      %1182 = vrot.lane.b32.xlu0 %v453, 28
      %v1183 = vpop.permute.xlu0 %1182
      %1184 = vrot.lane.b32.xlu0 %v455, 28
      %v1185 = vpop.permute.xlu0 %1184
      %1186 = vrot.lane.b32.xlu0 %v458, 28
      %v1187 = vpop.permute.xlu0 %1186
      %1188 = vrot.lane.b32.xlu0 %v460, 28
      %v1189 = vpop.permute.xlu0 %1188
      %1190 = vrot.lane.b32.xlu0 %v463, 28
      %v1191 = vpop.permute.xlu0 %1190
      %1192 = vrot.lane.b32.xlu0 %v465, 28
      %v1193 = vpop.permute.xlu0 %1192
      %1194 = vrot.lane.b32.xlu0 %v468, 28
      %v1195 = vpop.permute.xlu0 %1194
      %1196 = vrot.lane.b32.xlu0 %v470, 28
      %v1197 = vpop.permute.xlu0 %1196
      %1198 = vrot.lane.b32.xlu0 %v473, 28
      %v1199 = vpop.permute.xlu0 %1198
      %1200 = vrot.lane.b32.xlu0 %v475, 28
      %v1201 = vpop.permute.xlu0 %1200
      %1202 = vrot.lane.b32.xlu0 %v478, 28
      %v1203 = vpop.permute.xlu0 %1202
      %1204 = vrot.lane.b32.xlu0 %v480, 28
      %v1205 = vpop.permute.xlu0 %1204
      %1206 = vrot.lane.b32.xlu0 %v566, 28
      %v1207 = vpop.permute.xlu0 %1206
      %1208 = vrot.lane.b32.xlu0 %v568, 28
      %v1209 = vpop.permute.xlu0 %1208
      %1210 = vrot.lane.b32.xlu0 %v403, 28
      %v1211 = vpop.permute.xlu0 %1210
      %1212 = vrot.lane.b32.xlu0 %v405, 28
      %v1213 = vpop.permute.xlu0 %1212
      %1246 = vrot.lane.b32.xlu0 %v494, 32
      %v1247 = vpop.permute.xlu0 %1246
      %1248 = vrot.lane.b32.xlu0 %v496, 32
      %v1249 = vpop.permute.xlu0 %1248
      %1250 = vrot.lane.b32.xlu0 %v499, 32
      %v1251 = vpop.permute.xlu0 %1250
      %1252 = vrot.lane.b32.xlu0 %v501, 32
      %v1253 = vpop.permute.xlu0 %1252
      %1254 = vrot.lane.b32.xlu0 %v504, 32
      %v1255 = vpop.permute.xlu0 %1254
      %1256 = vrot.lane.b32.xlu0 %v506, 32
      %v1257 = vpop.permute.xlu0 %1256
      %1258 = vrot.lane.b32.xlu0 %v509, 32
      %v1259 = vpop.permute.xlu0 %1258
      %1260 = vrot.lane.b32.xlu0 %v511, 32
      %v1261 = vpop.permute.xlu0 %1260
      %1262 = vrot.lane.b32.xlu0 %v514, 32
      %v1263 = vpop.permute.xlu0 %1262
      %1264 = vrot.lane.b32.xlu0 %v516, 32
      %v1265 = vpop.permute.xlu0 %1264
      %1266 = vrot.lane.b32.xlu0 %v519, 32
      %v1267 = vpop.permute.xlu0 %1266
      %1268 = vrot.lane.b32.xlu0 %v521, 32
      %v1269 = vpop.permute.xlu0 %1268
      %1270 = vrot.lane.b32.xlu0 %v524, 32
      %v1271 = vpop.permute.xlu0 %1270
      %1272 = vrot.lane.b32.xlu0 %v526, 32
      %v1273 = vpop.permute.xlu0 %1272
      %1274 = vrot.lane.b32.xlu0 %v529, 32
      %v1275 = vpop.permute.xlu0 %1274
      %1276 = vrot.lane.b32.xlu0 %v531, 32
      %v1277 = vpop.permute.xlu0 %1276
      %1278 = vrot.lane.b32.xlu0 %v534, 32
      %v1279 = vpop.permute.xlu0 %1278
      %1280 = vrot.lane.b32.xlu0 %v536, 32
      %v1281 = vpop.permute.xlu0 %1280
      %1282 = vrot.lane.b32.xlu0 %v539, 32
      %v1283 = vpop.permute.xlu0 %1282
      %1284 = vrot.lane.b32.xlu0 %v541, 32
      %v1285 = vpop.permute.xlu0 %1284
      %1286 = vrot.lane.b32.xlu0 %v544, 32
      %v1287 = vpop.permute.xlu0 %1286
      %1288 = vrot.lane.b32.xlu0 %v546, 32
      %v1289 = vpop.permute.xlu0 %1288
      %1290 = vrot.lane.b32.xlu0 %v549, 32
      %v1291 = vpop.permute.xlu0 %1290
      %1292 = vrot.lane.b32.xlu0 %v551, 32
      %v1293 = vpop.permute.xlu0 %1292
      %1294 = vrot.lane.b32.xlu0 %v554, 32
      %v1295 = vpop.permute.xlu0 %1294
      %1296 = vrot.lane.b32.xlu0 %v556, 32
      %v1297 = vpop.permute.xlu0 %1296
      %1298 = vrot.lane.b32.xlu0 %v559, 32
      %v1299 = vpop.permute.xlu0 %1298
      %1300 = vrot.lane.b32.xlu0 %v561, 32
      %v1301 = vpop.permute.xlu0 %1300
      %1302 = vrot.lane.b32.xlu0 %v571, 32
      %v1303 = vpop.permute.xlu0 %1302
      %1304 = vrot.lane.b32.xlu0 %v573, 32
      %v1305 = vpop.permute.xlu0 %1304
      %1306 = vrot.lane.b32.xlu0 %v484, 32
      %v1307 = vpop.permute.xlu0 %1306
      %1308 = vrot.lane.b32.xlu0 %v486, 32
      %v1309 = vpop.permute.xlu0 %1308
      %vm1342 = vcmask 31744
      %v1343 = vsel %vm1342, %v334, %v575
      %v1344 = vsel %vm1342, %v236, %v577
      %v1345 = vsel %vm1342, %v335, %v579
      %v1346 = vsel %vm1342, %v239, %v581
      %v1347 = vsel %vm1342, %v336, %v583
      %v1348 = vsel %vm1342, %v242, %v585
      %v1349 = vsel %vm1342, %v337, %v587
      %v1350 = vsel %vm1342, %v245, %v589
      %v1351 = vsel %vm1342, %v338, %v591
      %v1352 = vsel %vm1342, %v248, %v593
      %v1353 = vsel %vm1342, %v339, %v595
      %v1354 = vsel %vm1342, %v251, %v597
      %v1355 = vsel %vm1342, %v340, %v599
      %v1356 = vsel %vm1342, %v254, %v601
      %v1357 = vsel %vm1342, %v341, %v603
      %v1358 = vsel %vm1342, %v257, %v605
      %v1359 = vsel %vm1342, %v342, %v607
      %v1360 = vsel %vm1342, %v260, %v609
      %v1361 = vsel %vm1342, %v343, %v611
      %v1362 = vsel %vm1342, %v263, %v613
      %v1363 = vsel %vm1342, %v344, %v615
      %v1364 = vsel %vm1342, %v266, %v617
      %v1365 = vsel %vm1342, %v345, %v619
      %v1366 = vsel %vm1342, %v269, %v621
      %v1367 = vsel %vm1342, %v346, %v623
      %v1368 = vsel %vm1342, %v272, %v625
      %v1369 = vsel %vm1342, %v347, %v627
      %v1370 = vsel %vm1342, %v275, %v629
      %v1371 = vsel %vm1342, %v348, %v631
      %v1372 = vsel %vm1342, %v278, %v633
      %v1373 = vsel %vm1342, %v349, %v635
      %v1374 = vsel %vm1342, %v281, %v637
      %vm1375 = vcmask 64512
      %v1376 = vsel %vm1375, %v1343, %v671
      %v1377 = vsel %vm1375, %v1344, %v673
      %v1378 = vsel %vm1375, %v1345, %v675
      %v1379 = vsel %vm1375, %v1346, %v677
      %v1380 = vsel %vm1375, %v1347, %v679
      %v1381 = vsel %vm1375, %v1348, %v681
      %v1382 = vsel %vm1375, %v1349, %v683
      %v1383 = vsel %vm1375, %v1350, %v685
      %v1384 = vsel %vm1375, %v1351, %v687
      %v1385 = vsel %vm1375, %v1352, %v689
      %v1386 = vsel %vm1375, %v1353, %v691
      %v1387 = vsel %vm1375, %v1354, %v693
      %v1388 = vsel %vm1375, %v1355, %v695
      %v1389 = vsel %vm1375, %v1356, %v697
      %v1390 = vsel %vm1375, %v1357, %v699
      %v1391 = vsel %vm1375, %v1358, %v701
      %v1392 = vsel %vm1375, %v1359, %v703
      %v1393 = vsel %vm1375, %v1360, %v705
      %v1394 = vsel %vm1375, %v1361, %v707
      %v1395 = vsel %vm1375, %v1362, %v709
      %v1396 = vsel %vm1375, %v1363, %v711
      %v1397 = vsel %vm1375, %v1364, %v713
      %v1398 = vsel %vm1375, %v1365, %v715
      %v1399 = vsel %vm1375, %v1366, %v717
      %v1400 = vsel %vm1375, %v1367, %v719
      %v1401 = vsel %vm1375, %v1368, %v721
      %v1402 = vsel %vm1375, %v1369, %v723
      %v1403 = vsel %vm1375, %v1370, %v725
      %v1404 = vsel %vm1375, %v1371, %v727
      %v1405 = vsel %vm1375, %v1372, %v729
      %v1406 = vsel %vm1375, %v1373, %v731
      %v1407 = vsel %vm1375, %v1374, %v733
      %vm1408 = vcmask 97280
      %v1409 = vsel %vm1408, %v1376, %v767
      %v1410 = vsel %vm1408, %v1377, %v769
      %v1411 = vsel %vm1408, %v1378, %v771
      %v1412 = vsel %vm1408, %v1379, %v773
      %v1413 = vsel %vm1408, %v1380, %v775
      %v1414 = vsel %vm1408, %v1381, %v777
      %v1415 = vsel %vm1408, %v1382, %v779
      %v1416 = vsel %vm1408, %v1383, %v781
      %v1417 = vsel %vm1408, %v1384, %v783
      %v1418 = vsel %vm1408, %v1385, %v785
      %v1419 = vsel %vm1408, %v1386, %v787
      %v1420 = vsel %vm1408, %v1387, %v789
      %v1421 = vsel %vm1408, %v1388, %v791
      %v1422 = vsel %vm1408, %v1389, %v793
      %v1423 = vsel %vm1408, %v1390, %v795
      %v1424 = vsel %vm1408, %v1391, %v797
      %v1425 = vsel %vm1408, %v1392, %v799
      %v1426 = vsel %vm1408, %v1393, %v801
      %v1427 = vsel %vm1408, %v1394, %v803
      %v1428 = vsel %vm1408, %v1395, %v805
      %v1429 = vsel %vm1408, %v1396, %v807
      %v1430 = vsel %vm1408, %v1397, %v809
      %v1431 = vsel %vm1408, %v1398, %v811
      %v1432 = vsel %vm1408, %v1399, %v813
      %v1433 = vsel %vm1408, %v1400, %v815
      %v1434 = vsel %vm1408, %v1401, %v817
      %v1435 = vsel %vm1408, %v1402, %v819
      %v1436 = vsel %vm1408, %v1403, %v821
      %v1437 = vsel %vm1408, %v1404, %v823
      %v1438 = vsel %vm1408, %v1405, %v825
      %v1439 = vsel %vm1408, %v1406, %v827
      %v1440 = vsel %vm1408, %v1407, %v829
      %vm1441 = vcmask 130048
      %v1442 = vsel %vm1441, %v1409, %v863
      %v1443 = vsel %vm1441, %v1410, %v865
      %v1444 = vsel %vm1441, %v1411, %v867
      %v1445 = vsel %vm1441, %v1412, %v869
      %v1446 = vsel %vm1441, %v1413, %v871
      %v1447 = vsel %vm1441, %v1414, %v873
      %v1448 = vsel %vm1441, %v1415, %v875
      %v1449 = vsel %vm1441, %v1416, %v877
      %v1450 = vsel %vm1441, %v1417, %v879
      %v1451 = vsel %vm1441, %v1418, %v881
      %v1452 = vsel %vm1441, %v1419, %v883
      %v1453 = vsel %vm1441, %v1420, %v885
      %v1454 = vsel %vm1441, %v1421, %v887
      %v1455 = vsel %vm1441, %v1422, %v889
      %v1456 = vsel %vm1441, %v1423, %v891
      %v1457 = vsel %vm1441, %v1424, %v893
      %v1458 = vsel %vm1441, %v1425, %v895
      %v1459 = vsel %vm1441, %v1426, %v897
      %v1460 = vsel %vm1441, %v1427, %v899
      %v1461 = vsel %vm1441, %v1428, %v901
      %v1462 = vsel %vm1441, %v1429, %v903
      %v1463 = vsel %vm1441, %v1430, %v905
      %v1464 = vsel %vm1441, %v1431, %v907
      %v1465 = vsel %vm1441, %v1432, %v909
      %v1466 = vsel %vm1441, %v1433, %v911
      %v1467 = vsel %vm1441, %v1434, %v913
      %v1468 = vsel %vm1441, %v1435, %v915
      %v1469 = vsel %vm1441, %v1436, %v917
      %v1470 = vsel %vm1441, %v1437, %v919
      %v1471 = vsel %vm1441, %v1438, %v921
      %v1472 = vsel %vm1441, %v1439, %v923
      %v1473 = vsel %vm1441, %v1440, %v925
      %vm1474 = vcmask 162816
      %v1475 = vsel %vm1474, %v1442, %v959
      %v1476 = vsel %vm1474, %v1443, %v961
      %v1477 = vsel %vm1474, %v1444, %v963
      %v1478 = vsel %vm1474, %v1445, %v965
      %v1479 = vsel %vm1474, %v1446, %v967
      %v1480 = vsel %vm1474, %v1447, %v969
      %v1481 = vsel %vm1474, %v1448, %v971
      %v1482 = vsel %vm1474, %v1449, %v973
      %v1483 = vsel %vm1474, %v1450, %v975
      %v1484 = vsel %vm1474, %v1451, %v977
      %v1485 = vsel %vm1474, %v1452, %v979
      %v1486 = vsel %vm1474, %v1453, %v981
      %v1487 = vsel %vm1474, %v1454, %v983
      %v1488 = vsel %vm1474, %v1455, %v985
      %v1489 = vsel %vm1474, %v1456, %v987
      %v1490 = vsel %vm1474, %v1457, %v989
      %v1491 = vsel %vm1474, %v1458, %v991
      %v1492 = vsel %vm1474, %v1459, %v993
      %v1493 = vsel %vm1474, %v1460, %v995
      %v1494 = vsel %vm1474, %v1461, %v997
      %v1495 = vsel %vm1474, %v1462, %v999
      %v1496 = vsel %vm1474, %v1463, %v1001
      %v1497 = vsel %vm1474, %v1464, %v1003
      %v1498 = vsel %vm1474, %v1465, %v1005
      %v1499 = vsel %vm1474, %v1466, %v1007
      %v1500 = vsel %vm1474, %v1467, %v1009
      %v1501 = vsel %vm1474, %v1468, %v1011
      %v1502 = vsel %vm1474, %v1469, %v1013
      %v1503 = vsel %vm1474, %v1470, %v1015
      %v1504 = vsel %vm1474, %v1471, %v1017
      %v1505 = vsel %vm1474, %v1472, %v1019
      %v1506 = vsel %vm1474, %v1473, %v1021
      %vm1507 = vcmask 195584
      %v1508 = vsel %vm1507, %v1475, %v1055
      %v1509 = vsel %vm1507, %v1476, %v1057
      %v1510 = vsel %vm1507, %v1477, %v1059
      %v1511 = vsel %vm1507, %v1478, %v1061
      %v1512 = vsel %vm1507, %v1479, %v1063
      %v1513 = vsel %vm1507, %v1480, %v1065
      %v1514 = vsel %vm1507, %v1481, %v1067
      %v1515 = vsel %vm1507, %v1482, %v1069
      %v1516 = vsel %vm1507, %v1483, %v1071
      %v1517 = vsel %vm1507, %v1484, %v1073
      %v1518 = vsel %vm1507, %v1485, %v1075
      %v1519 = vsel %vm1507, %v1486, %v1077
      %v1520 = vsel %vm1507, %v1487, %v1079
      %v1521 = vsel %vm1507, %v1488, %v1081
      %v1522 = vsel %vm1507, %v1489, %v1083
      %v1523 = vsel %vm1507, %v1490, %v1085
      %v1524 = vsel %vm1507, %v1491, %v1087
      %v1525 = vsel %vm1507, %v1492, %v1089
      %v1526 = vsel %vm1507, %v1493, %v1091
      %v1527 = vsel %vm1507, %v1494, %v1093
      %v1528 = vsel %vm1507, %v1495, %v1095
      %v1529 = vsel %vm1507, %v1496, %v1097
      %v1530 = vsel %vm1507, %v1497, %v1099
      %v1531 = vsel %vm1507, %v1498, %v1101
      %v1532 = vsel %vm1507, %v1499, %v1103
      %v1533 = vsel %vm1507, %v1500, %v1105
      %v1534 = vsel %vm1507, %v1501, %v1107
      %v1535 = vsel %vm1507, %v1502, %v1109
      %v1536 = vsel %vm1507, %v1503, %v1111
      %v1537 = vsel %vm1507, %v1504, %v1113
      %v1538 = vsel %vm1507, %v1505, %v1115
      %v1539 = vsel %vm1507, %v1506, %v1117
      %vm1540 = vcmask 228352
      %v1541 = vsel %vm1540, %v1508, %v1151
      %v1542 = vsel %vm1540, %v1509, %v1153
      %v1543 = vsel %vm1540, %v1510, %v1155
      %v1544 = vsel %vm1540, %v1511, %v1157
      %v1545 = vsel %vm1540, %v1512, %v1159
      %v1546 = vsel %vm1540, %v1513, %v1161
      %v1547 = vsel %vm1540, %v1514, %v1163
      %v1548 = vsel %vm1540, %v1515, %v1165
      %v1549 = vsel %vm1540, %v1516, %v1167
      %v1550 = vsel %vm1540, %v1517, %v1169
      %v1551 = vsel %vm1540, %v1518, %v1171
      %v1552 = vsel %vm1540, %v1519, %v1173
      %v1553 = vsel %vm1540, %v1520, %v1175
      %v1554 = vsel %vm1540, %v1521, %v1177
      %v1555 = vsel %vm1540, %v1522, %v1179
      %v1556 = vsel %vm1540, %v1523, %v1181
      %v1557 = vsel %vm1540, %v1524, %v1183
      %v1558 = vsel %vm1540, %v1525, %v1185
      %v1559 = vsel %vm1540, %v1526, %v1187
      %v1560 = vsel %vm1540, %v1527, %v1189
      %v1561 = vsel %vm1540, %v1528, %v1191
      %v1562 = vsel %vm1540, %v1529, %v1193
      %v1563 = vsel %vm1540, %v1530, %v1195
      %v1564 = vsel %vm1540, %v1531, %v1197
      %v1565 = vsel %vm1540, %v1532, %v1199
      %v1566 = vsel %vm1540, %v1533, %v1201
      %v1567 = vsel %vm1540, %v1534, %v1203
      %v1568 = vsel %vm1540, %v1535, %v1205
      %v1569 = vsel %vm1540, %v1536, %v1207
      %v1570 = vsel %vm1540, %v1537, %v1209
      %v1571 = vsel %vm1540, %v1538, %v1211
      %v1572 = vsel %vm1540, %v1539, %v1213
      %vm1573 = vcmask 261120
      %v1574 = vsel %vm1573, %v1541, %v1247
      %v1575 = vsel %vm1573, %v1542, %v1249
      %v1576 = vsel %vm1573, %v1543, %v1251
      %v1577 = vsel %vm1573, %v1544, %v1253
      %v1578 = vsel %vm1573, %v1545, %v1255
      %v1579 = vsel %vm1573, %v1546, %v1257
      %v1580 = vsel %vm1573, %v1547, %v1259
      %v1581 = vsel %vm1573, %v1548, %v1261
      %v1582 = vsel %vm1573, %v1549, %v1263
      %v1583 = vsel %vm1573, %v1550, %v1265
      %v1584 = vsel %vm1573, %v1551, %v1267
      %v1585 = vsel %vm1573, %v1552, %v1269
      %v1586 = vsel %vm1573, %v1553, %v1271
      %v1587 = vsel %vm1573, %v1554, %v1273
      %v1588 = vsel %vm1573, %v1555, %v1275
      %v1589 = vsel %vm1573, %v1556, %v1277
      %v1590 = vsel %vm1573, %v1557, %v1279
      %v1591 = vsel %vm1573, %v1558, %v1281
      %v1592 = vsel %vm1573, %v1559, %v1283
      %v1593 = vsel %vm1573, %v1560, %v1285
      %v1594 = vsel %vm1573, %v1561, %v1287
      %v1595 = vsel %vm1573, %v1562, %v1289
      %v1596 = vsel %vm1573, %v1563, %v1291
      %v1597 = vsel %vm1573, %v1564, %v1293
      %v1598 = vsel %vm1573, %v1565, %v1295
      %v1599 = vsel %vm1573, %v1566, %v1297
      %v1600 = vsel %vm1573, %v1567, %v1299
      %v1601 = vsel %vm1573, %v1568, %v1301
      %v1602 = vsel %vm1573, %v1569, %v1303
      %v1603 = vsel %vm1573, %v1570, %v1305
      %v1604 = vsel %vm1573, %v1571, %v1307
      %v1605 = vsel %vm1573, %v1572, %v1309
      %v1606 = vld [vmem:[%s1] sm:$0xff]
      %v1607 = vld [vmem:[%s1 + $0x8] sm:$0xff]
      %v1608 = vld [vmem:[%s1 + $0x10] sm:$0xff]
      %v1609 = vld [vmem:[%s1 + $0x18] sm:$0xff]
      %v1610 = vld [vmem:[%s1 + $0x20] sm:$0xf]
      %vm1611 = vcmask 293888
      %v1613 = vsel %vm1611, %v1574, 0
      %v1616 = vsel %vm1611, %v1575, 0
      %v1619 = vsel %vm1611, %v1576, 0
      %v1622 = vsel %vm1611, %v1577, 0
      %v1625 = vsel %vm1611, %v1578, 0
      %v1628 = vsel %vm1611, %v1579, 0
      %v1631 = vsel %vm1611, %v1580, 0
      %v1634 = vsel %vm1611, %v1581, 0
      %v1637 = vsel %vm1611, %v1582, 0
      %v1640 = vsel %vm1611, %v1583, 0
      %v1643 = vsel %vm1611, %v1584, 0
      %v1646 = vsel %vm1611, %v1585, 0
      %v1649 = vsel %vm1611, %v1586, 0
      %v1652 = vsel %vm1611, %v1587, 0
      %v1655 = vsel %vm1611, %v1588, 0
      %v1658 = vsel %vm1611, %v1589, 0
      %v1661 = vsel %vm1611, %v1590, 0
      %v1664 = vsel %vm1611, %v1591, 0
      %v1667 = vsel %vm1611, %v1592, 0
      %v1670 = vsel %vm1611, %v1593, 0
      %v1673 = vsel %vm1611, %v1594, 0
      %v1676 = vsel %vm1611, %v1595, 0
      %v1679 = vsel %vm1611, %v1596, 0
      %v1682 = vsel %vm1611, %v1597, 0
      %v1685 = vsel %vm1611, %v1598, 0
      %v1688 = vsel %vm1611, %v1599, 0
      %v1691 = vsel %vm1611, %v1600, 0
      %v1694 = vsel %vm1611, %v1601, 0
      %v1697 = vsel %vm1611, %v1602, 0
      %v1700 = vsel %vm1611, %v1603, 0
      %v1703 = vsel %vm1611, %v1604, 0
      %v1706 = vsel %vm1611, %v1605, 0
      %vm1708 = vcmask 1043456
      %v1710 = vsel %vm1708, %v1610, 0
      %1712 = vmatprep.subr.mxu0 0.0
      %1713 = vmatpush1.msra.mxu0 0.0
      %1714 = vmatprep.subr.mxu0 0.0
      %1715 = vmatpush1.msra.mxu0 0.0
      %1716 = vmatprep.subr.mxu0 0.0
      %1717 = vmatpush1.msra.mxu0 0.0
      %1718 = vmatprep.subr.mxu0 0.0
      %1719 = vmatpush1.msra.mxu0 0.0
      %1720 = vmatprep.subr.mxu0 0.0
      %1721 = vmatpush1.msra.mxu0 0.0
      %1722 = vmatprep.subr.mxu0 0.0
      %1723 = vmatpush1.msra.mxu0 0.0
      %1724 = vmatprep.subr.mxu0 0.0
      %1725 = vmatpush1.msra.mxu0 0.0
      %1726 = vmatprep.subr.mxu0 0.0
      %1727 = vmatpush1.msra.mxu0 0.0
      %1728 = vmatprep.subr.mxu0 0.0
      %1729 = vmatpush1.msra.mxu0 0.0
      %1730 = vmatprep.subr.mxu0 0.0
      %1731 = vmatpush1.msra.mxu0 0.0
      %1732 = vmatprep.subr.mxu0 0.0
      %1733 = vmatpush1.msra.mxu0 0.0
      %1734 = vmatprep.subr.mxu0 0.0
      %1735 = vmatpush1.msra.mxu0 %v1710
      %1736 = vmatprep.subr.mxu0 0.0
      %1737 = vmatpush1.msra.mxu0 %v1609
      %1738 = vmatprep.subr.mxu0 0.0
      %1739 = vmatpush1.msra.mxu0 %v1608
      %1740 = vmatprep.subr.mxu0 0.0
      %1741 = vmatpush1.msra.mxu0 %v1607
      %1742 = vmatprep.subr.mxu0 0.0
      %1743 = vmatpush1.msra.mxu0 %v1606
      %1744 = vmatprep.subr.mxu0 0.0
      %1745 = vmatpush2.msra.mxu0 0.0
      %1746 = vmatprep.subr.mxu0 0.0
      %1747 = vmatpush2.msra.mxu0 0.0
      %1748 = vmatprep.subr.mxu0 0.0
      %1749 = vmatpush2.msra.mxu0 0.0
      %1750 = vmatprep.subr.mxu0 0.0
      %1751 = vmatpush2.msra.mxu0 0.0
      %1752 = vmatprep.subr.mxu0 0.0
      %1753 = vmatpush2.msra.mxu0 0.0
      %1754 = vmatprep.subr.mxu0 0.0
      %1755 = vmatpush2.msra.mxu0 0.0
      %1756 = vmatprep.subr.mxu0 0.0
      %1757 = vmatpush2.msra.mxu0 0.0
      %1758 = vmatprep.subr.mxu0 0.0
      %1759 = vmatpush2.msra.mxu0 0.0
      %1760 = vmatprep.subr.mxu0 0.0
      %1761 = vmatpush2.msra.mxu0 0.0
      %1762 = vmatprep.subr.mxu0 0.0
      %1763 = vmatpush2.msra.mxu0 0.0
      %1764 = vmatprep.subr.mxu0 0.0
      %1765 = vmatpush2.msra.mxu0 0.0
      %1766 = vmatprep.subr.mxu0 0.0
      %1767 = vmatpush2.msra.mxu0 0.0
      %1768 = vmatprep.subr.mxu0 0.0
      %1769 = vmatpush2.msra.mxu0 0.0
      %1770 = vmatprep.subr.mxu0 0.0
      %1771 = vmatpush2.msra.mxu0 0.0
      %1772 = vmatprep.subr.mxu0 0.0
      %1773 = vmatpush2.msra.mxu0 0.0
      %1774 = vmatprep.subr.mxu0 0.0
      %1775 = vmatpush2.msra.mxu0 0.0
      %1776 = vmatprep.mubr.f32.mxu0 0.0
      %1777 = vmatmul.mubr.f32.gmra.mxu0 %v1613
      %v1778 = vpop.f32.mrf.mxu0
      %v1779 = vadd.f32 0.0, %v1778
      %v1780 = vpop.f32.mrf.mxu0
      %1781 = vmatprep.mubr.f32.mxu0 0.0
      %1782 = vmatmul.mubr.f32.gmra.mxu0 %v1616
      %v1783 = vpop.f32.mrf.mxu0
      %v1784 = vadd.f32 0.0, %v1783
      %v1785 = vpop.f32.mrf.mxu0
      %1786 = vmatprep.mubr.f32.mxu0 0.0
      %1787 = vmatmul.mubr.f32.gmra.mxu0 %v1619
      %v1788 = vpop.f32.mrf.mxu0
      %v1789 = vadd.f32 0.0, %v1788
      %v1790 = vpop.f32.mrf.mxu0
      %1791 = vmatprep.mubr.f32.mxu0 0.0
      %1792 = vmatmul.mubr.f32.gmra.mxu0 %v1622
      %v1793 = vpop.f32.mrf.mxu0
      %v1794 = vadd.f32 0.0, %v1793
      %v1795 = vpop.f32.mrf.mxu0
      %1796 = vmatprep.mubr.f32.mxu0 0.0
      %1797 = vmatmul.mubr.f32.gmra.mxu0 %v1625
      %v1798 = vpop.f32.mrf.mxu0
      %v1799 = vadd.f32 0.0, %v1798
      %v1800 = vpop.f32.mrf.mxu0
      %1801 = vmatprep.mubr.f32.mxu0 0.0
      %1802 = vmatmul.mubr.f32.gmra.mxu0 %v1628
      %v1803 = vpop.f32.mrf.mxu0
      %v1804 = vadd.f32 0.0, %v1803
      %v1805 = vpop.f32.mrf.mxu0
      %1806 = vmatprep.mubr.f32.mxu0 0.0
      %1807 = vmatmul.mubr.f32.gmra.mxu0 %v1631
      %v1808 = vpop.f32.mrf.mxu0
      %v1809 = vadd.f32 0.0, %v1808
      %v1810 = vpop.f32.mrf.mxu0
      %1811 = vmatprep.mubr.f32.mxu0 0.0
      %1812 = vmatmul.mubr.f32.gmra.mxu0 %v1634
      %v1813 = vpop.f32.mrf.mxu0
      %v1814 = vadd.f32 0.0, %v1813
      %v1815 = vpop.f32.mrf.mxu0
      %1816 = vmatprep.mubr.f32.mxu0 0.0
      %1817 = vmatmul.mubr.f32.gmra.mxu0 %v1637
      %v1818 = vpop.f32.mrf.mxu0
      %v1819 = vadd.f32 0.0, %v1818
      %v1820 = vpop.f32.mrf.mxu0
      %1821 = vmatprep.mubr.f32.mxu0 0.0
      %1822 = vmatmul.mubr.f32.gmra.mxu0 %v1640
      %v1823 = vpop.f32.mrf.mxu0
      %v1824 = vadd.f32 0.0, %v1823
      %v1825 = vpop.f32.mrf.mxu0
      %1826 = vmatprep.mubr.f32.mxu0 0.0
      %1827 = vmatmul.mubr.f32.gmra.mxu0 %v1643
      %v1828 = vpop.f32.mrf.mxu0
      %v1829 = vadd.f32 0.0, %v1828
      %v1830 = vpop.f32.mrf.mxu0
      %1831 = vmatprep.mubr.f32.mxu0 0.0
      %1832 = vmatmul.mubr.f32.gmra.mxu0 %v1646
      %v1833 = vpop.f32.mrf.mxu0
      %v1834 = vadd.f32 0.0, %v1833
      %v1835 = vpop.f32.mrf.mxu0
      %1836 = vmatprep.mubr.f32.mxu0 0.0
      %1837 = vmatmul.mubr.f32.gmra.mxu0 %v1649
      %v1838 = vpop.f32.mrf.mxu0
      %v1839 = vadd.f32 0.0, %v1838
      %v1840 = vpop.f32.mrf.mxu0
      %1841 = vmatprep.mubr.f32.mxu0 0.0
      %1842 = vmatmul.mubr.f32.gmra.mxu0 %v1652
      %v1843 = vpop.f32.mrf.mxu0
      %v1844 = vadd.f32 0.0, %v1843
      %v1845 = vpop.f32.mrf.mxu0
      %1846 = vmatprep.mubr.f32.mxu0 0.0
      %1847 = vmatmul.mubr.f32.gmra.mxu0 %v1655
      %v1848 = vpop.f32.mrf.mxu0
      %v1849 = vadd.f32 0.0, %v1848
      %v1850 = vpop.f32.mrf.mxu0
      %1851 = vmatprep.mubr.f32.mxu0 0.0
      %1852 = vmatmul.mubr.f32.gmra.mxu0 %v1658
      %v1853 = vpop.f32.mrf.mxu0
      %v1854 = vadd.f32 0.0, %v1853
      %v1855 = vpop.f32.mrf.mxu0
      %1856 = vmatprep.mubr.f32.mxu0 0.0
      %1857 = vmatmul.mubr.f32.gmra.mxu0 %v1661
      %v1858 = vpop.f32.mrf.mxu0
      %v1859 = vadd.f32 0.0, %v1858
      %v1860 = vpop.f32.mrf.mxu0
      %1861 = vmatprep.mubr.f32.mxu0 0.0
      %1862 = vmatmul.mubr.f32.gmra.mxu0 %v1664
      %v1863 = vpop.f32.mrf.mxu0
      %v1864 = vadd.f32 0.0, %v1863
      %v1865 = vpop.f32.mrf.mxu0
      %1866 = vmatprep.mubr.f32.mxu0 0.0
      %1867 = vmatmul.mubr.f32.gmra.mxu0 %v1667
      %v1868 = vpop.f32.mrf.mxu0
      %v1869 = vadd.f32 0.0, %v1868
      %v1870 = vpop.f32.mrf.mxu0
      %1871 = vmatprep.mubr.f32.mxu0 0.0
      %1872 = vmatmul.mubr.f32.gmra.mxu0 %v1670
      %v1873 = vpop.f32.mrf.mxu0
      %v1874 = vadd.f32 0.0, %v1873
      %v1875 = vpop.f32.mrf.mxu0
      %1876 = vmatprep.mubr.f32.mxu0 0.0
      %1877 = vmatmul.mubr.f32.gmra.mxu0 %v1673
      %v1878 = vpop.f32.mrf.mxu0
      %v1879 = vadd.f32 0.0, %v1878
      %v1880 = vpop.f32.mrf.mxu0
      %1881 = vmatprep.mubr.f32.mxu0 0.0
      %1882 = vmatmul.mubr.f32.gmra.mxu0 %v1676
      %v1883 = vpop.f32.mrf.mxu0
      %v1884 = vadd.f32 0.0, %v1883
      %v1885 = vpop.f32.mrf.mxu0
      %1886 = vmatprep.mubr.f32.mxu0 0.0
      %1887 = vmatmul.mubr.f32.gmra.mxu0 %v1679
      %v1888 = vpop.f32.mrf.mxu0
      %v1889 = vadd.f32 0.0, %v1888
      %v1890 = vpop.f32.mrf.mxu0
      %1891 = vmatprep.mubr.f32.mxu0 0.0
      %1892 = vmatmul.mubr.f32.gmra.mxu0 %v1682
      %v1893 = vpop.f32.mrf.mxu0
      %v1894 = vadd.f32 0.0, %v1893
      %v1895 = vpop.f32.mrf.mxu0
      %1896 = vmatprep.mubr.f32.mxu0 0.0
      %1897 = vmatmul.mubr.f32.gmra.mxu0 %v1685
      %v1898 = vpop.f32.mrf.mxu0
      %v1899 = vadd.f32 0.0, %v1898
      %v1900 = vpop.f32.mrf.mxu0
      %1901 = vmatprep.mubr.f32.mxu0 0.0
      %1902 = vmatmul.mubr.f32.gmra.mxu0 %v1688
      %v1903 = vpop.f32.mrf.mxu0
      %v1904 = vadd.f32 0.0, %v1903
      %v1905 = vpop.f32.mrf.mxu0
      %1906 = vmatprep.mubr.f32.mxu0 0.0
      %1907 = vmatmul.mubr.f32.gmra.mxu0 %v1691
      %v1908 = vpop.f32.mrf.mxu0
      %v1909 = vadd.f32 0.0, %v1908
      %v1910 = vpop.f32.mrf.mxu0
      %1911 = vmatprep.mubr.f32.mxu0 0.0
      %1912 = vmatmul.mubr.f32.gmra.mxu0 %v1694
      %v1913 = vpop.f32.mrf.mxu0
      %v1914 = vadd.f32 0.0, %v1913
      %v1915 = vpop.f32.mrf.mxu0
      %1916 = vmatprep.mubr.f32.mxu0 0.0
      %1917 = vmatmul.mubr.f32.gmra.mxu0 %v1697
      %v1918 = vpop.f32.mrf.mxu0
      %v1919 = vadd.f32 0.0, %v1918
      %v1920 = vpop.f32.mrf.mxu0
      %1921 = vmatprep.mubr.f32.mxu0 0.0
      %1922 = vmatmul.mubr.f32.gmra.mxu0 %v1700
      %v1923 = vpop.f32.mrf.mxu0
      %v1924 = vadd.f32 0.0, %v1923
      %v1925 = vpop.f32.mrf.mxu0
      %1926 = vmatprep.mubr.f32.mxu0 0.0
      %1927 = vmatmul.mubr.f32.gmra.mxu0 %v1703
      %v1928 = vpop.f32.mrf.mxu0
      %v1929 = vadd.f32 0.0, %v1928
      %v1930 = vpop.f32.mrf.mxu0
      %1931 = vmatprep.mubr.f32.mxu0 0.0
      %1932 = vmatmul.mubr.f32.gmra.mxu0 %v1706
      %v1933 = vpop.f32.mrf.mxu0
      %v1934 = vadd.f32 0.0, %v1933
      %v1935 = vpop.f32.mrf.mxu0
      %1936 = vdwg.mxu0
      %1937 = vst [vmem:[%s168] sm:$0xff] %v1779
      %1938 = vst [vmem:[%s168 + $0x8] sm:$0xff] %v1784
      %1939 = vst [vmem:[%s168 + $0x10] sm:$0xff] %v1789
      %1940 = vst [vmem:[%s168 + $0x18] sm:$0xff] %v1794
      %1941 = vst [vmem:[%s168 + $0x20] sm:$0xff] %v1799
      %1942 = vst [vmem:[%s168 + $0x28] sm:$0xff] %v1804
      %1943 = vst [vmem:[%s168 + $0x30] sm:$0xff] %v1809
      %1944 = vst [vmem:[%s168 + $0x38] sm:$0xff] %v1814
      %1945 = vst [vmem:[%s168 + $0x40] sm:$0xff] %v1819
      %1946 = vst [vmem:[%s168 + $0x48] sm:$0xff] %v1824
      %1947 = vst [vmem:[%s168 + $0x50] sm:$0xff] %v1829
      %1948 = vst [vmem:[%s168 + $0x58] sm:$0xff] %v1834
      %1949 = vst [vmem:[%s168 + $0x60] sm:$0xff] %v1839
      %1950 = vst [vmem:[%s168 + $0x68] sm:$0xff] %v1844
      %1951 = vst [vmem:[%s168 + $0x70] sm:$0xff] %v1849
      %1952 = vst [vmem:[%s168 + $0x78] sm:$0xff] %v1854
      %1953 = vst [vmem:[%s168 + $0x80] sm:$0xff] %v1859
      %1954 = vst [vmem:[%s168 + $0x88] sm:$0xff] %v1864
      %1955 = vst [vmem:[%s168 + $0x90] sm:$0xff] %v1869
      %1956 = vst [vmem:[%s168 + $0x98] sm:$0xff] %v1874
      %1957 = vst [vmem:[%s168 + $0xa0] sm:$0xff] %v1879
      %1958 = vst [vmem:[%s168 + $0xa8] sm:$0xff] %v1884
      %1959 = vst [vmem:[%s168 + $0xb0] sm:$0xff] %v1889
      %1960 = vst [vmem:[%s168 + $0xb8] sm:$0xff] %v1894
      %1961 = vst [vmem:[%s168 + $0xc0] sm:$0xff] %v1899
      %1962 = vst [vmem:[%s168 + $0xc8] sm:$0xff] %v1904
      %1963 = vst [vmem:[%s168 + $0xd0] sm:$0xff] %v1909
      %1964 = vst [vmem:[%s168 + $0xd8] sm:$0xff] %v1914
      %1965 = vst [vmem:[%s168 + $0xe0] sm:$0xff] %v1919
      %1966 = vst [vmem:[%s168 + $0xe8] sm:$0xff] %v1924
      %1967 = vst [vmem:[%s168 + $0xf0] sm:$0xff] %v1929
      %1968 = vst [vmem:[%s168 + $0xf8] sm:$0xff] %v1934
      %p1969 = scmp.eq.s32.totalorder %s15, 0
      // Predicated region
      $region29: #{unet_block_forward.3} parent=27 // pred_check
        %p1970 = pneg %p1969
      $region30: #{unet_block_forward.3} parent=27 // pred_check_branch
        %1972 = sbr.rel (%p1970) target = $region32
      $region31: #{unet_block_forward.3} parent=27 // pred_region
        %1973 = vst [vmem:[%s3] sm:$0x3] 0.0
      $region32: #{unet_block_forward.3} parent=27 // pred_fallthru
        _
      %v1974 = vld [vmem:[%s3] sm:$0x3]
      %v1975 = vadd.f32 %v1779, %v1784
      %v1976 = vadd.f32 %v1975, %v1789
      %v1977 = vadd.f32 %v1976, %v1794
      %v1978 = vadd.f32 %v1977, %v1799
      %v1979 = vadd.f32 %v1978, %v1804
      %v1980 = vadd.f32 %v1979, %v1809
      %v1981 = vadd.f32 %v1980, %v1814
      %v1982 = vadd.f32 %v1981, %v1819
      %v1983 = vadd.f32 %v1982, %v1824
      %v1984 = vadd.f32 %v1983, %v1829
      %v1985 = vadd.f32 %v1984, %v1834
      %v1986 = vadd.f32 %v1985, %v1839
      %v1987 = vadd.f32 %v1986, %v1844
      %v1988 = vadd.f32 %v1987, %v1849
      %v1989 = vadd.f32 %v1988, %v1854
      %v1990 = vadd.f32 %v1989, %v1859
      %v1991 = vadd.f32 %v1990, %v1864
      %v1992 = vadd.f32 %v1991, %v1869
      %v1993 = vadd.f32 %v1992, %v1874
      %v1994 = vadd.f32 %v1993, %v1879
      %v1995 = vadd.f32 %v1994, %v1884
      %v1996 = vadd.f32 %v1995, %v1889
      %v1997 = vadd.f32 %v1996, %v1894
      %v1998 = vadd.f32 %v1997, %v1899
      %v1999 = vadd.f32 %v1998, %v1904
      %v2000 = vadd.f32 %v1999, %v1909
      %v2001 = vadd.f32 %v2000, %v1914
      %v2002 = vadd.f32 %v2001, %v1919
      %v2003 = vadd.f32 %v2002, %v1924
      %v2004 = vadd.f32 %v2003, %v1929
      %v2005 = vadd.f32 %v2004, %v1934
      %v2006 = vrot.slane %v2005, 4
      %v2007 = vadd.f32 %v2005, %v2006
      %v2008 = vrot.slane %v2007, 2
      %v2009 = vadd.f32 %v2007, %v2008
      %v2010 = vrot.slane %v2009, 1
      %v2011 = vadd.f32 %v2009, %v2010
      %v2012 = vmul.f32 %v1779, %v1779
      %v2013 = vmul.f32 %v1784, %v1784
      %v2014 = vmul.f32 %v1789, %v1789
      %v2015 = vmul.f32 %v1794, %v1794
      %v2016 = vmul.f32 %v1799, %v1799
      %v2017 = vmul.f32 %v1804, %v1804
      %v2018 = vmul.f32 %v1809, %v1809
      %v2019 = vmul.f32 %v1814, %v1814
      %v2020 = vmul.f32 %v1819, %v1819
      %v2021 = vmul.f32 %v1824, %v1824
      %v2022 = vmul.f32 %v1829, %v1829
      %v2023 = vmul.f32 %v1834, %v1834
      %v2024 = vmul.f32 %v1839, %v1839
      %v2025 = vmul.f32 %v1844, %v1844
      %v2026 = vmul.f32 %v1849, %v1849
      %v2027 = vmul.f32 %v1854, %v1854
      %v2028 = vmul.f32 %v1859, %v1859
      %v2029 = vmul.f32 %v1864, %v1864
      %v2030 = vmul.f32 %v1869, %v1869
      %v2031 = vmul.f32 %v1874, %v1874
      %v2032 = vmul.f32 %v1879, %v1879
      %v2033 = vmul.f32 %v1884, %v1884
      %v2034 = vmul.f32 %v1889, %v1889
      %v2035 = vmul.f32 %v1894, %v1894
      %v2036 = vmul.f32 %v1899, %v1899
      %v2037 = vmul.f32 %v1904, %v1904
      %v2038 = vmul.f32 %v1909, %v1909
      %v2039 = vmul.f32 %v1914, %v1914
      %v2040 = vmul.f32 %v1919, %v1919
      %v2041 = vmul.f32 %v1924, %v1924
      %v2042 = vmul.f32 %v1929, %v1929
      %v2043 = vmul.f32 %v1934, %v1934
      %v2044 = vadd.f32 %v2012, %v2013
      %v2045 = vadd.f32 %v2044, %v2014
      %v2046 = vadd.f32 %v2045, %v2015
      %v2047 = vadd.f32 %v2046, %v2016
      %v2048 = vadd.f32 %v2047, %v2017
      %v2049 = vadd.f32 %v2048, %v2018
      %v2050 = vadd.f32 %v2049, %v2019
      %v2051 = vadd.f32 %v2050, %v2020
      %v2052 = vadd.f32 %v2051, %v2021
      %v2053 = vadd.f32 %v2052, %v2022
      %v2054 = vadd.f32 %v2053, %v2023
      %v2055 = vadd.f32 %v2054, %v2024
      %v2056 = vadd.f32 %v2055, %v2025
      %v2057 = vadd.f32 %v2056, %v2026
      %v2058 = vadd.f32 %v2057, %v2027
      %v2059 = vadd.f32 %v2058, %v2028
      %v2060 = vadd.f32 %v2059, %v2029
      %v2061 = vadd.f32 %v2060, %v2030
      %v2062 = vadd.f32 %v2061, %v2031
      %v2063 = vadd.f32 %v2062, %v2032
      %v2064 = vadd.f32 %v2063, %v2033
      %v2065 = vadd.f32 %v2064, %v2034
      %v2066 = vadd.f32 %v2065, %v2035
      %v2067 = vadd.f32 %v2066, %v2036
      %v2068 = vadd.f32 %v2067, %v2037
      %v2069 = vadd.f32 %v2068, %v2038
      %v2070 = vadd.f32 %v2069, %v2039
      %v2071 = vadd.f32 %v2070, %v2040
      %v2072 = vadd.f32 %v2071, %v2041
      %v2073 = vadd.f32 %v2072, %v2042
      %v2074 = vadd.f32 %v2073, %v2043
      %v2075 = vrot.slane %v2074, 4
      %v2076 = vadd.f32 %v2074, %v2075
      %v2077 = vrot.slane %v2076, 2
      %v2078 = vadd.f32 %v2076, %v2077
      %v2079 = vrot.slane %v2078, 1
      %v2080 = vadd.f32 %v2078, %v2079
      %v2081 = vsel %vm234, %v2011, %v2080
      %v2082 = vadd.f32 %v1974, %v2081
      %2083 = vst [vmem:[%s3] sm:$0x3] %v2082
      %p2084 = scmp.lt.s32.totalorder %s15, 1
      %s2085 = scalar_select %p2084, %s15, 1
      %s2086 = smul.addr %s2085, 32
      %s2087 = smul.addr %s2086, 8
      %s2088 = scalar_lea.vmem %s2, %s2087
      // Predicated region
      $region33: #{unet_block_forward.3} parent=27 // pred_check
        %p2089 = pneg %p80
      $region34: #{unet_block_forward.3} parent=27 // pred_check_branch
        %2091 = sbr.rel (%p2089) target = $region36
      $region35: #{unet_block_forward.3} parent=27 // pred_region
        _
      $region36: #{unet_block_forward.3} parent=27 // pred_fallthru
        _
      // Predicated region
      $region37: #{unet_block_forward.3} parent=27 // pred_check
        %p2092 = pneg %p101
      $region38: #{unet_block_forward.3} parent=27 // pred_check_branch
        %2094 = sbr.rel (%p2092) target = $region40
      $region39: #{unet_block_forward.3} parent=27 // pred_region
        _
      $region40: #{unet_block_forward.3} parent=27 // pred_fallthru
        _
      // Predicated region
      $region41: #{unet_block_forward.3} parent=27 // pred_check
        %p2095 = pneg %p101
      $region42: #{unet_block_forward.3} parent=27 // pred_check_branch
        %2097 = sbr.rel (%p2095) target = $region44
      $region43: #{unet_block_forward.3} parent=27 // pred_region
        _
      $region44: #{unet_block_forward.3} parent=27 // pred_fallthru
        _
    $region28: #{unet_block_forward.3} parent=5 // pred_fallthru
      _
    %p2098 = scmp.le.s32.totalorder 2, %s10
    // Predicated region
    $region45: #{unet_block_forward.3} parent=5 // pred_check
      %p2099 = pneg %p2098
    $region46: #{unet_block_forward.3} parent=5 // pred_check_branch
      %2101 = sbr.rel (%p2099) target = $region48
    $region47: #{unet_block_forward.3} parent=5 // pred_region
      %s2102 = ssub.s32 %s10, 2
      // Predicated region
      $region49: #{unet_block_forward.3} parent=47 // pred_check
        %p2103 = pneg %p86
      $region50: #{unet_block_forward.3} parent=47 // pred_check_branch
        %2105 = sbr.rel (%p2103) target = $region52
      $region51: #{unet_block_forward.3} parent=47 // pred_region
        %p2106 = scmp.lt.s32.totalorder %s16, 1
        %s2107 = scalar_select %p2106, %s16, 1
        %s2108 = smul.addr %s2107, 32
        %s2109 = smul.addr %s2108, 8
        %s2110 = scalar_lea.vmem %s2, %s2109
      $region52: #{unet_block_forward.3} parent=47 // pred_fallthru
        _
    $region48: #{unet_block_forward.3} parent=5 // pred_fallthru
      _
  $region6: #{unet_block_forward.3} parent=0 // loop_footer
    %s14 = sadd.s32 1, %s10
  $region7: #{unet_block_forward.3} parent=0 // loop_footer_branch
    %9 = sbr.rel target = $region3
  $region8: #{unet_block_forward.3} parent=0 // loop_exit
    _

</llo_original>
